<compile_context>
chip_gen: v5e
topology: v5e:2x2
jax: 0.10.0
libtpu: 0.0.40
codegen_flags: <defaults>
</compile_context>

<pallas_src>
import numpy as np
import jax
import jax.numpy as jnp
from jax import lax
from jax.experimental import pallas as pl
from jax.experimental.pallas import tpu as pltpu

EPS_NORM = 1e-12
EPS_BN = 1e-5
SUB = 8                    # sublane granule
SUB_CHUNK_BYTES = 1 << 20  # cap on sub-chunk f32 rank-3 intermediate (per buffer)


def _round_up(v, m):
    return ((v + m - 1) // m) * m


def _rep_spec(shape):
    """Full-array VMEM block, replicated across the 1-D grid."""
    zeros = (0,) * len(shape)
    return pl.BlockSpec(shape, lambda i, _z=zeros: _z)


def _l2norm(v):
    return v * lax.rsqrt(jnp.sum(v * v, axis=-1, keepdims=True) + EPS_NORM)


# ----------------------------------------------------------------------------
# Shared in-kernel compute (pure functions of loaded arrays)
# ----------------------------------------------------------------------------
def _gat_layer(x, adj, ea2d, wl, wr, we, vec, bn):
    """Dense GATv2 (heads=1, edge_dim=H) + BN(eval) + tanh on resident arrays.
    vec rows: [bl, br, attv, bias]; bn rows: [gamma, beta, mean, var]."""
    n, h = x.shape
    bl, br, attv, bias = vec[0:1], vec[1:2], vec[2:3], vec[3:4]
    xl = jnp.dot(x, wl, preferred_element_type=jnp.float32) + bl       # (N, H)
    xr = jnp.dot(x, wr, preferred_element_type=jnp.float32) + br       # (N, H)
    ea2 = jnp.dot(ea2d, we, preferred_element_type=jnp.float32)        # (N*N, H)
    e = xr[:, None, :] + xl[None, :, :] + ea2.reshape(n, n, h)
    e = jnp.maximum(e, 0.2 * e)                                        # leaky_relu(0.2)
    # NOTE: attv contraction stays on the VPU: at true width H=32 the
    # elementwise+reduce cost already dropped 4x vs the padded version and the
    # MXU variant needs a lane-axis reshape (relayout) that is not worth it.
    logits = jnp.sum(e * attv[None, :, :], axis=-1)                    # (N, N)
    logits = jnp.where(adj > 0, logits, jnp.float32(-1e30))
    m = jnp.max(logits, axis=1, keepdims=True)
    p = jnp.exp(logits - m) * adj
    alpha = p / jnp.maximum(jnp.sum(p, axis=1, keepdims=True), 1e-20)
    out = jnp.dot(alpha, xl, preferred_element_type=jnp.float32) + bias
    gamma, beta, mean, var = bn[0:1], bn[1:2], bn[2:3], bn[3:4]
    out = (out - mean) * lax.rsqrt(var + EPS_BN)
    return jnp.tanh(out * gamma + beta)


def _sym_ce(l):
    """Symmetric cross-entropy with diagonal targets (mean over rows + cols)/2."""
    n = l.shape[0]
    row = lax.broadcasted_iota(jnp.int32, l.shape, 0)
    col = lax.broadcasted_iota(jnp.int32, l.shape, 1)
    eye = (row == col).astype(l.dtype)
    diag_r = jnp.sum(l * eye, axis=1, keepdims=True)
    mr = jnp.max(l, axis=1, keepdims=True)
    lse_r = mr + jnp.log(jnp.sum(jnp.exp(l - mr), axis=1, keepdims=True))
    ce_r = jnp.sum(lse_r - diag_r) / n
    diag_c = jnp.sum(l * eye, axis=0, keepdims=True)
    mc = jnp.max(l, axis=0, keepdims=True)
    lse_c = mc + jnp.log(jnp.sum(jnp.exp(l - mc), axis=0, keepdims=True))
    ce_c = jnp.sum(lse_c - diag_c) / n
    return (ce_r + ce_c) * 0.5


def _tail_compute(imgq, txt, hnodes, mask,
                  gw1, gb1, gw2, gb2, lw, lb,
                  a1w, a1b, a2w, a2b,
                  iw, ib, ibn, tw, tb, tbn,
                  s_it, s_gi, s_gt):
    """Everything downstream of the GAT layers, on resident arrays."""
    B, Q, H = imgq.shape

    # query-token attention pooling of the (L2-normalized) image features
    imgq = _l2norm(imgq)
    x2 = imgq.reshape(B * Q, H)
    p = jnp.maximum(
        jnp.dot(x2, a1w, preferred_element_type=jnp.float32) + a1b, 0.0)
    att = (jnp.dot(p, a2w, preferred_element_type=jnp.float32)
           + a2b).reshape(B, Q, H)
    m = jnp.max(att, axis=1, keepdims=True)                 # softmax over Q
    ex = jnp.exp(att - m)
    att = ex / jnp.sum(ex, axis=1, keepdims=True)
    img_pooled = jnp.sum(att * imgq, axis=1)                # (B, H)

    def bn_tanh_norm(y, bn4):
        g, b, mu, var = bn4[0:1], bn4[1:2], bn4[2:3], bn4[3:4]
        y = (y - mu) * lax.rsqrt(var + EPS_BN)
        return _l2norm(jnp.tanh(y * g + b))

    # image embedder: Linear -> BN(eval) -> tanh -> L2
    yi = jnp.dot(img_pooled, iw, preferred_element_type=jnp.float32) + ib
    img_f = bn_tanh_norm(yi, ibn)

    # text embedder (text stand-in is L2-normalized first, as in BLIP2)
    txtn = _l2norm(txt)
    yt = jnp.dot(txtn, tw, preferred_element_type=jnp.float32) + tb
    txt_f = bn_tanh_norm(yt, tbn)

    # per-graph attentional aggregation + final Linear + L2
    g = jnp.tanh(jnp.dot(hnodes, gw1, preferred_element_type=jnp.float32) + gb1)
    gate = jnp.dot(g, gw2, preferred_element_type=jnp.float32) + gb2
    gate3 = jnp.where(mask[:, :, None] > 0, gate[None, :, :], jnp.float32(-1e30))
    mg = jnp.max(gate3, axis=1, keepdims=True)
    pg = jnp.exp(gate3 - mg) * mask[:, :, None]
    wg = pg / jnp.maximum(jnp.sum(pg, axis=1, keepdims=True), 1e-20)
    pooled = jnp.sum(wg * hnodes[None, :, :], axis=1)       # (G, H)
    yg = jnp.dot(pooled, lw, preferred_element_type=jnp.float32) + lb
    graph_f = _l2norm(yg)

    # scaled logits + symmetric contrastive loss
    def xmatT(a, b):
        return lax.dot_general(a, b, (((1,), (1,)), ((), ())),
                               preferred_element_type=jnp.float32)

    l_it = xmatT(img_f, txt_f) * s_it
    l_gi = xmatT(graph_f, img_f) * s_gi
    l_gt = xmatT(graph_f, txt_f) * s_gt
    loss = (_sym_ce(l_it) + _sym_ce(l_gi) + _sym_ce(l_gt)) / 3.0
    return img_f, txt_f, graph_f, loss


# ----------------------------------------------------------------------------
# Kernel A: fully fused forward (small graphs) -- one launch, grid=(1,)
# ----------------------------------------------------------------------------
def fused_forward_kernel(x_ref, adj_ref, ea_ref,
                         wl1_ref, wr1_ref, we1_ref, v1_ref, bn1_ref,
                         wl2_ref, wr2_ref, we2_ref, v2_ref, bn2_ref,
                         imgq_ref, txt_ref, mask_ref,
                         gw1_ref, gb1_ref, gw2_ref, gb2_ref, lw_ref, lb_ref,
                         a1w_ref, a1b_ref, a2w_ref, a2b_ref,
                         iw_ref, ib_ref, ibn_ref,
                         tw_ref, tb_ref, tbn_ref,
                         scales_ref,
                         img_o_ref, txt_o_ref, graph_o_ref, loss_o_ref):
    x = x_ref[...]
    adj = adj_ref[...]
    ea = ea_ref[...]                                         # (N*N, H) bf16
    h1 = _gat_layer(x, adj, ea, wl1_ref[...], wr1_ref[...], we1_ref[...],
                    v1_ref[...], bn1_ref[...])
    h2 = _gat_layer(h1, adj, ea, wl2_ref[...], wr2_ref[...], we2_ref[...],
                    v2_ref[...], bn2_ref[...])
    img_f, txt_f, graph_f, loss = _tail_compute(
        imgq_ref[...], txt_ref[...], h2, mask_ref[...],
        gw1_ref[...], gb1_ref[...], gw2_ref[...], gb2_ref[...],
        lw_ref[...], lb_ref[...],
        a1w_ref[...], a1b_ref[...], a2w_ref[...], a2b_ref[...],
        iw_ref[...], ib_ref[...], ibn_ref[...],
        tw_ref[...], tb_ref[...], tbn_ref[...],
        scales_ref[0], scales_ref[1], scales_ref[2])
    img_o_ref[...] = img_f
    txt_o_ref[...] = txt_f
    graph_o_ref[...] = graph_f
    loss_o_ref[0, 0] = loss


def _fused_vmem_limit(n, h):
    f4, b2 = 4, 2
    resident = n * n * h * b2 + n * n * f4 + 8 * n * h * f4
    live = 3 * n * n * h * f4
    total = resident + live + (1 << 20)
    return int(min(max(2 * total, 16 << 20), 32 << 20))


def fused_forward(x, adj, ea2d, mask, imgq, txt, scales, kp):
    n, h = x.shape
    B = imgq.shape[0]
    G = mask.shape[0]
    arrays = [x, adj, ea2d,
              kp["conv1"]["wl"], kp["conv1"]["wr"], kp["conv1"]["we"],
              kp["conv1"]["vec"], kp["conv1"]["bn"],
              kp["conv2"]["wl"], kp["conv2"]["wr"], kp["conv2"]["we"],
              kp["conv2"]["vec"], kp["conv2"]["bn"],
              imgq, txt, mask,
              kp["agg_w1"], kp["agg_b1"], kp["agg_w2"], kp["agg_b2"],
              kp["lin_w"], kp["lin_b"],
              kp["att1_w"], kp["att1_b"], kp["att2_w"], kp["att2_b"],
              kp["img_w"], kp["img_b"], kp["bn_img"],
              kp["txt_w"], kp["txt_b"], kp["bn_txt"]]
    outs = pl.pallas_call(
        fused_forward_kernel,
        grid=(1,),
        in_specs=[_rep_spec(a.shape) for a in arrays]
                 + [pl.BlockSpec(memory_space=pltpu.MemorySpace.SMEM)],
        out_specs=(_rep_spec((B, h)), _rep_spec((B, h)), _rep_spec((G, h)),
                   pl.BlockSpec(memory_space=pltpu.MemorySpace.SMEM)),
        out_shape=(jax.ShapeDtypeStruct((B, h), jnp.float32),
                   jax.ShapeDtypeStruct((B, h), jnp.float32),
                   jax.ShapeDtypeStruct((G, h), jnp.float32),
                   jax.ShapeDtypeStruct((1, 1), jnp.float32)),
        compiler_params=pltpu.CompilerParams(
            vmem_limit_bytes=_fused_vmem_limit(n, h)),
    )(*arrays, scales)
    img_f, txt_f, graph_f, loss = outs
    return img_f, txt_f, graph_f, loss[0, 0]


# ----------------------------------------------------------------------------
# Kernel B: tiled GATv2 + BN(eval) + tanh (large-N path), dst-row tiles.
# lin_l / lin_r node transforms (xl, xr) are hoisted out and passed in.
# ----------------------------------------------------------------------------
def _sub_rows(tm, n, h):
    """dst-row sub-chunk bounding the live f32 rank-3 intermediate."""
    sub = tm
    while sub > SUB and sub * n * h * 4 > SUB_CHUNK_BYTES:
        sub = max(SUB, (sub // 2) // SUB * SUB)
    return sub


def gat_tiled_kernel(xl_ref, xr_ref, adj_ref, ea_ref, we_ref,
                     attv_ref, bias_ref, bn_ref, o_ref):
    tm, n = adj_ref.shape
    h = xl_ref.shape[1]
    xl = xl_ref[...]                                         # (N, H) f32
    attv = attv_ref[...]                                     # (1, H)
    we = we_ref[...]                                         # (H, H) bf16
    bias = bias_ref[...]
    bn = bn_ref[...]
    gamma, beta, mean, var = bn[0:1], bn[1:2], bn[2:3], bn[3:4]

    sub = _sub_rows(tm, n, h)
    r0 = 0
    while r0 < tm:                                           # static unroll
        rs = min(sub, tm - r0)
        ea_c = ea_ref[r0 * n:(r0 + rs) * n, :]               # (rs*N, H) bf16
        ea2 = jnp.dot(ea_c, we,
                      preferred_element_type=jnp.float32).reshape(rs, n, h)
        xr = xr_ref[r0:r0 + rs, :]
        e = xr[:, None, :] + xl[None, :, :] + ea2
        e = jnp.maximum(e, 0.2 * e)                          # leaky_relu(0.2)
        logits = jnp.sum(e * attv[None, :, :], axis=-1)      # (rs, N)
        adj = adj_ref[r0:r0 + rs, :]
        logits = jnp.where(adj > 0, logits, jnp.float32(-1e30))
        m = jnp.max(logits, axis=1, keepdims=True)
        p = jnp.exp(logits - m) * adj
        alpha = p / jnp.maximum(jnp.sum(p, axis=1, keepdims=True), 1e-20)
        out = jnp.dot(alpha, xl, preferred_element_type=jnp.float32) + bias
        out = (out - mean) * lax.rsqrt(var + EPS_BN)
        o_ref[r0:r0 + rs, :] = jnp.tanh(out * gamma + beta)
        r0 += rs


def _choose_tm(np_, h, ea_budget_bytes=4 << 20):
    """dst-row tile size: double-buffered bf16 (TM*N, H) ea block under the
    budget, a multiple of 8 sublanes, and >= 4 grid steps when possible
    (>= 2 per TensorCore on v7x) so the per-core DMA pipeline stays full."""
    tm = ea_budget_bytes // max(1, 4 * np_ * h)
    tm = max(SUB, (tm // SUB) * SUB)
    tm = min(tm, np_)
    if np_ >= 4 * SUB:
        tm = min(tm, max(SUB, ((np_ // 4) // SUB) * SUB))
    elif np_ >= 2 * SUB:
        tm = min(tm, max(SUB, ((np_ // 2) // SUB) * SUB))
    return int(tm)


def _gat_vmem_limit(tm, np_, h):
    b2, f4 = 2, 4
    sub = _sub_rows(tm, np_, h)
    ea = 2 * tm * np_ * h * b2            # double-buffered bf16 ea block
    adj = 2 * tm * np_ * f4
    xl = 2 * np_ * h * f4
    xr = 2 * tm * h * f4
    live = 3 * sub * np_ * h * f4 + 3 * sub * np_ * f4
    misc = h * h * f4 + 8 * h * f4
    out = 2 * tm * h * f4
    total = ea + adj + xl + xr + live + misc + out
    # cap at 32 MiB: safe on v7x (64 MiB physical) as well as v5e/v6e
    return int(min(max(2 * total, 16 << 20), 32 << 20))


def gat_tiled(xl, xr, adj, ea2d, we_bf16, attv, bias, bn4, tm):
    np_, h = xl.shape
    grid = np_ // tm
    return pl.pallas_call(
        gat_tiled_kernel,
        grid=(grid,),
        in_specs=[
            pl.BlockSpec((np_, h), lambda i: (0, 0)),         # xl (all sources)
            pl.BlockSpec((tm, h), lambda i: (i, 0)),          # xr (dst tile)
            pl.BlockSpec((tm, np_), lambda i: (i, 0)),        # adjacency rows
            pl.BlockSpec((tm * np_, h), lambda i: (i, 0)),    # edge attrs (bf16)
            pl.BlockSpec((h, h), lambda i: (0, 0)),           # we
            pl.BlockSpec((1, h), lambda i: (0, 0)),           # attv
            pl.BlockSpec((1, h), lambda i: (0, 0)),           # bias
            pl.BlockSpec((4, h), lambda i: (0, 0)),           # bn stats
        ],
        out_specs=pl.BlockSpec((tm, h), lambda i: (i, 0)),
        out_shape=jax.ShapeDtypeStruct((np_, h), jnp.float32),
        compiler_params=pltpu.CompilerParams(
            dimension_semantics=("parallel",),
            vmem_limit_bytes=_gat_vmem_limit(tm, np_, h)),
    )(xl, xr, adj, ea2d, we_bf16, attv, bias, bn4)


# ----------------------------------------------------------------------------
# Kernel C: fused tail (used after the tiled GAT path)
# ----------------------------------------------------------------------------
def tail_kernel(imgq_ref, txt_ref, h_ref, mask_ref,
                gw1_ref, gb1_ref, gw2_ref, gb2_ref, lw_ref, lb_ref,
                a1w_ref, a1b_ref, a2w_ref, a2b_ref,
                iw_ref, ib_ref, ibn_ref, tw_ref, tb_ref, tbn_ref,
                scales_ref,
                img_o_ref, txt_o_ref, graph_o_ref, loss_o_ref):
    img_f, txt_f, graph_f, loss = _tail_compute(
        imgq_ref[...], txt_ref[...], h_ref[...], mask_ref[...],
        gw1_ref[...], gb1_ref[...], gw2_ref[...], gb2_ref[...],
        lw_ref[...], lb_ref[...],
        a1w_ref[...], a1b_ref[...], a2w_ref[...], a2b_ref[...],
        iw_ref[...], ib_ref[...], ibn_ref[...],
        tw_ref[...], tb_ref[...], tbn_ref[...],
        scales_ref[0], scales_ref[1], scales_ref[2])
    img_o_ref[...] = img_f
    txt_o_ref[...] = txt_f
    graph_o_ref[...] = graph_f
    loss_o_ref[0, 0] = loss


def run_tail(imgq, txt, h, mask, scales, kp):
    B = imgq.shape[0]
    G = mask.shape[0]
    hh = h.shape[1]
    arrays = [imgq, txt, h, mask,
              kp["agg_w1"], kp["agg_b1"], kp["agg_w2"], kp["agg_b2"],
              kp["lin_w"], kp["lin_b"],
              kp["att1_w"], kp["att1_b"], kp["att2_w"], kp["att2_b"],
              kp["img_w"], kp["img_b"], kp["bn_img"],
              kp["txt_w"], kp["txt_b"], kp["bn_txt"]]
    outs = pl.pallas_call(
        tail_kernel,
        grid=(1,),
        in_specs=[_rep_spec(a.shape) for a in arrays]
                 + [pl.BlockSpec(memory_space=pltpu.MemorySpace.SMEM)],
        out_specs=(_rep_spec((B, hh)), _rep_spec((B, hh)), _rep_spec((G, hh)),
                   pl.BlockSpec(memory_space=pltpu.MemorySpace.SMEM)),
        out_shape=(jax.ShapeDtypeStruct((B, hh), jnp.float32),
                   jax.ShapeDtypeStruct((B, hh), jnp.float32),
                   jax.ShapeDtypeStruct((G, hh), jnp.float32),
                   jax.ShapeDtypeStruct((1, 1), jnp.float32)),
    )(*arrays, scales)
    img_f, txt_f, graph_f, loss = outs
    return img_f, txt_f, graph_f, loss[0, 0]


# ----------------------------------------------------------------------------
# Glue: kernel-ready params, dense graph construction, path dispatch
# ----------------------------------------------------------------------------
def prep_kernel_params(params):
    def vstack(*rows):
        return jnp.concatenate(rows, axis=0)

    def conv_pack(c):
        return dict(wl=c["wl"], wr=c["wr"],
                    we=c["we"].astype(jnp.bfloat16),          # bf16 MXU operand
                    vec=vstack(c["bl"], c["br"], c["attv"], c["bias"]))

    def bn_pack(b):
        return vstack(b["gamma"], b["beta"], b["mean"], b["var"])

    kp = {}
    c1 = conv_pack(params["conv1"]); c1["bn"] = bn_pack(params["bn1"])
    c2 = conv_pack(params["conv2"]); c2["bn"] = bn_pack(params["bn2"])
    kp["conv1"], kp["conv2"] = c1, c2
    kp["agg_w1"], kp["agg_b1"] = params["agg"]["w1"], params["agg"]["b1"]
    kp["agg_w2"], kp["agg_b2"] = params["agg"]["w2"], params["agg"]["b2"]
    kp["lin_w"], kp["lin_b"] = params["lin"]["w"], params["lin"]["b"]
    kp["att1_w"], kp["att1_b"] = params["att1_w"], params["att1_b"]
    kp["att2_w"], kp["att2_b"] = params["att2_w"], params["att2_b"]
    kp["img_w"], kp["img_b"] = params["img_emb"]["w"], params["img_emb"]["b"]
    kp["bn_img"] = bn_pack(params["bn_img"])
    kp["txt_w"], kp["txt_b"] = params["txt_emb"]["w"], params["txt_emb"]["b"]
    kp["bn_txt"] = bn_pack(params["bn_txt"])
    return kp


def build_dense_graph(edge_index, edge_attr, num_nodes, n_pad):
    """Dense adjacency / bf16 edge attrs with PyG-style mean-filled self loops,
    built directly at the true width H and the final dtype (no f32 scatter).
    TODO(synk): duplicate (src, dst) edges collapse to one in the dense form."""
    h = edge_attr.shape[1]
    src, dst = edge_index[0], edge_index[1]
    not_self = (src != dst).astype(jnp.float32)[:, None]
    adj = jnp.zeros((n_pad, n_pad), jnp.float32).at[dst, src].max(1.0)
    ea = jnp.zeros((n_pad, n_pad, h), jnp.bfloat16).at[dst, src].set(
        edge_attr.astype(jnp.bfloat16))
    in_sum = jnp.zeros((n_pad, h), jnp.float32).at[dst].add(edge_attr * not_self)
    in_cnt = jnp.zeros((n_pad, 1), jnp.float32).at[dst].add(not_self)
    loop_attr = (in_sum / jnp.maximum(in_cnt, 1.0)).astype(jnp.bfloat16)
    di = jnp.arange(num_nodes)
    adj = adj.at[di, di].set(1.0)
    ea = ea.at[di, di].set(loop_attr[:num_nodes])
    return adj, ea


def _use_fused(n_pad, h):
    # fused single-launch path when the resident ea (bf16) + rank-3 f32
    # intermediates comfortably fit in scoped VMEM on every generation
    return (n_pad * n_pad * h * (2 + 2 * 4)) <= (6 << 20)


# ----------------------------------------------------------------------------
# Full forward (mirrors TIGR_Blip2_att.forward, post-BLIP2)
# ----------------------------------------------------------------------------
def tigr_forward(params, x, edge_index, edge_attr, batch, image_feats, text_feats,
                 num_graphs, force_path=None):
    N, H = x.shape
    kp = prep_kernel_params(params)

    # torch.clamp(logit_scale.exp(), min=1.0, max=100.0) -- matches the module
    scales = jnp.clip(
        jnp.exp(jnp.stack([params["ls_it"], params["ls_gi"], params["ls_gt"]])),
        1.0, 100.0).astype(jnp.float32)

    NP8 = _round_up(max(N, SUB), SUB)
    if force_path is None:
        use_fused = _use_fused(NP8, H)
    else:
        use_fused = (force_path == "fused")

    if use_fused:
        NP, TM = NP8, NP8
    else:
        TM = _choose_tm(NP8, H)
        NP = _round_up(N, TM)

    x_p = jnp.pad(x, ((0, NP - N), (0, 0)))
    adj, ea = build_dense_graph(edge_index, edge_attr, N, NP)
    ea2d = ea.reshape(NP * NP, H)

    if NP > N:
        batch_p = jnp.concatenate([batch, jnp.full((NP - N,), -1, batch.dtype)])
    else:
        batch_p = batch
    mask = (batch_p[None, :] ==
            jnp.arange(num_graphs, dtype=batch.dtype)[:, None]).astype(jnp.float32)

    if use_fused:
        # one launch: conv1/conv2 + pooling + embedders + logits + loss
        return fused_forward(x_p, adj, ea2d, mask, image_feats, text_feats,
                             scales, kp)

    # large-N path: hoisted node transforms + tiled GAT layers + fused tail
    hi = jax.lax.Precision.HIGHEST

    def hoist(xin, c):
        xl = jnp.dot(xin, c["wl"], precision=hi) + c["bl"]
        xr = jnp.dot(xin, c["wr"], precision=hi) + c["br"]
        return xl, xr

    c1, c2 = params["conv1"], params["conv2"]
    xl1, xr1 = hoist(x_p, c1)
    h1 = gat_tiled(xl1, xr1, adj, ea2d, kp["conv1"]["we"],
                   c1["attv"], c1["bias"], kp["conv1"]["bn"], TM)
    xl2, xr2 = hoist(h1, c2)
    h2 = gat_tiled(xl2, xr2, adj, ea2d, kp["conv2"]["we"],
                   c2["attv"], c2["bias"], kp["conv2"]["bn"], TM)
    return run_tail(image_feats, text_feats, h2, mask, scales, kp)


# ----------------------------------------------------------------------------
# Deterministic parameter construction (synthetic; not a checkpoint load)
# ----------------------------------------------------------------------------
def init_params(key, H):
    ks = iter(jax.random.split(key, 48))
    s = 1.0 / float(np.sqrt(H))

    def lin(with_bias=True):
        w = jax.random.uniform(next(ks), (H, H), jnp.float32, -s, s)   # (in, out)
        b = (jax.random.uniform(next(ks), (1, H), jnp.float32, -s, s)
             if with_bias else None)
        return w, b

    def bn():
        return dict(gamma=jnp.ones((1, H), jnp.float32),
                    beta=jnp.zeros((1, H), jnp.float32),
                    mean=jnp.zeros((1, H), jnp.float32),
                    var=jnp.ones((1, H), jnp.float32))

    def gat():
        wl, bl = lin()
        wr, br = lin()
        we, _ = lin(with_bias=False)
        attv = jax.random.uniform(next(ks), (1, H), jnp.float32, -s, s)
        bias = jnp.zeros((1, H), jnp.float32)
        return dict(wl=wl, bl=bl, wr=wr, br=br, we=we, attv=attv, bias=bias)

    p = {}
    p["att1_w"], p["att1_b"] = lin()
    p["att2_w"], p["att2_b"] = lin()
    p["conv1"], p["bn1"] = gat(), bn()
    p["conv2"], p["bn2"] = gat(), bn()
    a1w, a1b = lin()
    a2w, a2b = lin()
    p["agg"] = dict(w1=a1w, b1=a1b, w2=a2w, b2=a2b)
    lw, lb = lin()
    p["lin"] = dict(w=lw, b=lb)
    iw, ib = lin()
    p["img_emb"], p["bn_img"] = dict(w=iw, b=ib), bn()
    tw, tb = lin()
    p["txt_emb"], p["bn_txt"] = dict(w=tw, b=tb), bn()
    scale_init = jnp.float32(np.log(1.0 / 0.07))
    p["ls_it"] = scale_init
    p["ls_gi"] = scale_init
    p["ls_gt"] = scale_init
    return p


if __name__ == "__main__":
    H = 32      # hidden_channels (kept at true width -- no lane padding)
    B = 4       # number of images / texts / graphs (must match for the loss)
    G = 4
    Q = 8       # number of Q-Former query tokens
    N = 16      # graph nodes
    E = 40      # graph edges

    key = jax.random.PRNGKey(0)
    k = jax.random.split(key, 8)
    x = jax.random.normal(k[0], (N, H), jnp.float32)
    src = jax.random.randint(k[1], (E,), 0, N, dtype=jnp.int32)
    dst = jax.random.randint(k[2], (E,), 0, N, dtype=jnp.int32)
    edge_index = jnp.stack([src, dst])
    edge_attr = jax.random.normal(k[3], (E, H), jnp.float32)
    batch = jnp.repeat(jnp.arange(G, dtype=jnp.int32), N // G)
    # stand-ins for BLIP2 vision_proj(query_output) and text_proj(cls) outputs
    image_feats = jax.random.normal(k[4], (B, Q, H), jnp.float32)
    text_feats = jax.random.normal(k[5], (B, H), jnp.float32)

    params = init_params(k[6], H)

    fwd = jax.jit(tigr_forward, static_argnums=(7, 8))

    # fused single-launch path (what the shipped problem size uses)
    out_fused = jax.block_until_ready(
        fwd(params, x, edge_index, edge_attr, batch, image_feats, text_feats,
            G, "fused"))
    # tiled large-N code path, exercised at the same size for coverage
    out_tiled = jax.block_until_ready(
        fwd(params, x, edge_index, edge_attr, batch, image_feats, text_feats,
            G, "tiled"))

    for a, b in zip(out_fused, out_tiled):
        assert np.allclose(np.asarray(a), np.asarray(b), atol=1e-2, rtol=1e-2)

    image_features, text_features, graph_features, loss = out_fused
    assert image_features.shape == (B, H)
    assert text_features.shape == (B, H)
    assert graph_features.shape == (G, H)
    assert np.isfinite(float(loss))
    for o in out_fused:
        assert np.all(np.isfinite(np.asarray(o)))
    print("KERNEL_OK")
</pallas_src>

<mosaic_0001>
module attributes {stable_mosaic.version = 11 : i64} {
  func.func @fused_forward_kernel(%arg0: i32, %arg1: memref<16x32xf32, #tpu.memory_space<vmem>>, %arg2: memref<16x16xf32, #tpu.memory_space<vmem>>, %arg3: memref<256x32xbf16, #tpu.memory_space<vmem>>, %arg4: memref<32x32xf32, #tpu.memory_space<vmem>>, %arg5: memref<32x32xf32, #tpu.memory_space<vmem>>, %arg6: memref<32x32xbf16, #tpu.memory_space<vmem>>, %arg7: memref<4x32xf32, #tpu.memory_space<vmem>>, %arg8: memref<4x32xf32, #tpu.memory_space<vmem>>, %arg9: memref<32x32xf32, #tpu.memory_space<vmem>>, %arg10: memref<32x32xf32, #tpu.memory_space<vmem>>, %arg11: memref<32x32xbf16, #tpu.memory_space<vmem>>, %arg12: memref<4x32xf32, #tpu.memory_space<vmem>>, %arg13: memref<4x32xf32, #tpu.memory_space<vmem>>, %arg14: memref<4x8x32xf32, #tpu.memory_space<vmem>>, %arg15: memref<4x32xf32, #tpu.memory_space<vmem>>, %arg16: memref<4x16xf32, #tpu.memory_space<vmem>>, %arg17: memref<32x32xf32, #tpu.memory_space<vmem>>, %arg18: memref<1x32xf32, #tpu.memory_space<vmem>>, %arg19: memref<32x32xf32, #tpu.memory_space<vmem>>, %arg20: memref<1x32xf32, #tpu.memory_space<vmem>>, %arg21: memref<32x32xf32, #tpu.memory_space<vmem>>, %arg22: memref<1x32xf32, #tpu.memory_space<vmem>>, %arg23: memref<32x32xf32, #tpu.memory_space<vmem>>, %arg24: memref<1x32xf32, #tpu.memory_space<vmem>>, %arg25: memref<32x32xf32, #tpu.memory_space<vmem>>, %arg26: memref<1x32xf32, #tpu.memory_space<vmem>>, %arg27: memref<32x32xf32, #tpu.memory_space<vmem>>, %arg28: memref<1x32xf32, #tpu.memory_space<vmem>>, %arg29: memref<4x32xf32, #tpu.memory_space<vmem>>, %arg30: memref<32x32xf32, #tpu.memory_space<vmem>>, %arg31: memref<1x32xf32, #tpu.memory_space<vmem>>, %arg32: memref<4x32xf32, #tpu.memory_space<vmem>>, %arg33: memref<3xf32, #tpu.memory_space<smem>>, %arg34: memref<4x32xf32, #tpu.memory_space<vmem>>, %arg35: memref<4x32xf32, #tpu.memory_space<vmem>>, %arg36: memref<4x32xf32, #tpu.memory_space<vmem>>, %arg37: memref<1x1xf32, #tpu.memory_space<smem>>) attributes {dimension_semantics = [#tpu.dimension_semantics<arbitrary>], iteration_bounds = array<i64: 1>, scalar_prefetch = 0 : i64, scratch_operands = 0 : i64, tpu.core_type = #tpu.core_type<tc>, window_params = [{pipeline_mode = #tpu.pipeline_mode<synchronous>, transform_indices = @transform_0, window_bounds = array<i64: 16, 32>}, {pipeline_mode = #tpu.pipeline_mode<synchronous>, transform_indices = @transform_1, window_bounds = array<i64: 16, 16>}, {pipeline_mode = #tpu.pipeline_mode<synchronous>, transform_indices = @transform_2, window_bounds = array<i64: 256, 32>}, {pipeline_mode = #tpu.pipeline_mode<synchronous>, transform_indices = @transform_3, window_bounds = array<i64: 32, 32>}, {pipeline_mode = #tpu.pipeline_mode<synchronous>, transform_indices = @transform_4, window_bounds = array<i64: 32, 32>}, {pipeline_mode = #tpu.pipeline_mode<synchronous>, transform_indices = @transform_5, window_bounds = array<i64: 32, 32>}, {pipeline_mode = #tpu.pipeline_mode<synchronous>, transform_indices = @transform_6, window_bounds = array<i64: 4, 32>}, {pipeline_mode = #tpu.pipeline_mode<synchronous>, transform_indices = @transform_7, window_bounds = array<i64: 4, 32>}, {pipeline_mode = #tpu.pipeline_mode<synchronous>, transform_indices = @transform_8, window_bounds = array<i64: 32, 32>}, {pipeline_mode = #tpu.pipeline_mode<synchronous>, transform_indices = @transform_9, window_bounds = array<i64: 32, 32>}, {pipeline_mode = #tpu.pipeline_mode<synchronous>, transform_indices = @transform_10, window_bounds = array<i64: 32, 32>}, {pipeline_mode = #tpu.pipeline_mode<synchronous>, transform_indices = @transform_11, window_bounds = array<i64: 4, 32>}, {pipeline_mode = #tpu.pipeline_mode<synchronous>, transform_indices = @transform_12, window_bounds = array<i64: 4, 32>}, {pipeline_mode = #tpu.pipeline_mode<synchronous>, transform_indices = @transform_13, window_bounds = array<i64: 4, 8, 32>}, {pipeline_mode = #tpu.pipeline_mode<synchronous>, transform_indices = @transform_14, window_bounds = array<i64: 4, 32>}, {pipeline_mode = #tpu.pipeline_mode<synchronous>, transform_indices = @transform_15, window_bounds = array<i64: 4, 16>}, {pipeline_mode = #tpu.pipeline_mode<synchronous>, transform_indices = @transform_16, window_bounds = array<i64: 32, 32>}, {pipeline_mode = #tpu.pipeline_mode<synchronous>, transform_indices = @transform_17, window_bounds = array<i64: 1, 32>}, {pipeline_mode = #tpu.pipeline_mode<synchronous>, transform_indices = @transform_18, window_bounds = array<i64: 32, 32>}, {pipeline_mode = #tpu.pipeline_mode<synchronous>, transform_indices = @transform_19, window_bounds = array<i64: 1, 32>}, {pipeline_mode = #tpu.pipeline_mode<synchronous>, transform_indices = @transform_20, window_bounds = array<i64: 32, 32>}, {pipeline_mode = #tpu.pipeline_mode<synchronous>, transform_indices = @transform_21, window_bounds = array<i64: 1, 32>}, {pipeline_mode = #tpu.pipeline_mode<synchronous>, transform_indices = @transform_22, window_bounds = array<i64: 32, 32>}, {pipeline_mode = #tpu.pipeline_mode<synchronous>, transform_indices = @transform_23, window_bounds = array<i64: 1, 32>}, {pipeline_mode = #tpu.pipeline_mode<synchronous>, transform_indices = @transform_24, window_bounds = array<i64: 32, 32>}, {pipeline_mode = #tpu.pipeline_mode<synchronous>, transform_indices = @transform_25, window_bounds = array<i64: 1, 32>}, {pipeline_mode = #tpu.pipeline_mode<synchronous>, transform_indices = @transform_26, window_bounds = array<i64: 32, 32>}, {pipeline_mode = #tpu.pipeline_mode<synchronous>, transform_indices = @transform_27, window_bounds = array<i64: 1, 32>}, {pipeline_mode = #tpu.pipeline_mode<synchronous>, transform_indices = @transform_28, window_bounds = array<i64: 4, 32>}, {pipeline_mode = #tpu.pipeline_mode<synchronous>, transform_indices = @transform_29, window_bounds = array<i64: 32, 32>}, {pipeline_mode = #tpu.pipeline_mode<synchronous>, transform_indices = @transform_30, window_bounds = array<i64: 1, 32>}, {pipeline_mode = #tpu.pipeline_mode<synchronous>, transform_indices = @transform_31, window_bounds = array<i64: 4, 32>}, {transform_indices = @transform_32, window_bounds = array<i64: 3>}, {pipeline_mode = #tpu.pipeline_mode<synchronous>, transform_indices = @transform_33, window_bounds = array<i64: 4, 32>}, {pipeline_mode = #tpu.pipeline_mode<synchronous>, transform_indices = @transform_34, window_bounds = array<i64: 4, 32>}, {pipeline_mode = #tpu.pipeline_mode<synchronous>, transform_indices = @transform_35, window_bounds = array<i64: 4, 32>}, {transform_indices = @transform_36, window_bounds = array<i64: 1, 1>}]} {
    %c0 = arith.constant 0 : index
    %c0_0 = arith.constant 0 : index
    %0 = vector.load %arg1[%c0, %c0_0] : memref<16x32xf32, #tpu.memory_space<vmem>>, vector<16x32xf32>
    %c0_1 = arith.constant 0 : index
    %c0_2 = arith.constant 0 : index
    %1 = vector.load %arg2[%c0_1, %c0_2] : memref<16x16xf32, #tpu.memory_space<vmem>>, vector<16x16xf32>
    %c0_3 = arith.constant 0 : index
    %c0_4 = arith.constant 0 : index
    %2 = vector.load %arg3[%c0_3, %c0_4] : memref<256x32xbf16, #tpu.memory_space<vmem>>, vector<256x32xbf16>
    %c0_5 = arith.constant 0 : index
    %c0_6 = arith.constant 0 : index
    %3 = vector.load %arg4[%c0_5, %c0_6] : memref<32x32xf32, #tpu.memory_space<vmem>>, vector<32x32xf32>
    %c0_7 = arith.constant 0 : index
    %c0_8 = arith.constant 0 : index
    %4 = vector.load %arg5[%c0_7, %c0_8] : memref<32x32xf32, #tpu.memory_space<vmem>>, vector<32x32xf32>
    %c0_9 = arith.constant 0 : index
    %c0_10 = arith.constant 0 : index
    %5 = vector.load %arg6[%c0_9, %c0_10] : memref<32x32xbf16, #tpu.memory_space<vmem>>, vector<32x32xbf16>
    %c0_11 = arith.constant 0 : index
    %c0_12 = arith.constant 0 : index
    %6 = vector.load %arg7[%c0_11, %c0_12] : memref<4x32xf32, #tpu.memory_space<vmem>>, vector<4x32xf32>
    %c0_13 = arith.constant 0 : index
    %c0_14 = arith.constant 0 : index
    %7 = vector.load %arg8[%c0_13, %c0_14] : memref<4x32xf32, #tpu.memory_space<vmem>>, vector<4x32xf32>
    %8 = vector.extract_strided_slice %6 {offsets = [0, 0], sizes = [1, 32], strides = [1, 1]} : vector<4x32xf32> to vector<1x32xf32>
    %9 = vector.extract_strided_slice %6 {offsets = [1, 0], sizes = [1, 32], strides = [1, 1]} : vector<4x32xf32> to vector<1x32xf32>
    %10 = vector.extract_strided_slice %6 {offsets = [2, 0], sizes = [1, 32], strides = [1, 1]} : vector<4x32xf32> to vector<1x32xf32>
    %11 = vector.extract_strided_slice %6 {offsets = [3, 0], sizes = [1, 32], strides = [1, 1]} : vector<4x32xf32> to vector<1x32xf32>
    %cst = arith.constant dense<0.000000e+00> : vector<16x32xf32>
    %12 = tpu.matmul %0, %3, %cst {dimension_numbers = #tpu.dot_dimension_numbers<[1], [0], [0], [1], [0, 0, 1, 1], [], []>} : vector<16x32xf32>, vector<32x32xf32>, vector<16x32xf32> -> vector<16x32xf32>
    %13 = vector.broadcast %8 : vector<1x32xf32> to vector<16x32xf32>
    %14 = arith.addf %12, %13 : vector<16x32xf32>
    %cst_15 = arith.constant dense<0.000000e+00> : vector<16x32xf32>
    %15 = tpu.matmul %0, %4, %cst_15 {dimension_numbers = #tpu.dot_dimension_numbers<[1], [0], [0], [1], [0, 0, 1, 1], [], []>} : vector<16x32xf32>, vector<32x32xf32>, vector<16x32xf32> -> vector<16x32xf32>
    %16 = vector.broadcast %9 : vector<1x32xf32> to vector<16x32xf32>
    %17 = arith.addf %15, %16 : vector<16x32xf32>
    %cst_16 = arith.constant dense<0.000000e+00> : vector<256x32xf32>
    %18 = tpu.matmul %2, %5, %cst_16 {dimension_numbers = #tpu.dot_dimension_numbers<[1], [0], [0], [1], [0, 0, 1, 1], [], []>} : vector<256x32xbf16>, vector<32x32xbf16>, vector<256x32xf32> -> vector<256x32xf32>
    %19 = vector.shape_cast %17 : vector<16x32xf32> to vector<16x1x32xf32>
    %20 = vector.shape_cast %14 : vector<16x32xf32> to vector<1x16x32xf32>
    %21 = vector.broadcast %19 : vector<16x1x32xf32> to vector<16x16x32xf32>
    %22 = vector.broadcast %20 : vector<1x16x32xf32> to vector<16x16x32xf32>
    %23 = arith.addf %21, %22 : vector<16x16x32xf32>
    %24 = vector.shape_cast %18 : vector<256x32xf32> to vector<16x16x32xf32>
    %25 = arith.addf %23, %24 : vector<16x16x32xf32>
    %cst_17 = arith.constant 2.000000e-01 : f32
    %26 = vector.broadcast %cst_17 : f32 to vector<16x16x32xf32>
    %27 = arith.mulf %26, %25 : vector<16x16x32xf32>
    %28 = arith.maximumf %25, %27 : vector<16x16x32xf32>
    %29 = vector.shape_cast %10 : vector<1x32xf32> to vector<1x1x32xf32>
    %30 = vector.broadcast %29 : vector<1x1x32xf32> to vector<16x16x32xf32>
    %31 = arith.mulf %28, %30 : vector<16x16x32xf32>
    %cst_18 = arith.constant dense<0.000000e+00> : vector<16x16xf32>
    %32 = vector.multi_reduction <add>, %31, %cst_18 [2] : vector<16x16x32xf32> to vector<16x16xf32>
    %cst_19 = arith.constant 0.000000e+00 : f32
    %33 = vector.broadcast %cst_19 : f32 to vector<16x16xf32>
    %34 = arith.cmpf ogt, %1, %33 : vector<16x16xf32>
    %cst_20 = arith.constant -1.000000e+30 : f32
    %35 = vector.broadcast %cst_20 : f32 to vector<16x16xf32>
    %36 = arith.select %34, %32, %35 : vector<16x16xi1>, vector<16x16xf32>
    %cst_21 = arith.constant dense<0xFF800000> : vector<16xf32>
    %37 = vector.multi_reduction <maximumf>, %36, %cst_21 [1] : vector<16x16xf32> to vector<16xf32>
    %38 = vector.shape_cast %37 : vector<16xf32> to vector<16x1xf32>
    %39 = vector.broadcast %38 : vector<16x1xf32> to vector<16x16xf32>
    %40 = arith.subf %36, %39 : vector<16x16xf32>
    %41 = math.exp %40 : vector<16x16xf32>
    %42 = arith.mulf %41, %1 : vector<16x16xf32>
    %cst_22 = arith.constant dense<0.000000e+00> : vector<16xf32>
    %43 = vector.multi_reduction <add>, %42, %cst_22 [1] : vector<16x16xf32> to vector<16xf32>
    %44 = vector.shape_cast %43 : vector<16xf32> to vector<16x1xf32>
    %cst_23 = arith.constant 9.99999968E-21 : f32
    %45 = vector.broadcast %cst_23 : f32 to vector<16x1xf32>
    %46 = arith.maximumf %44, %45 : vector<16x1xf32>
    %47 = vector.broadcast %46 : vector<16x1xf32> to vector<16x16xf32>
    %48 = arith.divf %42, %47 : vector<16x16xf32>
    %cst_24 = arith.constant dense<0.000000e+00> : vector<16x32xf32>
    %49 = tpu.matmul %48, %14, %cst_24 {dimension_numbers = #tpu.dot_dimension_numbers<[1], [0], [0], [1], [0, 0, 1, 1], [], []>} : vector<16x16xf32>, vector<16x32xf32>, vector<16x32xf32> -> vector<16x32xf32>
    %50 = vector.broadcast %11 : vector<1x32xf32> to vector<16x32xf32>
    %51 = arith.addf %49, %50 : vector<16x32xf32>
    %52 = vector.extract_strided_slice %7 {offsets = [0, 0], sizes = [1, 32], strides = [1, 1]} : vector<4x32xf32> to vector<1x32xf32>
    %53 = vector.extract_strided_slice %7 {offsets = [1, 0], sizes = [1, 32], strides = [1, 1]} : vector<4x32xf32> to vector<1x32xf32>
    %54 = vector.extract_strided_slice %7 {offsets = [2, 0], sizes = [1, 32], strides = [1, 1]} : vector<4x32xf32> to vector<1x32xf32>
    %55 = vector.extract_strided_slice %7 {offsets = [3, 0], sizes = [1, 32], strides = [1, 1]} : vector<4x32xf32> to vector<1x32xf32>
    %56 = vector.broadcast %54 : vector<1x32xf32> to vector<16x32xf32>
    %57 = arith.subf %51, %56 : vector<16x32xf32>
    %cst_25 = arith.constant 9.99999974E-6 : f32
    %58 = vector.broadcast %cst_25 : f32 to vector<1x32xf32>
    %59 = arith.addf %55, %58 : vector<1x32xf32>
    %60 = math.rsqrt %59 : vector<1x32xf32>
    %61 = vector.broadcast %60 : vector<1x32xf32> to vector<16x32xf32>
    %62 = arith.mulf %57, %61 : vector<16x32xf32>
    %63 = vector.broadcast %52 : vector<1x32xf32> to vector<16x32xf32>
    %64 = arith.mulf %62, %63 : vector<16x32xf32>
    %65 = vector.broadcast %53 : vector<1x32xf32> to vector<16x32xf32>
    %66 = arith.addf %64, %65 : vector<16x32xf32>
    %67 = math.tanh %66 : vector<16x32xf32>
    %c0_26 = arith.constant 0 : index
    %c0_27 = arith.constant 0 : index
    %68 = vector.load %arg9[%c0_26, %c0_27] : memref<32x32xf32, #tpu.memory_space<vmem>>, vector<32x32xf32>
    %c0_28 = arith.constant 0 : index
    %c0_29 = arith.constant 0 : index
    %69 = vector.load %arg10[%c0_28, %c0_29] : memref<32x32xf32, #tpu.memory_space<vmem>>, vector<32x32xf32>
    %c0_30 = arith.constant 0 : index
    %c0_31 = arith.constant 0 : index
    %70 = vector.load %arg11[%c0_30, %c0_31] : memref<32x32xbf16, #tpu.memory_space<vmem>>, vector<32x32xbf16>
    %c0_32 = arith.constant 0 : index
    %c0_33 = arith.constant 0 : index
    %71 = vector.load %arg12[%c0_32, %c0_33] : memref<4x32xf32, #tpu.memory_space<vmem>>, vector<4x32xf32>
    %c0_34 = arith.constant 0 : index
    %c0_35 = arith.constant 0 : index
    %72 = vector.load %arg13[%c0_34, %c0_35] : memref<4x32xf32, #tpu.memory_space<vmem>>, vector<4x32xf32>
    %73 = vector.extract_strided_slice %71 {offsets = [0, 0], sizes = [1, 32], strides = [1, 1]} : vector<4x32xf32> to vector<1x32xf32>
    %74 = vector.extract_strided_slice %71 {offsets = [1, 0], sizes = [1, 32], strides = [1, 1]} : vector<4x32xf32> to vector<1x32xf32>
    %75 = vector.extract_strided_slice %71 {offsets = [2, 0], sizes = [1, 32], strides = [1, 1]} : vector<4x32xf32> to vector<1x32xf32>
    %76 = vector.extract_strided_slice %71 {offsets = [3, 0], sizes = [1, 32], strides = [1, 1]} : vector<4x32xf32> to vector<1x32xf32>
    %cst_36 = arith.constant dense<0.000000e+00> : vector<16x32xf32>
    %77 = tpu.matmul %67, %68, %cst_36 {dimension_numbers = #tpu.dot_dimension_numbers<[1], [0], [0], [1], [0, 0, 1, 1], [], []>} : vector<16x32xf32>, vector<32x32xf32>, vector<16x32xf32> -> vector<16x32xf32>
    %78 = vector.broadcast %73 : vector<1x32xf32> to vector<16x32xf32>
    %79 = arith.addf %77, %78 : vector<16x32xf32>
    %cst_37 = arith.constant dense<0.000000e+00> : vector<16x32xf32>
    %80 = tpu.matmul %67, %69, %cst_37 {dimension_numbers = #tpu.dot_dimension_numbers<[1], [0], [0], [1], [0, 0, 1, 1], [], []>} : vector<16x32xf32>, vector<32x32xf32>, vector<16x32xf32> -> vector<16x32xf32>
    %81 = vector.broadcast %74 : vector<1x32xf32> to vector<16x32xf32>
    %82 = arith.addf %80, %81 : vector<16x32xf32>
    %cst_38 = arith.constant dense<0.000000e+00> : vector<256x32xf32>
    %83 = tpu.matmul %2, %70, %cst_38 {dimension_numbers = #tpu.dot_dimension_numbers<[1], [0], [0], [1], [0, 0, 1, 1], [], []>} : vector<256x32xbf16>, vector<32x32xbf16>, vector<256x32xf32> -> vector<256x32xf32>
    %84 = vector.shape_cast %82 : vector<16x32xf32> to vector<16x1x32xf32>
    %85 = vector.shape_cast %79 : vector<16x32xf32> to vector<1x16x32xf32>
    %86 = vector.broadcast %84 : vector<16x1x32xf32> to vector<16x16x32xf32>
    %87 = vector.broadcast %85 : vector<1x16x32xf32> to vector<16x16x32xf32>
    %88 = arith.addf %86, %87 : vector<16x16x32xf32>
    %89 = vector.shape_cast %83 : vector<256x32xf32> to vector<16x16x32xf32>
    %90 = arith.addf %88, %89 : vector<16x16x32xf32>
    %cst_39 = arith.constant 2.000000e-01 : f32
    %91 = vector.broadcast %cst_39 : f32 to vector<16x16x32xf32>
    %92 = arith.mulf %91, %90 : vector<16x16x32xf32>
    %93 = arith.maximumf %90, %92 : vector<16x16x32xf32>
    %94 = vector.shape_cast %75 : vector<1x32xf32> to vector<1x1x32xf32>
    %95 = vector.broadcast %94 : vector<1x1x32xf32> to vector<16x16x32xf32>
    %96 = arith.mulf %93, %95 : vector<16x16x32xf32>
    %cst_40 = arith.constant dense<0.000000e+00> : vector<16x16xf32>
    %97 = vector.multi_reduction <add>, %96, %cst_40 [2] : vector<16x16x32xf32> to vector<16x16xf32>
    %cst_41 = arith.constant 0.000000e+00 : f32
    %98 = vector.broadcast %cst_41 : f32 to vector<16x16xf32>
    %99 = arith.cmpf ogt, %1, %98 : vector<16x16xf32>
    %cst_42 = arith.constant -1.000000e+30 : f32
    %100 = vector.broadcast %cst_42 : f32 to vector<16x16xf32>
    %101 = arith.select %99, %97, %100 : vector<16x16xi1>, vector<16x16xf32>
    %cst_43 = arith.constant dense<0xFF800000> : vector<16xf32>
    %102 = vector.multi_reduction <maximumf>, %101, %cst_43 [1] : vector<16x16xf32> to vector<16xf32>
    %103 = vector.shape_cast %102 : vector<16xf32> to vector<16x1xf32>
    %104 = vector.broadcast %103 : vector<16x1xf32> to vector<16x16xf32>
    %105 = arith.subf %101, %104 : vector<16x16xf32>
    %106 = math.exp %105 : vector<16x16xf32>
    %107 = arith.mulf %106, %1 : vector<16x16xf32>
    %cst_44 = arith.constant dense<0.000000e+00> : vector<16xf32>
    %108 = vector.multi_reduction <add>, %107, %cst_44 [1] : vector<16x16xf32> to vector<16xf32>
    %109 = vector.shape_cast %108 : vector<16xf32> to vector<16x1xf32>
    %cst_45 = arith.constant 9.99999968E-21 : f32
    %110 = vector.broadcast %cst_45 : f32 to vector<16x1xf32>
    %111 = arith.maximumf %109, %110 : vector<16x1xf32>
    %112 = vector.broadcast %111 : vector<16x1xf32> to vector<16x16xf32>
    %113 = arith.divf %107, %112 : vector<16x16xf32>
    %cst_46 = arith.constant dense<0.000000e+00> : vector<16x32xf32>
    %114 = tpu.matmul %113, %79, %cst_46 {dimension_numbers = #tpu.dot_dimension_numbers<[1], [0], [0], [1], [0, 0, 1, 1], [], []>} : vector<16x16xf32>, vector<16x32xf32>, vector<16x32xf32> -> vector<16x32xf32>
    %115 = vector.broadcast %76 : vector<1x32xf32> to vector<16x32xf32>
    %116 = arith.addf %114, %115 : vector<16x32xf32>
    %117 = vector.extract_strided_slice %72 {offsets = [0, 0], sizes = [1, 32], strides = [1, 1]} : vector<4x32xf32> to vector<1x32xf32>
    %118 = vector.extract_strided_slice %72 {offsets = [1, 0], sizes = [1, 32], strides = [1, 1]} : vector<4x32xf32> to vector<1x32xf32>
    %119 = vector.extract_strided_slice %72 {offsets = [2, 0], sizes = [1, 32], strides = [1, 1]} : vector<4x32xf32> to vector<1x32xf32>
    %120 = vector.extract_strided_slice %72 {offsets = [3, 0], sizes = [1, 32], strides = [1, 1]} : vector<4x32xf32> to vector<1x32xf32>
    %121 = vector.broadcast %119 : vector<1x32xf32> to vector<16x32xf32>
    %122 = arith.subf %116, %121 : vector<16x32xf32>
    %cst_47 = arith.constant 9.99999974E-6 : f32
    %123 = vector.broadcast %cst_47 : f32 to vector<1x32xf32>
    %124 = arith.addf %120, %123 : vector<1x32xf32>
    %125 = math.rsqrt %124 : vector<1x32xf32>
    %126 = vector.broadcast %125 : vector<1x32xf32> to vector<16x32xf32>
    %127 = arith.mulf %122, %126 : vector<16x32xf32>
    %128 = vector.broadcast %117 : vector<1x32xf32> to vector<16x32xf32>
    %129 = arith.mulf %127, %128 : vector<16x32xf32>
    %130 = vector.broadcast %118 : vector<1x32xf32> to vector<16x32xf32>
    %131 = arith.addf %129, %130 : vector<16x32xf32>
    %132 = math.tanh %131 : vector<16x32xf32>
    %c0_48 = arith.constant 0 : index
    %c0_49 = arith.constant 0 : index
    %c0_50 = arith.constant 0 : index
    %133 = vector.load %arg14[%c0_48, %c0_49, %c0_50] : memref<4x8x32xf32, #tpu.memory_space<vmem>>, vector<4x8x32xf32>
    %c0_51 = arith.constant 0 : index
    %c0_52 = arith.constant 0 : index
    %134 = vector.load %arg15[%c0_51, %c0_52] : memref<4x32xf32, #tpu.memory_space<vmem>>, vector<4x32xf32>
    %c0_53 = arith.constant 0 : index
    %c0_54 = arith.constant 0 : index
    %135 = vector.load %arg16[%c0_53, %c0_54] : memref<4x16xf32, #tpu.memory_space<vmem>>, vector<4x16xf32>
    %c0_55 = arith.constant 0 : index
    %c0_56 = arith.constant 0 : index
    %136 = vector.load %arg17[%c0_55, %c0_56] : memref<32x32xf32, #tpu.memory_space<vmem>>, vector<32x32xf32>
    %c0_57 = arith.constant 0 : index
    %c0_58 = arith.constant 0 : index
    %137 = vector.load %arg18[%c0_57, %c0_58] : memref<1x32xf32, #tpu.memory_space<vmem>>, vector<1x32xf32>
    %c0_59 = arith.constant 0 : index
    %c0_60 = arith.constant 0 : index
    %138 = vector.load %arg19[%c0_59, %c0_60] : memref<32x32xf32, #tpu.memory_space<vmem>>, vector<32x32xf32>
    %c0_61 = arith.constant 0 : index
    %c0_62 = arith.constant 0 : index
    %139 = vector.load %arg20[%c0_61, %c0_62] : memref<1x32xf32, #tpu.memory_space<vmem>>, vector<1x32xf32>
    %c0_63 = arith.constant 0 : index
    %c0_64 = arith.constant 0 : index
    %140 = vector.load %arg21[%c0_63, %c0_64] : memref<32x32xf32, #tpu.memory_space<vmem>>, vector<32x32xf32>
    %c0_65 = arith.constant 0 : index
    %c0_66 = arith.constant 0 : index
    %141 = vector.load %arg22[%c0_65, %c0_66] : memref<1x32xf32, #tpu.memory_space<vmem>>, vector<1x32xf32>
    %c0_67 = arith.constant 0 : index
    %c0_68 = arith.constant 0 : index
    %142 = vector.load %arg23[%c0_67, %c0_68] : memref<32x32xf32, #tpu.memory_space<vmem>>, vector<32x32xf32>
    %c0_69 = arith.constant 0 : index
    %c0_70 = arith.constant 0 : index
    %143 = vector.load %arg24[%c0_69, %c0_70] : memref<1x32xf32, #tpu.memory_space<vmem>>, vector<1x32xf32>
    %c0_71 = arith.constant 0 : index
    %c0_72 = arith.constant 0 : index
    %144 = vector.load %arg25[%c0_71, %c0_72] : memref<32x32xf32, #tpu.memory_space<vmem>>, vector<32x32xf32>
    %c0_73 = arith.constant 0 : index
    %c0_74 = arith.constant 0 : index
    %145 = vector.load %arg26[%c0_73, %c0_74] : memref<1x32xf32, #tpu.memory_space<vmem>>, vector<1x32xf32>
    %c0_75 = arith.constant 0 : index
    %c0_76 = arith.constant 0 : index
    %146 = vector.load %arg27[%c0_75, %c0_76] : memref<32x32xf32, #tpu.memory_space<vmem>>, vector<32x32xf32>
    %c0_77 = arith.constant 0 : index
    %c0_78 = arith.constant 0 : index
    %147 = vector.load %arg28[%c0_77, %c0_78] : memref<1x32xf32, #tpu.memory_space<vmem>>, vector<1x32xf32>
    %c0_79 = arith.constant 0 : index
    %c0_80 = arith.constant 0 : index
    %148 = vector.load %arg29[%c0_79, %c0_80] : memref<4x32xf32, #tpu.memory_space<vmem>>, vector<4x32xf32>
    %c0_81 = arith.constant 0 : index
    %c0_82 = arith.constant 0 : index
    %149 = vector.load %arg30[%c0_81, %c0_82] : memref<32x32xf32, #tpu.memory_space<vmem>>, vector<32x32xf32>
    %c0_83 = arith.constant 0 : index
    %c0_84 = arith.constant 0 : index
    %150 = vector.load %arg31[%c0_83, %c0_84] : memref<1x32xf32, #tpu.memory_space<vmem>>, vector<1x32xf32>
    %c0_85 = arith.constant 0 : index
    %c0_86 = arith.constant 0 : index
    %151 = vector.load %arg32[%c0_85, %c0_86] : memref<4x32xf32, #tpu.memory_space<vmem>>, vector<4x32xf32>
    %c0_87 = arith.constant 0 : index
    %152 = memref.load %arg33[%c0_87] : memref<3xf32, #tpu.memory_space<smem>>
    %c1 = arith.constant 1 : index
    %153 = memref.load %arg33[%c1] : memref<3xf32, #tpu.memory_space<smem>>
    %c2 = arith.constant 2 : index
    %154 = memref.load %arg33[%c2] : memref<3xf32, #tpu.memory_space<smem>>
    %155 = arith.mulf %133, %133 : vector<4x8x32xf32>
    %cst_88 = arith.constant dense<0.000000e+00> : vector<4x8xf32>
    %156 = vector.multi_reduction <add>, %155, %cst_88 [2] : vector<4x8x32xf32> to vector<4x8xf32>
    %157 = vector.shape_cast %156 : vector<4x8xf32> to vector<4x8x1xf32>
    %cst_89 = arith.constant 9.99999996E-13 : f32
    %158 = vector.broadcast %cst_89 : f32 to vector<4x8x1xf32>
    %159 = arith.addf %157, %158 : vector<4x8x1xf32>
    %160 = math.rsqrt %159 : vector<4x8x1xf32>
    %161 = vector.broadcast %160 : vector<4x8x1xf32> to vector<4x8x32xf32>
    %162 = arith.mulf %133, %161 : vector<4x8x32xf32>
    %163 = vector.shape_cast %162 : vector<4x8x32xf32> to vector<32x32xf32>
    %cst_90 = arith.constant dense<0.000000e+00> : vector<32x32xf32>
    %164 = tpu.matmul %163, %142, %cst_90 {dimension_numbers = #tpu.dot_dimension_numbers<[1], [0], [0], [1], [0, 0, 1, 1], [], []>} : vector<32x32xf32>, vector<32x32xf32>, vector<32x32xf32> -> vector<32x32xf32>
    %165 = vector.broadcast %143 : vector<1x32xf32> to vector<32x32xf32>
    %166 = arith.addf %164, %165 : vector<32x32xf32>
    %cst_91 = arith.constant 0.000000e+00 : f32
    %167 = vector.broadcast %cst_91 : f32 to vector<32x32xf32>
    %168 = arith.maximumf %166, %167 : vector<32x32xf32>
    %cst_92 = arith.constant dense<0.000000e+00> : vector<32x32xf32>
    %169 = tpu.matmul %168, %144, %cst_92 {dimension_numbers = #tpu.dot_dimension_numbers<[1], [0], [0], [1], [0, 0, 1, 1], [], []>} : vector<32x32xf32>, vector<32x32xf32>, vector<32x32xf32> -> vector<32x32xf32>
    %170 = vector.broadcast %145 : vector<1x32xf32> to vector<32x32xf32>
    %171 = arith.addf %169, %170 : vector<32x32xf32>
    %172 = vector.shape_cast %171 : vector<32x32xf32> to vector<4x8x32xf32>
    %cst_93 = arith.constant dense<0xFF800000> : vector<4x32xf32>
    %173 = vector.multi_reduction <maximumf>, %172, %cst_93 [1] : vector<4x8x32xf32> to vector<4x32xf32>
    %174 = vector.shape_cast %173 : vector<4x32xf32> to vector<4x1x32xf32>
    %175 = vector.broadcast %174 : vector<4x1x32xf32> to vector<4x8x32xf32>
    %176 = arith.subf %172, %175 : vector<4x8x32xf32>
    %177 = math.exp %176 : vector<4x8x32xf32>
    %cst_94 = arith.constant dense<0.000000e+00> : vector<4x32xf32>
    %178 = vector.multi_reduction <add>, %177, %cst_94 [1] : vector<4x8x32xf32> to vector<4x32xf32>
    %179 = vector.shape_cast %178 : vector<4x32xf32> to vector<4x1x32xf32>
    %180 = vector.broadcast %179 : vector<4x1x32xf32> to vector<4x8x32xf32>
    %181 = arith.divf %177, %180 : vector<4x8x32xf32>
    %182 = arith.mulf %181, %162 : vector<4x8x32xf32>
    %cst_95 = arith.constant dense<0.000000e+00> : vector<4x32xf32>
    %183 = vector.multi_reduction <add>, %182, %cst_95 [1] : vector<4x8x32xf32> to vector<4x32xf32>
    %cst_96 = arith.constant dense<0.000000e+00> : vector<4x32xf32>
    %184 = tpu.matmul %183, %146, %cst_96 {dimension_numbers = #tpu.dot_dimension_numbers<[1], [0], [0], [1], [0, 0, 1, 1], [], []>} : vector<4x32xf32>, vector<32x32xf32>, vector<4x32xf32> -> vector<4x32xf32>
    %185 = vector.broadcast %147 : vector<1x32xf32> to vector<4x32xf32>
    %186 = arith.addf %184, %185 : vector<4x32xf32>
    %187 = vector.extract_strided_slice %148 {offsets = [0, 0], sizes = [1, 32], strides = [1, 1]} : vector<4x32xf32> to vector<1x32xf32>
    %188 = vector.extract_strided_slice %148 {offsets = [1, 0], sizes = [1, 32], strides = [1, 1]} : vector<4x32xf32> to vector<1x32xf32>
    %189 = vector.extract_strided_slice %148 {offsets = [2, 0], sizes = [1, 32], strides = [1, 1]} : vector<4x32xf32> to vector<1x32xf32>
    %190 = vector.extract_strided_slice %148 {offsets = [3, 0], sizes = [1, 32], strides = [1, 1]} : vector<4x32xf32> to vector<1x32xf32>
    %191 = vector.broadcast %189 : vector<1x32xf32> to vector<4x32xf32>
    %192 = arith.subf %186, %191 : vector<4x32xf32>
    %cst_97 = arith.constant 9.99999974E-6 : f32
    %193 = vector.broadcast %cst_97 : f32 to vector<1x32xf32>
    %194 = arith.addf %190, %193 : vector<1x32xf32>
    %195 = math.rsqrt %194 : vector<1x32xf32>
    %196 = vector.broadcast %195 : vector<1x32xf32> to vector<4x32xf32>
    %197 = arith.mulf %192, %196 : vector<4x32xf32>
    %198 = vector.broadcast %187 : vector<1x32xf32> to vector<4x32xf32>
    %199 = arith.mulf %197, %198 : vector<4x32xf32>
    %200 = vector.broadcast %188 : vector<1x32xf32> to vector<4x32xf32>
    %201 = arith.addf %199, %200 : vector<4x32xf32>
    %202 = math.tanh %201 : vector<4x32xf32>
    %203 = arith.mulf %202, %202 : vector<4x32xf32>
    %cst_98 = arith.constant dense<0.000000e+00> : vector<4xf32>
    %204 = vector.multi_reduction <add>, %203, %cst_98 [1] : vector<4x32xf32> to vector<4xf32>
    %205 = vector.shape_cast %204 : vector<4xf32> to vector<4x1xf32>
    %cst_99 = arith.constant 9.99999996E-13 : f32
    %206 = vector.broadcast %cst_99 : f32 to vector<4x1xf32>
    %207 = arith.addf %205, %206 : vector<4x1xf32>
    %208 = math.rsqrt %207 : vector<4x1xf32>
    %209 = vector.broadcast %208 : vector<4x1xf32> to vector<4x32xf32>
    %210 = arith.mulf %202, %209 : vector<4x32xf32>
    %211 = arith.mulf %134, %134 : vector<4x32xf32>
    %cst_100 = arith.constant dense<0.000000e+00> : vector<4xf32>
    %212 = vector.multi_reduction <add>, %211, %cst_100 [1] : vector<4x32xf32> to vector<4xf32>
    %213 = vector.shape_cast %212 : vector<4xf32> to vector<4x1xf32>
    %cst_101 = arith.constant 9.99999996E-13 : f32
    %214 = vector.broadcast %cst_101 : f32 to vector<4x1xf32>
    %215 = arith.addf %213, %214 : vector<4x1xf32>
    %216 = math.rsqrt %215 : vector<4x1xf32>
    %217 = vector.broadcast %216 : vector<4x1xf32> to vector<4x32xf32>
    %218 = arith.mulf %134, %217 : vector<4x32xf32>
    %cst_102 = arith.constant dense<0.000000e+00> : vector<4x32xf32>
    %219 = tpu.matmul %218, %149, %cst_102 {dimension_numbers = #tpu.dot_dimension_numbers<[1], [0], [0], [1], [0, 0, 1, 1], [], []>} : vector<4x32xf32>, vector<32x32xf32>, vector<4x32xf32> -> vector<4x32xf32>
    %220 = vector.broadcast %150 : vector<1x32xf32> to vector<4x32xf32>
    %221 = arith.addf %219, %220 : vector<4x32xf32>
    %222 = vector.extract_strided_slice %151 {offsets = [0, 0], sizes = [1, 32], strides = [1, 1]} : vector<4x32xf32> to vector<1x32xf32>
    %223 = vector.extract_strided_slice %151 {offsets = [1, 0], sizes = [1, 32], strides = [1, 1]} : vector<4x32xf32> to vector<1x32xf32>
    %224 = vector.extract_strided_slice %151 {offsets = [2, 0], sizes = [1, 32], strides = [1, 1]} : vector<4x32xf32> to vector<1x32xf32>
    %225 = vector.extract_strided_slice %151 {offsets = [3, 0], sizes = [1, 32], strides = [1, 1]} : vector<4x32xf32> to vector<1x32xf32>
    %226 = vector.broadcast %224 : vector<1x32xf32> to vector<4x32xf32>
    %227 = arith.subf %221, %226 : vector<4x32xf32>
    %cst_103 = arith.constant 9.99999974E-6 : f32
    %228 = vector.broadcast %cst_103 : f32 to vector<1x32xf32>
    %229 = arith.addf %225, %228 : vector<1x32xf32>
    %230 = math.rsqrt %229 : vector<1x32xf32>
    %231 = vector.broadcast %230 : vector<1x32xf32> to vector<4x32xf32>
    %232 = arith.mulf %227, %231 : vector<4x32xf32>
    %233 = vector.broadcast %222 : vector<1x32xf32> to vector<4x32xf32>
    %234 = arith.mulf %232, %233 : vector<4x32xf32>
    %235 = vector.broadcast %223 : vector<1x32xf32> to vector<4x32xf32>
    %236 = arith.addf %234, %235 : vector<4x32xf32>
    %237 = math.tanh %236 : vector<4x32xf32>
    %238 = arith.mulf %237, %237 : vector<4x32xf32>
    %cst_104 = arith.constant dense<0.000000e+00> : vector<4xf32>
    %239 = vector.multi_reduction <add>, %238, %cst_104 [1] : vector<4x32xf32> to vector<4xf32>
    %240 = vector.shape_cast %239 : vector<4xf32> to vector<4x1xf32>
    %cst_105 = arith.constant 9.99999996E-13 : f32
    %241 = vector.broadcast %cst_105 : f32 to vector<4x1xf32>
    %242 = arith.addf %240, %241 : vector<4x1xf32>
    %243 = math.rsqrt %242 : vector<4x1xf32>
    %244 = vector.broadcast %243 : vector<4x1xf32> to vector<4x32xf32>
    %245 = arith.mulf %237, %244 : vector<4x32xf32>
    %cst_106 = arith.constant dense<0.000000e+00> : vector<16x32xf32>
    %246 = tpu.matmul %132, %136, %cst_106 {dimension_numbers = #tpu.dot_dimension_numbers<[1], [0], [0], [1], [0, 0, 1, 1], [], []>} : vector<16x32xf32>, vector<32x32xf32>, vector<16x32xf32> -> vector<16x32xf32>
    %247 = vector.broadcast %137 : vector<1x32xf32> to vector<16x32xf32>
    %248 = arith.addf %246, %247 : vector<16x32xf32>
    %249 = math.tanh %248 : vector<16x32xf32>
    %cst_107 = arith.constant dense<0.000000e+00> : vector<16x32xf32>
    %250 = tpu.matmul %249, %138, %cst_107 {dimension_numbers = #tpu.dot_dimension_numbers<[1], [0], [0], [1], [0, 0, 1, 1], [], []>} : vector<16x32xf32>, vector<32x32xf32>, vector<16x32xf32> -> vector<16x32xf32>
    %251 = vector.broadcast %139 : vector<1x32xf32> to vector<16x32xf32>
    %252 = arith.addf %250, %251 : vector<16x32xf32>
    %253 = vector.shape_cast %135 : vector<4x16xf32> to vector<4x16x1xf32>
    %cst_108 = arith.constant 0.000000e+00 : f32
    %254 = vector.broadcast %cst_108 : f32 to vector<4x16x1xf32>
    %255 = arith.cmpf ogt, %253, %254 : vector<4x16x1xf32>
    %256 = vector.shape_cast %252 : vector<16x32xf32> to vector<1x16x32xf32>
    %cst_109 = arith.constant -1.000000e+30 : f32
    %257 = vector.shape_cast %255 : vector<4x16x1xi1> to vector<4x16x1xi1>
    %258 = vector.broadcast %257 : vector<4x16x1xi1> to vector<4x16x32xi1>
    %259 = vector.shape_cast %256 : vector<1x16x32xf32> to vector<1x16x32xf32>
    %260 = vector.broadcast %259 : vector<1x16x32xf32> to vector<4x16x32xf32>
    %261 = vector.broadcast %cst_109 : f32 to vector<4x16x32xf32>
    %262 = arith.select %258, %260, %261 : vector<4x16x32xi1>, vector<4x16x32xf32>
    %cst_110 = arith.constant dense<0xFF800000> : vector<4x32xf32>
    %263 = vector.multi_reduction <maximumf>, %262, %cst_110 [1] : vector<4x16x32xf32> to vector<4x32xf32>
    %264 = vector.shape_cast %263 : vector<4x32xf32> to vector<4x1x32xf32>
    %265 = vector.broadcast %264 : vector<4x1x32xf32> to vector<4x16x32xf32>
    %266 = arith.subf %262, %265 : vector<4x16x32xf32>
    %267 = math.exp %266 : vector<4x16x32xf32>
    %268 = vector.shape_cast %135 : vector<4x16xf32> to vector<4x16x1xf32>
    %269 = vector.broadcast %268 : vector<4x16x1xf32> to vector<4x16x32xf32>
    %270 = arith.mulf %267, %269 : vector<4x16x32xf32>
    %cst_111 = arith.constant dense<0.000000e+00> : vector<4x32xf32>
    %271 = vector.multi_reduction <add>, %270, %cst_111 [1] : vector<4x16x32xf32> to vector<4x32xf32>
    %272 = vector.shape_cast %271 : vector<4x32xf32> to vector<4x1x32xf32>
    %cst_112 = arith.constant 9.99999968E-21 : f32
    %273 = vector.broadcast %cst_112 : f32 to vector<4x1x32xf32>
    %274 = arith.maximumf %272, %273 : vector<4x1x32xf32>
    %275 = vector.broadcast %274 : vector<4x1x32xf32> to vector<4x16x32xf32>
    %276 = arith.divf %270, %275 : vector<4x16x32xf32>
    %277 = vector.shape_cast %132 : vector<16x32xf32> to vector<1x16x32xf32>
    %278 = vector.broadcast %277 : vector<1x16x32xf32> to vector<4x16x32xf32>
    %279 = arith.mulf %276, %278 : vector<4x16x32xf32>
    %cst_113 = arith.constant dense<0.000000e+00> : vector<4x32xf32>
    %280 = vector.multi_reduction <add>, %279, %cst_113 [1] : vector<4x16x32xf32> to vector<4x32xf32>
    %cst_114 = arith.constant dense<0.000000e+00> : vector<4x32xf32>
    %281 = tpu.matmul %280, %140, %cst_114 {dimension_numbers = #tpu.dot_dimension_numbers<[1], [0], [0], [1], [0, 0, 1, 1], [], []>} : vector<4x32xf32>, vector<32x32xf32>, vector<4x32xf32> -> vector<4x32xf32>
    %282 = vector.broadcast %141 : vector<1x32xf32> to vector<4x32xf32>
    %283 = arith.addf %281, %282 : vector<4x32xf32>
    %284 = arith.mulf %283, %283 : vector<4x32xf32>
    %cst_115 = arith.constant dense<0.000000e+00> : vector<4xf32>
    %285 = vector.multi_reduction <add>, %284, %cst_115 [1] : vector<4x32xf32> to vector<4xf32>
    %286 = vector.shape_cast %285 : vector<4xf32> to vector<4x1xf32>
    %cst_116 = arith.constant 9.99999996E-13 : f32
    %287 = vector.broadcast %cst_116 : f32 to vector<4x1xf32>
    %288 = arith.addf %286, %287 : vector<4x1xf32>
    %289 = math.rsqrt %288 : vector<4x1xf32>
    %290 = vector.broadcast %289 : vector<4x1xf32> to vector<4x32xf32>
    %291 = arith.mulf %283, %290 : vector<4x32xf32>
    %cst_117 = arith.constant dense<0.000000e+00> : vector<4x4xf32>
    %292 = tpu.matmul %210, %245, %cst_117 {dimension_numbers = #tpu.dot_dimension_numbers<[1], [1], [0], [0], [0, 0, 1, 0], [], []>} : vector<4x32xf32>, vector<4x32xf32>, vector<4x4xf32> -> vector<4x4xf32>
    %293 = vector.broadcast %152 : f32 to vector<4x4xf32>
    %294 = arith.mulf %292, %293 : vector<4x4xf32>
    %cst_118 = arith.constant dense<0.000000e+00> : vector<4x4xf32>
    %295 = tpu.matmul %291, %210, %cst_118 {dimension_numbers = #tpu.dot_dimension_numbers<[1], [1], [0], [0], [0, 0, 1, 0], [], []>} : vector<4x32xf32>, vector<4x32xf32>, vector<4x4xf32> -> vector<4x4xf32>
    %296 = vector.broadcast %153 : f32 to vector<4x4xf32>
    %297 = arith.mulf %295, %296 : vector<4x4xf32>
    %cst_119 = arith.constant dense<0.000000e+00> : vector<4x4xf32>
    %298 = tpu.matmul %291, %245, %cst_119 {dimension_numbers = #tpu.dot_dimension_numbers<[1], [1], [0], [0], [0, 0, 1, 0], [], []>} : vector<4x32xf32>, vector<4x32xf32>, vector<4x4xf32> -> vector<4x4xf32>
    %299 = vector.broadcast %154 : f32 to vector<4x4xf32>
    %300 = arith.mulf %298, %299 : vector<4x4xf32>
    %301 = tpu.iota {dimensions = array<i32: 0>} : vector<4x4xi32>
    %302 = tpu.iota {dimensions = array<i32: 1>} : vector<4x4xi32>
    %303 = arith.cmpi eq, %301, %302 : vector<4x4xi32>
    %304 = arith.extui %303 : vector<4x4xi1> to vector<4x4xi32>
    %305 = arith.sitofp %304 : vector<4x4xi32> to vector<4x4xf32>
    %306 = arith.mulf %294, %305 : vector<4x4xf32>
    %cst_120 = arith.constant dense<0.000000e+00> : vector<4xf32>
    %307 = vector.multi_reduction <add>, %306, %cst_120 [1] : vector<4x4xf32> to vector<4xf32>
    %308 = vector.shape_cast %307 : vector<4xf32> to vector<4x1xf32>
    %cst_121 = arith.constant dense<0xFF800000> : vector<4xf32>
    %309 = vector.multi_reduction <maximumf>, %294, %cst_121 [1] : vector<4x4xf32> to vector<4xf32>
    %310 = vector.shape_cast %309 : vector<4xf32> to vector<4x1xf32>
    %311 = vector.broadcast %310 : vector<4x1xf32> to vector<4x4xf32>
    %312 = arith.subf %294, %311 : vector<4x4xf32>
    %313 = math.exp %312 : vector<4x4xf32>
    %cst_122 = arith.constant dense<0.000000e+00> : vector<4xf32>
    %314 = vector.multi_reduction <add>, %313, %cst_122 [1] : vector<4x4xf32> to vector<4xf32>
    %315 = vector.shape_cast %314 : vector<4xf32> to vector<4x1xf32>
    %316 = math.log %315 : vector<4x1xf32>
    %317 = arith.addf %310, %316 : vector<4x1xf32>
    %318 = arith.subf %317, %308 : vector<4x1xf32>
    %319 = vector.shape_cast %318 : vector<4x1xf32> to vector<1x4x1xf32>
    %cst_123 = arith.constant dense<0.000000e+00> : vector<1xf32>
    %320 = vector.multi_reduction <add>, %319, %cst_123 [1, 2] : vector<1x4x1xf32> to vector<1xf32>
    %321 = vector.shape_cast %320 : vector<1xf32> to vector<1x1x1xf32>
    %322 = vector.extract %321[0, 0, 0] : f32 from vector<1x1x1xf32>
    %cst_124 = arith.constant 4.000000e+00 : f32
    %323 = arith.divf %322, %cst_124 : f32
    %324 = arith.mulf %294, %305 : vector<4x4xf32>
    %cst_125 = arith.constant dense<0.000000e+00> : vector<4xf32>
    %325 = vector.multi_reduction <add>, %324, %cst_125 [0] : vector<4x4xf32> to vector<4xf32>
    %326 = vector.shape_cast %325 : vector<4xf32> to vector<1x4xf32>
    %cst_126 = arith.constant dense<0xFF800000> : vector<4xf32>
    %327 = vector.multi_reduction <maximumf>, %294, %cst_126 [0] : vector<4x4xf32> to vector<4xf32>
    %328 = vector.shape_cast %327 : vector<4xf32> to vector<1x4xf32>
    %329 = vector.broadcast %328 : vector<1x4xf32> to vector<4x4xf32>
    %330 = arith.subf %294, %329 : vector<4x4xf32>
    %331 = math.exp %330 : vector<4x4xf32>
    %cst_127 = arith.constant dense<0.000000e+00> : vector<4xf32>
    %332 = vector.multi_reduction <add>, %331, %cst_127 [0] : vector<4x4xf32> to vector<4xf32>
    %333 = vector.shape_cast %332 : vector<4xf32> to vector<1x4xf32>
    %334 = math.log %333 : vector<1x4xf32>
    %335 = arith.addf %328, %334 : vector<1x4xf32>
    %336 = arith.subf %335, %326 : vector<1x4xf32>
    %337 = vector.shape_cast %336 : vector<1x4xf32> to vector<1x1x4xf32>
    %cst_128 = arith.constant dense<0.000000e+00> : vector<1xf32>
    %338 = vector.multi_reduction <add>, %337, %cst_128 [1, 2] : vector<1x1x4xf32> to vector<1xf32>
    %339 = vector.shape_cast %338 : vector<1xf32> to vector<1x1x1xf32>
    %340 = vector.extract %339[0, 0, 0] : f32 from vector<1x1x1xf32>
    %cst_129 = arith.constant 4.000000e+00 : f32
    %341 = arith.divf %340, %cst_129 : f32
    %342 = arith.addf %323, %341 : f32
    %cst_130 = arith.constant 5.000000e-01 : f32
    %343 = arith.mulf %342, %cst_130 : f32
    %344 = tpu.iota {dimensions = array<i32: 0>} : vector<4x4xi32>
    %345 = tpu.iota {dimensions = array<i32: 1>} : vector<4x4xi32>
    %346 = arith.cmpi eq, %344, %345 : vector<4x4xi32>
    %347 = arith.extui %346 : vector<4x4xi1> to vector<4x4xi32>
    %348 = arith.sitofp %347 : vector<4x4xi32> to vector<4x4xf32>
    %349 = arith.mulf %297, %348 : vector<4x4xf32>
    %cst_131 = arith.constant dense<0.000000e+00> : vector<4xf32>
    %350 = vector.multi_reduction <add>, %349, %cst_131 [1] : vector<4x4xf32> to vector<4xf32>
    %351 = vector.shape_cast %350 : vector<4xf32> to vector<4x1xf32>
    %cst_132 = arith.constant dense<0xFF800000> : vector<4xf32>
    %352 = vector.multi_reduction <maximumf>, %297, %cst_132 [1] : vector<4x4xf32> to vector<4xf32>
    %353 = vector.shape_cast %352 : vector<4xf32> to vector<4x1xf32>
    %354 = vector.broadcast %353 : vector<4x1xf32> to vector<4x4xf32>
    %355 = arith.subf %297, %354 : vector<4x4xf32>
    %356 = math.exp %355 : vector<4x4xf32>
    %cst_133 = arith.constant dense<0.000000e+00> : vector<4xf32>
    %357 = vector.multi_reduction <add>, %356, %cst_133 [1] : vector<4x4xf32> to vector<4xf32>
    %358 = vector.shape_cast %357 : vector<4xf32> to vector<4x1xf32>
    %359 = math.log %358 : vector<4x1xf32>
    %360 = arith.addf %353, %359 : vector<4x1xf32>
    %361 = arith.subf %360, %351 : vector<4x1xf32>
    %362 = vector.shape_cast %361 : vector<4x1xf32> to vector<1x4x1xf32>
    %cst_134 = arith.constant dense<0.000000e+00> : vector<1xf32>
    %363 = vector.multi_reduction <add>, %362, %cst_134 [1, 2] : vector<1x4x1xf32> to vector<1xf32>
    %364 = vector.shape_cast %363 : vector<1xf32> to vector<1x1x1xf32>
    %365 = vector.extract %364[0, 0, 0] : f32 from vector<1x1x1xf32>
    %cst_135 = arith.constant 4.000000e+00 : f32
    %366 = arith.divf %365, %cst_135 : f32
    %367 = arith.mulf %297, %348 : vector<4x4xf32>
    %cst_136 = arith.constant dense<0.000000e+00> : vector<4xf32>
    %368 = vector.multi_reduction <add>, %367, %cst_136 [0] : vector<4x4xf32> to vector<4xf32>
    %369 = vector.shape_cast %368 : vector<4xf32> to vector<1x4xf32>
    %cst_137 = arith.constant dense<0xFF800000> : vector<4xf32>
    %370 = vector.multi_reduction <maximumf>, %297, %cst_137 [0] : vector<4x4xf32> to vector<4xf32>
    %371 = vector.shape_cast %370 : vector<4xf32> to vector<1x4xf32>
    %372 = vector.broadcast %371 : vector<1x4xf32> to vector<4x4xf32>
    %373 = arith.subf %297, %372 : vector<4x4xf32>
    %374 = math.exp %373 : vector<4x4xf32>
    %cst_138 = arith.constant dense<0.000000e+00> : vector<4xf32>
    %375 = vector.multi_reduction <add>, %374, %cst_138 [0] : vector<4x4xf32> to vector<4xf32>
    %376 = vector.shape_cast %375 : vector<4xf32> to vector<1x4xf32>
    %377 = math.log %376 : vector<1x4xf32>
    %378 = arith.addf %371, %377 : vector<1x4xf32>
    %379 = arith.subf %378, %369 : vector<1x4xf32>
    %380 = vector.shape_cast %379 : vector<1x4xf32> to vector<1x1x4xf32>
    %cst_139 = arith.constant dense<0.000000e+00> : vector<1xf32>
    %381 = vector.multi_reduction <add>, %380, %cst_139 [1, 2] : vector<1x1x4xf32> to vector<1xf32>
    %382 = vector.shape_cast %381 : vector<1xf32> to vector<1x1x1xf32>
    %383 = vector.extract %382[0, 0, 0] : f32 from vector<1x1x1xf32>
    %cst_140 = arith.constant 4.000000e+00 : f32
    %384 = arith.divf %383, %cst_140 : f32
    %385 = arith.addf %366, %384 : f32
    %cst_141 = arith.constant 5.000000e-01 : f32
    %386 = arith.mulf %385, %cst_141 : f32
    %387 = arith.addf %343, %386 : f32
    %388 = tpu.iota {dimensions = array<i32: 0>} : vector<4x4xi32>
    %389 = tpu.iota {dimensions = array<i32: 1>} : vector<4x4xi32>
    %390 = arith.cmpi eq, %388, %389 : vector<4x4xi32>
    %391 = arith.extui %390 : vector<4x4xi1> to vector<4x4xi32>
    %392 = arith.sitofp %391 : vector<4x4xi32> to vector<4x4xf32>
    %393 = arith.mulf %300, %392 : vector<4x4xf32>
    %cst_142 = arith.constant dense<0.000000e+00> : vector<4xf32>
    %394 = vector.multi_reduction <add>, %393, %cst_142 [1] : vector<4x4xf32> to vector<4xf32>
    %395 = vector.shape_cast %394 : vector<4xf32> to vector<4x1xf32>
    %cst_143 = arith.constant dense<0xFF800000> : vector<4xf32>
    %396 = vector.multi_reduction <maximumf>, %300, %cst_143 [1] : vector<4x4xf32> to vector<4xf32>
    %397 = vector.shape_cast %396 : vector<4xf32> to vector<4x1xf32>
    %398 = vector.broadcast %397 : vector<4x1xf32> to vector<4x4xf32>
    %399 = arith.subf %300, %398 : vector<4x4xf32>
    %400 = math.exp %399 : vector<4x4xf32>
    %cst_144 = arith.constant dense<0.000000e+00> : vector<4xf32>
    %401 = vector.multi_reduction <add>, %400, %cst_144 [1] : vector<4x4xf32> to vector<4xf32>
    %402 = vector.shape_cast %401 : vector<4xf32> to vector<4x1xf32>
    %403 = math.log %402 : vector<4x1xf32>
    %404 = arith.addf %397, %403 : vector<4x1xf32>
    %405 = arith.subf %404, %395 : vector<4x1xf32>
    %406 = vector.shape_cast %405 : vector<4x1xf32> to vector<1x4x1xf32>
    %cst_145 = arith.constant dense<0.000000e+00> : vector<1xf32>
    %407 = vector.multi_reduction <add>, %406, %cst_145 [1, 2] : vector<1x4x1xf32> to vector<1xf32>
    %408 = vector.shape_cast %407 : vector<1xf32> to vector<1x1x1xf32>
    %409 = vector.extract %408[0, 0, 0] : f32 from vector<1x1x1xf32>
    %cst_146 = arith.constant 4.000000e+00 : f32
    %410 = arith.divf %409, %cst_146 : f32
    %411 = arith.mulf %300, %392 : vector<4x4xf32>
    %cst_147 = arith.constant dense<0.000000e+00> : vector<4xf32>
    %412 = vector.multi_reduction <add>, %411, %cst_147 [0] : vector<4x4xf32> to vector<4xf32>
    %413 = vector.shape_cast %412 : vector<4xf32> to vector<1x4xf32>
    %cst_148 = arith.constant dense<0xFF800000> : vector<4xf32>
    %414 = vector.multi_reduction <maximumf>, %300, %cst_148 [0] : vector<4x4xf32> to vector<4xf32>
    %415 = vector.shape_cast %414 : vector<4xf32> to vector<1x4xf32>
    %416 = vector.broadcast %415 : vector<1x4xf32> to vector<4x4xf32>
    %417 = arith.subf %300, %416 : vector<4x4xf32>
    %418 = math.exp %417 : vector<4x4xf32>
    %cst_149 = arith.constant dense<0.000000e+00> : vector<4xf32>
    %419 = vector.multi_reduction <add>, %418, %cst_149 [0] : vector<4x4xf32> to vector<4xf32>
    %420 = vector.shape_cast %419 : vector<4xf32> to vector<1x4xf32>
    %421 = math.log %420 : vector<1x4xf32>
    %422 = arith.addf %415, %421 : vector<1x4xf32>
    %423 = arith.subf %422, %413 : vector<1x4xf32>
    %424 = vector.shape_cast %423 : vector<1x4xf32> to vector<1x1x4xf32>
    %cst_150 = arith.constant dense<0.000000e+00> : vector<1xf32>
    %425 = vector.multi_reduction <add>, %424, %cst_150 [1, 2] : vector<1x1x4xf32> to vector<1xf32>
    %426 = vector.shape_cast %425 : vector<1xf32> to vector<1x1x1xf32>
    %427 = vector.extract %426[0, 0, 0] : f32 from vector<1x1x1xf32>
    %cst_151 = arith.constant 4.000000e+00 : f32
    %428 = arith.divf %427, %cst_151 : f32
    %429 = arith.addf %410, %428 : f32
    %cst_152 = arith.constant 5.000000e-01 : f32
    %430 = arith.mulf %429, %cst_152 : f32
    %431 = arith.addf %387, %430 : f32
    %cst_153 = arith.constant 3.000000e+00 : f32
    %432 = arith.divf %431, %cst_153 : f32
    %c0_154 = arith.constant 0 : index
    %c0_155 = arith.constant 0 : index
    %433 = vector.load %arg34[%c0_154, %c0_155] : memref<4x32xf32, #tpu.memory_space<vmem>>, vector<4x32xf32>
    tpu.vector_store %arg34[%c0_154, %c0_155], %210 {strides = array<i32>} : memref<4x32xf32, #tpu.memory_space<vmem>>, vector<4x32xf32>,
    %c0_156 = arith.constant 0 : index
    %c0_157 = arith.constant 0 : index
    %434 = vector.load %arg35[%c0_156, %c0_157] : memref<4x32xf32, #tpu.memory_space<vmem>>, vector<4x32xf32>
    tpu.vector_store %arg35[%c0_156, %c0_157], %245 {strides = array<i32>} : memref<4x32xf32, #tpu.memory_space<vmem>>, vector<4x32xf32>,
    %c0_158 = arith.constant 0 : index
    %c0_159 = arith.constant 0 : index
    %435 = vector.load %arg36[%c0_158, %c0_159] : memref<4x32xf32, #tpu.memory_space<vmem>>, vector<4x32xf32>
    tpu.vector_store %arg36[%c0_158, %c0_159], %291 {strides = array<i32>} : memref<4x32xf32, #tpu.memory_space<vmem>>, vector<4x32xf32>,
    %c0_160 = arith.constant 0 : index
    %c0_161 = arith.constant 0 : index
    %436 = memref.load %arg37[%c0_160, %c0_161] : memref<1x1xf32, #tpu.memory_space<smem>>
    memref.store %432, %arg37[%c0_160, %c0_161] : memref<1x1xf32, #tpu.memory_space<smem>>
    return
  }
  func.func @transform_0(%arg0: i32) -> (i32, i32) {
    %c0_i32 = arith.constant 0 : i32
    %c0_i32_0 = arith.constant 0 : i32
    %c0_i32_1 = arith.constant 0 : i32
    return %c0_i32, %c0_i32_0 : i32, i32
  }
  func.func @transform_1(%arg0: i32) -> (i32, i32) {
    %c0_i32 = arith.constant 0 : i32
    %c0_i32_0 = arith.constant 0 : i32
    %c0_i32_1 = arith.constant 0 : i32
    return %c0_i32, %c0_i32_0 : i32, i32
  }
  func.func @transform_2(%arg0: i32) -> (i32, i32) {
    %c0_i32 = arith.constant 0 : i32
    %c0_i32_0 = arith.constant 0 : i32
    %c0_i32_1 = arith.constant 0 : i32
    return %c0_i32, %c0_i32_0 : i32, i32
  }
  func.func @transform_3(%arg0: i32) -> (i32, i32) {
    %c0_i32 = arith.constant 0 : i32
    %c0_i32_0 = arith.constant 0 : i32
    %c0_i32_1 = arith.constant 0 : i32
    return %c0_i32, %c0_i32_0 : i32, i32
  }
  func.func @transform_4(%arg0: i32) -> (i32, i32) {
    %c0_i32 = arith.constant 0 : i32
    %c0_i32_0 = arith.constant 0 : i32
    %c0_i32_1 = arith.constant 0 : i32
    return %c0_i32, %c0_i32_0 : i32, i32
  }
  func.func @transform_5(%arg0: i32) -> (i32, i32) {
    %c0_i32 = arith.constant 0 : i32
    %c0_i32_0 = arith.constant 0 : i32
    %c0_i32_1 = arith.constant 0 : i32
    return %c0_i32, %c0_i32_0 : i32, i32
  }
  func.func @transform_6(%arg0: i32) -> (i32, i32) {
    %c0_i32 = arith.constant 0 : i32
    %c0_i32_0 = arith.constant 0 : i32
    %c0_i32_1 = arith.constant 0 : i32
    return %c0_i32, %c0_i32_0 : i32, i32
  }
  func.func @transform_7(%arg0: i32) -> (i32, i32) {
    %c0_i32 = arith.constant 0 : i32
    %c0_i32_0 = arith.constant 0 : i32
    %c0_i32_1 = arith.constant 0 : i32
    return %c0_i32, %c0_i32_0 : i32, i32
  }
  func.func @transform_8(%arg0: i32) -> (i32, i32) {
    %c0_i32 = arith.constant 0 : i32
    %c0_i32_0 = arith.constant 0 : i32
    %c0_i32_1 = arith.constant 0 : i32
    return %c0_i32, %c0_i32_0 : i32, i32
  }
  func.func @transform_9(%arg0: i32) -> (i32, i32) {
    %c0_i32 = arith.constant 0 : i32
    %c0_i32_0 = arith.constant 0 : i32
    %c0_i32_1 = arith.constant 0 : i32
    return %c0_i32, %c0_i32_0 : i32, i32
  }
  func.func @transform_10(%arg0: i32) -> (i32, i32) {
    %c0_i32 = arith.constant 0 : i32
    %c0_i32_0 = arith.constant 0 : i32
    %c0_i32_1 = arith.constant 0 : i32
    return %c0_i32, %c0_i32_0 : i32, i32
  }
  func.func @transform_11(%arg0: i32) -> (i32, i32) {
    %c0_i32 = arith.constant 0 : i32
    %c0_i32_0 = arith.constant 0 : i32
    %c0_i32_1 = arith.constant 0 : i32
    return %c0_i32, %c0_i32_0 : i32, i32
  }
  func.func @transform_12(%arg0: i32) -> (i32, i32) {
    %c0_i32 = arith.constant 0 : i32
    %c0_i32_0 = arith.constant 0 : i32
    %c0_i32_1 = arith.constant 0 : i32
    return %c0_i32, %c0_i32_0 : i32, i32
  }
  func.func @transform_13(%arg0: i32) -> (i32, i32, i32) {
    %c0_i32 = arith.constant 0 : i32
    %c0_i32_0 = arith.constant 0 : i32
    %c0_i32_1 = arith.constant 0 : i32
    %c0_i32_2 = arith.constant 0 : i32
    return %c0_i32, %c0_i32_0, %c0_i32_1 : i32, i32, i32
  }
  func.func @transform_14(%arg0: i32) -> (i32, i32) {
    %c0_i32 = arith.constant 0 : i32
    %c0_i32_0 = arith.constant 0 : i32
    %c0_i32_1 = arith.constant 0 : i32
    return %c0_i32, %c0_i32_0 : i32, i32
  }
  func.func @transform_15(%arg0: i32) -> (i32, i32) {
    %c0_i32 = arith.constant 0 : i32
    %c0_i32_0 = arith.constant 0 : i32
    %c0_i32_1 = arith.constant 0 : i32
    return %c0_i32, %c0_i32_0 : i32, i32
  }
  func.func @transform_16(%arg0: i32) -> (i32, i32) {
    %c0_i32 = arith.constant 0 : i32
    %c0_i32_0 = arith.constant 0 : i32
    %c0_i32_1 = arith.constant 0 : i32
    return %c0_i32, %c0_i32_0 : i32, i32
  }
  func.func @transform_17(%arg0: i32) -> (i32, i32) {
    %c0_i32 = arith.constant 0 : i32
    %c0_i32_0 = arith.constant 0 : i32
    %c0_i32_1 = arith.constant 0 : i32
    return %c0_i32, %c0_i32_0 : i32, i32
  }
  func.func @transform_18(%arg0: i32) -> (i32, i32) {
    %c0_i32 = arith.constant 0 : i32
    %c0_i32_0 = arith.constant 0 : i32
    %c0_i32_1 = arith.constant 0 : i32
    return %c0_i32, %c0_i32_0 : i32, i32
  }
  func.func @transform_19(%arg0: i32) -> (i32, i32) {
    %c0_i32 = arith.constant 0 : i32
    %c0_i32_0 = arith.constant 0 : i32
    %c0_i32_1 = arith.constant 0 : i32
    return %c0_i32, %c0_i32_0 : i32, i32
  }
  func.func @transform_20(%arg0: i32) -> (i32, i32) {
    %c0_i32 = arith.constant 0 : i32
    %c0_i32_0 = arith.constant 0 : i32
    %c0_i32_1 = arith.constant 0 : i32
    return %c0_i32, %c0_i32_0 : i32, i32
  }
  func.func @transform_21(%arg0: i32) -> (i32, i32) {
    %c0_i32 = arith.constant 0 : i32
    %c0_i32_0 = arith.constant 0 : i32
    %c0_i32_1 = arith.constant 0 : i32
    return %c0_i32, %c0_i32_0 : i32, i32
  }
  func.func @transform_22(%arg0: i32) -> (i32, i32) {
    %c0_i32 = arith.constant 0 : i32
    %c0_i32_0 = arith.constant 0 : i32
    %c0_i32_1 = arith.constant 0 : i32
    return %c0_i32, %c0_i32_0 : i32, i32
  }
  func.func @transform_23(%arg0: i32) -> (i32, i32) {
    %c0_i32 = arith.constant 0 : i32
    %c0_i32_0 = arith.constant 0 : i32
    %c0_i32_1 = arith.constant 0 : i32
    return %c0_i32, %c0_i32_0 : i32, i32
  }
  func.func @transform_24(%arg0: i32) -> (i32, i32) {
    %c0_i32 = arith.constant 0 : i32
    %c0_i32_0 = arith.constant 0 : i32
    %c0_i32_1 = arith.constant 0 : i32
    return %c0_i32, %c0_i32_0 : i32, i32
  }
  func.func @transform_25(%arg0: i32) -> (i32, i32) {
    %c0_i32 = arith.constant 0 : i32
    %c0_i32_0 = arith.constant 0 : i32
    %c0_i32_1 = arith.constant 0 : i32
    return %c0_i32, %c0_i32_0 : i32, i32
  }
  func.func @transform_26(%arg0: i32) -> (i32, i32) {
    %c0_i32 = arith.constant 0 : i32
    %c0_i32_0 = arith.constant 0 : i32
    %c0_i32_1 = arith.constant 0 : i32
    return %c0_i32, %c0_i32_0 : i32, i32
  }
  func.func @transform_27(%arg0: i32) -> (i32, i32) {
    %c0_i32 = arith.constant 0 : i32
    %c0_i32_0 = arith.constant 0 : i32
    %c0_i32_1 = arith.constant 0 : i32
    return %c0_i32, %c0_i32_0 : i32, i32
  }
  func.func @transform_28(%arg0: i32) -> (i32, i32) {
    %c0_i32 = arith.constant 0 : i32
    %c0_i32_0 = arith.constant 0 : i32
    %c0_i32_1 = arith.constant 0 : i32
    return %c0_i32, %c0_i32_0 : i32, i32
  }
  func.func @transform_29(%arg0: i32) -> (i32, i32) {
    %c0_i32 = arith.constant 0 : i32
    %c0_i32_0 = arith.constant 0 : i32
    %c0_i32_1 = arith.constant 0 : i32
    return %c0_i32, %c0_i32_0 : i32, i32
  }
  func.func @transform_30(%arg0: i32) -> (i32, i32) {
    %c0_i32 = arith.constant 0 : i32
    %c0_i32_0 = arith.constant 0 : i32
    %c0_i32_1 = arith.constant 0 : i32
    return %c0_i32, %c0_i32_0 : i32, i32
  }
  func.func @transform_31(%arg0: i32) -> (i32, i32) {
    %c0_i32 = arith.constant 0 : i32
    %c0_i32_0 = arith.constant 0 : i32
    %c0_i32_1 = arith.constant 0 : i32
    return %c0_i32, %c0_i32_0 : i32, i32
  }
  func.func @transform_32(%arg0: i32) -> i32 {
    %c0_i32 = arith.constant 0 : i32
    %c0_i32_0 = arith.constant 0 : i32
    return %c0_i32 : i32
  }
  func.func @transform_33(%arg0: i32) -> (i32, i32) {
    %c0_i32 = arith.constant 0 : i32
    %c0_i32_0 = arith.constant 0 : i32
    %c0_i32_1 = arith.constant 0 : i32
    return %c0_i32, %c0_i32_0 : i32, i32
  }
  func.func @transform_34(%arg0: i32) -> (i32, i32) {
    %c0_i32 = arith.constant 0 : i32
    %c0_i32_0 = arith.constant 0 : i32
    %c0_i32_1 = arith.constant 0 : i32
    return %c0_i32, %c0_i32_0 : i32, i32
  }
  func.func @transform_35(%arg0: i32) -> (i32, i32) {
    %c0_i32 = arith.constant 0 : i32
    %c0_i32_0 = arith.constant 0 : i32
    %c0_i32_1 = arith.constant 0 : i32
    return %c0_i32, %c0_i32_0 : i32, i32
  }
  func.func @transform_36(%arg0: i32) -> (i32, i32) {
    %c0_i32 = arith.constant 0 : i32
    %c0_i32_0 = arith.constant 0 : i32
    %c0_i32_1 = arith.constant 0 : i32
    return %c0_i32, %c0_i32_0 : i32, i32
  }
}

</mosaic_0001>

<llo_original>
// kernel: tigr_forward.1
$region0: #{tigr_forward.1}
  #allocation0 [shape = 'u32[]', space=smem, size = 0x4, offset = 0x4, fixed_abs, tag = 'smem constant byte address 0x4 - core index']
  #allocation1 [shape = 'u32[72,128]{1,0:T(1,128)}', space=vmem, size = 0x9000, scoped, tag = 'internal scratch']
  %s0 = inlined_call_operand.smem [shape: u32[37], index: -1, kind: input, shape index: {}]
  %s1 = sld [smem:[%s0]]
  %s2 = scalar_lea.smem %s0, 1
  %s3 = sld [smem:[%s2]]
  %s4 = scalar_lea.smem %s0, 2
  %s5 = sld [smem:[%s4]]
  %s6 = scalar_lea.smem %s0, 3
  %s7 = sld [smem:[%s6]]
  %s8 = scalar_lea.smem %s0, 4
  %s9 = sld [smem:[%s8]]
  %s10 = scalar_lea.smem %s0, 5
  %s11 = sld [smem:[%s10]]
  %s12 = scalar_lea.smem %s0, 6
  %s13 = sld [smem:[%s12]]
  %s14 = scalar_lea.smem %s0, 7
  %s15 = sld [smem:[%s14]]
  %s16 = scalar_lea.smem %s0, 8
  %s17 = sld [smem:[%s16]]
  %s18 = scalar_lea.smem %s0, 9
  %s19 = sld [smem:[%s18]]
  %s20 = scalar_lea.smem %s0, 10
  %s21 = sld [smem:[%s20]]
  %s22 = scalar_lea.smem %s0, 11
  %s23 = sld [smem:[%s22]]
  %s24 = scalar_lea.smem %s0, 12
  %s25 = sld [smem:[%s24]]
  %s26 = scalar_lea.smem %s0, 13
  %s27 = sld [smem:[%s26]]
  %s28 = scalar_lea.smem %s0, 14
  %s29 = sld [smem:[%s28]]
  %s30 = scalar_lea.smem %s0, 15
  %s31 = sld [smem:[%s30]]
  %s32 = scalar_lea.smem %s0, 16
  %s33 = sld [smem:[%s32]]
  %s34 = scalar_lea.smem %s0, 17
  %s35 = sld [smem:[%s34]]
  %s36 = scalar_lea.smem %s0, 18
  %s37 = sld [smem:[%s36]]
  %s38 = scalar_lea.smem %s0, 19
  %s39 = sld [smem:[%s38]]
  %s40 = scalar_lea.smem %s0, 20
  %s41 = sld [smem:[%s40]]
  %s42 = scalar_lea.smem %s0, 21
  %s43 = sld [smem:[%s42]]
  %s44 = scalar_lea.smem %s0, 22
  %s45 = sld [smem:[%s44]]
  %s46 = scalar_lea.smem %s0, 23
  %s47 = sld [smem:[%s46]]
  %s48 = scalar_lea.smem %s0, 24
  %s49 = sld [smem:[%s48]]
  %s50 = scalar_lea.smem %s0, 25
  %s51 = sld [smem:[%s50]]
  %s52 = scalar_lea.smem %s0, 26
  %s53 = sld [smem:[%s52]]
  %s54 = scalar_lea.smem %s0, 27
  %s55 = sld [smem:[%s54]]
  %s56 = scalar_lea.smem %s0, 28
  %s57 = sld [smem:[%s56]]
  %s58 = scalar_lea.smem %s0, 29
  %s59 = sld [smem:[%s58]]
  %s60 = scalar_lea.smem %s0, 30
  %s61 = sld [smem:[%s60]]
  %s62 = scalar_lea.smem %s0, 31
  %s63 = sld [smem:[%s62]]
  %s64 = scalar_lea.smem %s0, 32
  %s65 = sld [smem:[%s64]]
  %s66 = scalar_lea.smem %s0, 33
  %s67 = sld [smem:[%s66]]
  %s68 = scalar_lea.smem %s0, 34
  %s69 = sld [smem:[%s68]]
  %s70 = scalar_lea.smem %s0, 35
  %s71 = sld [smem:[%s70]]
  %s72 = scalar_lea.smem %s0, 36
  %s73 = sld [smem:[%s72]]
  %74 = xla_tuple %s67, %s69, %s71, %s73
  %s75 = sld [smem:[#allocation0]]
  $region182: #{tigr_forward.1} parent=0
    _
  %s77 = ssub.s32 1, %s75
  %s78 = scalar_select 0, %s77, %s75
  $region1: #{tigr_forward.1} parent=0
    #allocation2 [shape = 'u8[512]{0}', space=vmem, size = 0x400, scoped, tag = 'input window, operand 25, single buffered']
    #allocation3 [shape = 's32[1]{0}', space=sflag, size = 0x4, scoped, tag = 'scoped memory for tigr_forward.1']
    #allocation4 [shape = 's32[1]{0}', space=sflag, size = 0x4, scoped, tag = 'scoped memory for tigr_forward.1']
    #allocation5 [shape = 's32[1]{0}', space=sflag, size = 0x4, scoped, tag = 'scoped memory for tigr_forward.1']
    #allocation6 [shape = 's32[1]{0}', space=sflag, size = 0x4, scoped, tag = 'scoped memory for tigr_forward.1']
    #allocation7 [shape = 'u8[512]{0}', space=vmem, size = 0x400, scoped, tag = 'input window, operand 27, single buffered']
    #allocation8 [shape = 's32[1]{0}', space=sflag, size = 0x4, scoped, tag = 'scoped memory for tigr_forward.1']
    #allocation9 [shape = 'u8[512]{0}', space=vmem, size = 0x400, scoped, tag = 'input window, operand 30, single buffered']
    #allocation10 [shape = 'u8[512]{0}', space=smem, size = 0x200, scoped, tag = 'input window, operand 32, single buffered']
    #allocation11 [shape = 'u8[2048]{0}', space=vmem, size = 0x800, scoped, tag = 'output window, operand 0, single buffered']
    #allocation12 [shape = 'u8[2048]{0}', space=vmem, size = 0x800, scoped, tag = 'output window, operand 1, single buffered']
    #allocation13 [shape = 's32[1]{0}', space=sflag, size = 0x4, scoped, tag = 'scoped memory for tigr_forward.1']
    #allocation14 [shape = 'u8[2048]{0}', space=vmem, size = 0x800, scoped, tag = 'output window, operand 2, single buffered']
    #allocation15 [shape = 'u8[512]{0}', space=smem, size = 0x200, scoped, tag = 'output window, operand 3, single buffered']
    %79 = vsyncpa [#allocation3], 0
    %80 = vsyncpa [#allocation8], 0
    %81 = vsyncpa [#allocation6], 0
    %82 = vsyncpa [#allocation4], 0
    %83 = vsyncpa [#allocation13], 0
    %84 = vsyncpa [#allocation5], 0
    // Predicated region
    $region2: #{tigr_forward.1} parent=1 // pred_check
      _
    $region3: #{tigr_forward.1} parent=1 // pred_check_branch
      %86 = sbr.rel (0) target = $region5
    $region4: #{tigr_forward.1} parent=1 // pred_region
      _
    $region5: #{tigr_forward.1} parent=1 // pred_fallthru
      _
    // Predicated region
    $region6: #{tigr_forward.1} parent=1 // pred_check
      _
    $region7: #{tigr_forward.1} parent=1 // pred_check_branch
      %88 = sbr.rel (0) target = $region9
    $region8: #{tigr_forward.1} parent=1 // pred_region
      _
    $region9: #{tigr_forward.1} parent=1 // pred_fallthru
      _
    // Predicated region
    $region10: #{tigr_forward.1} parent=1 // pred_check
      _
    $region11: #{tigr_forward.1} parent=1 // pred_check_branch
      %90 = sbr.rel (0) target = $region13
    $region12: #{tigr_forward.1} parent=1 // pred_region
      _
    $region13: #{tigr_forward.1} parent=1 // pred_fallthru
      _
    // Predicated region
    $region14: #{tigr_forward.1} parent=1 // pred_check
      _
    $region15: #{tigr_forward.1} parent=1 // pred_check_branch
      %92 = sbr.rel (0) target = $region17
    $region16: #{tigr_forward.1} parent=1 // pred_region
      _
    $region17: #{tigr_forward.1} parent=1 // pred_fallthru
      _
    // Predicated region
    $region18: #{tigr_forward.1} parent=1 // pred_check
      _
    $region19: #{tigr_forward.1} parent=1 // pred_check_branch
      %94 = sbr.rel (0) target = $region21
    $region20: #{tigr_forward.1} parent=1 // pred_region
      _
    $region21: #{tigr_forward.1} parent=1 // pred_fallthru
      _
    // Predicated region
    $region22: #{tigr_forward.1} parent=1 // pred_check
      _
    $region23: #{tigr_forward.1} parent=1 // pred_check_branch
      %96 = sbr.rel (0) target = $region25
    $region24: #{tigr_forward.1} parent=1 // pred_region
      _
    $region25: #{tigr_forward.1} parent=1 // pred_fallthru
      _
    // Predicated region
    $region26: #{tigr_forward.1} parent=1 // pred_check
      _
    $region27: #{tigr_forward.1} parent=1 // pred_check_branch
      %98 = sbr.rel (0) target = $region29
    $region28: #{tigr_forward.1} parent=1 // pred_region
      _
    $region29: #{tigr_forward.1} parent=1 // pred_fallthru
      _
    // Predicated region
    $region30: #{tigr_forward.1} parent=1 // pred_check
      _
    $region31: #{tigr_forward.1} parent=1 // pred_check_branch
      %100 = sbr.rel (0) target = $region33
    $region32: #{tigr_forward.1} parent=1 // pred_region
      _
    $region33: #{tigr_forward.1} parent=1 // pred_fallthru
      _
    // Predicated region
    $region34: #{tigr_forward.1} parent=1 // pred_check
      _
    $region35: #{tigr_forward.1} parent=1 // pred_check_branch
      %102 = sbr.rel (0) target = $region37
    $region36: #{tigr_forward.1} parent=1 // pred_region
      _
    $region37: #{tigr_forward.1} parent=1 // pred_fallthru
      _
    // Predicated region
    $region38: #{tigr_forward.1} parent=1 // pred_check
      _
    $region39: #{tigr_forward.1} parent=1 // pred_check_branch
      %104 = sbr.rel (0) target = $region41
    $region40: #{tigr_forward.1} parent=1 // pred_region
      _
    $region41: #{tigr_forward.1} parent=1 // pred_fallthru
      _
    // Predicated region
    $region42: #{tigr_forward.1} parent=1 // pred_check
      _
    $region43: #{tigr_forward.1} parent=1 // pred_check_branch
      %106 = sbr.rel (0) target = $region45
    $region44: #{tigr_forward.1} parent=1 // pred_region
      _
    $region45: #{tigr_forward.1} parent=1 // pred_fallthru
      _
    // Predicated region
    $region46: #{tigr_forward.1} parent=1 // pred_check
      _
    $region47: #{tigr_forward.1} parent=1 // pred_check_branch
      %108 = sbr.rel (0) target = $region49
    $region48: #{tigr_forward.1} parent=1 // pred_region
      _
    $region49: #{tigr_forward.1} parent=1 // pred_fallthru
      _
    // Predicated region
    $region50: #{tigr_forward.1} parent=1 // pred_check
      _
    $region51: #{tigr_forward.1} parent=1 // pred_check_branch
      %110 = sbr.rel (0) target = $region53
    $region52: #{tigr_forward.1} parent=1 // pred_region
      _
    $region53: #{tigr_forward.1} parent=1 // pred_fallthru
      _
    // Predicated region
    $region54: #{tigr_forward.1} parent=1 // pred_check
      _
    $region55: #{tigr_forward.1} parent=1 // pred_check_branch
      %112 = sbr.rel (0) target = $region57
    $region56: #{tigr_forward.1} parent=1 // pred_region
      _
    $region57: #{tigr_forward.1} parent=1 // pred_fallthru
      _
    // Predicated region
    $region58: #{tigr_forward.1} parent=1 // pred_check
      _
    $region59: #{tigr_forward.1} parent=1 // pred_check_branch
      %114 = sbr.rel (0) target = $region61
    $region60: #{tigr_forward.1} parent=1 // pred_region
      _
    $region61: #{tigr_forward.1} parent=1 // pred_fallthru
      _
    // Predicated region
    $region62: #{tigr_forward.1} parent=1 // pred_check
      _
    $region63: #{tigr_forward.1} parent=1 // pred_check_branch
      %116 = sbr.rel (0) target = $region65
    $region64: #{tigr_forward.1} parent=1 // pred_region
      _
    $region65: #{tigr_forward.1} parent=1 // pred_fallthru
      _
    // Predicated region
    $region66: #{tigr_forward.1} parent=1 // pred_check
      _
    $region67: #{tigr_forward.1} parent=1 // pred_check_branch
      %118 = sbr.rel (0) target = $region69
    $region68: #{tigr_forward.1} parent=1 // pred_region
      _
    $region69: #{tigr_forward.1} parent=1 // pred_fallthru
      _
    // Predicated region
    $region70: #{tigr_forward.1} parent=1 // pred_check
      _
    $region71: #{tigr_forward.1} parent=1 // pred_check_branch
      %120 = sbr.rel (0) target = $region73
    $region72: #{tigr_forward.1} parent=1 // pred_region
      _
    $region73: #{tigr_forward.1} parent=1 // pred_fallthru
      _
    // Predicated region
    $region74: #{tigr_forward.1} parent=1 // pred_check
      _
    $region75: #{tigr_forward.1} parent=1 // pred_check_branch
      %122 = sbr.rel (0) target = $region77
    $region76: #{tigr_forward.1} parent=1 // pred_region
      _
    $region77: #{tigr_forward.1} parent=1 // pred_fallthru
      _
    // Predicated region
    $region78: #{tigr_forward.1} parent=1 // pred_check
      _
    $region79: #{tigr_forward.1} parent=1 // pred_check_branch
      %124 = sbr.rel (0) target = $region81
    $region80: #{tigr_forward.1} parent=1 // pred_region
      _
    $region81: #{tigr_forward.1} parent=1 // pred_fallthru
      _
    // Predicated region
    $region82: #{tigr_forward.1} parent=1 // pred_check
      _
    $region83: #{tigr_forward.1} parent=1 // pred_check_branch
      %126 = sbr.rel (0) target = $region85
    $region84: #{tigr_forward.1} parent=1 // pred_region
      _
    $region85: #{tigr_forward.1} parent=1 // pred_fallthru
      _
    // Predicated region
    $region86: #{tigr_forward.1} parent=1 // pred_check
      _
    $region87: #{tigr_forward.1} parent=1 // pred_check_branch
      %128 = sbr.rel (0) target = $region89
    $region88: #{tigr_forward.1} parent=1 // pred_region
      _
    $region89: #{tigr_forward.1} parent=1 // pred_fallthru
      _
    // Predicated region
    $region90: #{tigr_forward.1} parent=1 // pred_check
      _
    $region91: #{tigr_forward.1} parent=1 // pred_check_branch
      %130 = sbr.rel (0) target = $region93
    $region92: #{tigr_forward.1} parent=1 // pred_region
      _
    $region93: #{tigr_forward.1} parent=1 // pred_fallthru
      _
    // Predicated region
    $region94: #{tigr_forward.1} parent=1 // pred_check
      _
    $region95: #{tigr_forward.1} parent=1 // pred_check_branch
      %132 = sbr.rel (0) target = $region97
    $region96: #{tigr_forward.1} parent=1 // pred_region
      _
    $region97: #{tigr_forward.1} parent=1 // pred_fallthru
      _
    // Predicated region
    $region98: #{tigr_forward.1} parent=1 // pred_check
      _
    $region99: #{tigr_forward.1} parent=1 // pred_check_branch
      %134 = sbr.rel (0) target = $region101
    $region100: #{tigr_forward.1} parent=1 // pred_region
      _
    $region101: #{tigr_forward.1} parent=1 // pred_fallthru
      _
    // Predicated region
    $region102: #{tigr_forward.1} parent=1 // pred_check
      _
    $region103: #{tigr_forward.1} parent=1 // pred_check_branch
      %136 = sbr.rel (0) target = $region105
    $region104: #{tigr_forward.1} parent=1 // pred_region
      %138 = vsyncadd [#allocation3], 0
      %s140 = sshll.u32 %s51, 4
      %s141 = int_to_ptr.hbm [resolvable:$true] %s140
      %s142 = sshll.u32 [#allocation2], 4
      %s143 = int_to_ptr.vmem [resolvable:$true] %s142
      %145 = dma.hbm_to_vmem [thread:$0]  %s141, 16, %s143, [#allocation3]
    $region105: #{tigr_forward.1} parent=1 // pred_fallthru
      _
    // Predicated region
    $region106: #{tigr_forward.1} parent=1 // pred_check
      _
    $region107: #{tigr_forward.1} parent=1 // pred_check_branch
      %147 = sbr.rel (0) target = $region109
    $region108: #{tigr_forward.1} parent=1 // pred_region
      _
    $region109: #{tigr_forward.1} parent=1 // pred_fallthru
      _
    // Predicated region
    $region110: #{tigr_forward.1} parent=1 // pred_check
      _
    $region111: #{tigr_forward.1} parent=1 // pred_check_branch
      %149 = sbr.rel (0) target = $region113
    $region112: #{tigr_forward.1} parent=1 // pred_region
      %151 = vsyncadd [#allocation8], 0
      %s153 = sshll.u32 %s55, 4
      %s154 = int_to_ptr.hbm [resolvable:$true] %s153
      %s155 = sshll.u32 [#allocation7], 4
      %s156 = int_to_ptr.vmem [resolvable:$true] %s155
      %158 = dma.hbm_to_vmem [thread:$0]  %s154, 16, %s156, [#allocation8]
    $region113: #{tigr_forward.1} parent=1 // pred_fallthru
      _
    // Predicated region
    $region114: #{tigr_forward.1} parent=1 // pred_check
      _
    $region115: #{tigr_forward.1} parent=1 // pred_check_branch
      %160 = sbr.rel (0) target = $region117
    $region116: #{tigr_forward.1} parent=1 // pred_region
      _
    $region117: #{tigr_forward.1} parent=1 // pred_fallthru
      _
    // Predicated region
    $region118: #{tigr_forward.1} parent=1 // pred_check
      _
    $region119: #{tigr_forward.1} parent=1 // pred_check_branch
      %162 = sbr.rel (0) target = $region121
    $region120: #{tigr_forward.1} parent=1 // pred_region
      _
    $region121: #{tigr_forward.1} parent=1 // pred_fallthru
      _
    // Predicated region
    $region122: #{tigr_forward.1} parent=1 // pred_check
      _
    $region123: #{tigr_forward.1} parent=1 // pred_check_branch
      %164 = sbr.rel (0) target = $region125
    $region124: #{tigr_forward.1} parent=1 // pred_region
      %166 = vsyncadd [#allocation8], 0
      %s168 = sshll.u32 %s61, 4
      %s169 = int_to_ptr.hbm [resolvable:$true] %s168
      %s170 = sshll.u32 [#allocation9], 4
      %s171 = int_to_ptr.vmem [resolvable:$true] %s170
      %173 = dma.hbm_to_vmem [thread:$0]  %s169, 16, %s171, [#allocation8]
    $region125: #{tigr_forward.1} parent=1 // pred_fallthru
      _
    // Predicated region
    $region126: #{tigr_forward.1} parent=1 // pred_check
      _
    $region127: #{tigr_forward.1} parent=1 // pred_check_branch
      %175 = sbr.rel (0) target = $region129
    $region128: #{tigr_forward.1} parent=1 // pred_region
      _
    $region129: #{tigr_forward.1} parent=1 // pred_fallthru
      _
    // Predicated region
    $region130: #{tigr_forward.1} parent=1 // pred_check
      _
    $region131: #{tigr_forward.1} parent=1 // pred_check_branch
      %177 = sbr.rel (0) target = $region133
    $region132: #{tigr_forward.1} parent=1 // pred_region
      %179 = vsyncadd [#allocation6], 0
      %s181 = sshll.u32 %s65, 4
      %s182 = int_to_ptr.vmem [resolvable:$true] %s181
      %184 = dma.vmem_to_smem %s182, 16, [#allocation10], [#allocation6]
    $region133: #{tigr_forward.1} parent=1 // pred_fallthru
      _
    // Predicated region
    $region134: #{tigr_forward.1} parent=1 // pred_check
      _
    $region135: #{tigr_forward.1} parent=1 // pred_check_branch
      %186 = sbr.rel (0) target = $region137
    $region136: #{tigr_forward.1} parent=1 // pred_region
      %188 = dma.done [#allocation3], 16
    $region137: #{tigr_forward.1} parent=1 // pred_fallthru
      _
    // Predicated region
    $region138: #{tigr_forward.1} parent=1 // pred_check
      _
    $region139: #{tigr_forward.1} parent=1 // pred_check_branch
      %190 = sbr.rel (0) target = $region141
    $region140: #{tigr_forward.1} parent=1 // pred_region
      %192 = dma.done [#allocation8], 16
    $region141: #{tigr_forward.1} parent=1 // pred_fallthru
      _
    // Predicated region
    $region142: #{tigr_forward.1} parent=1 // pred_check
      _
    $region143: #{tigr_forward.1} parent=1 // pred_check_branch
      %194 = sbr.rel (0) target = $region145
    $region144: #{tigr_forward.1} parent=1 // pred_region
      %196 = dma.done [#allocation8], 16
    $region145: #{tigr_forward.1} parent=1 // pred_fallthru
      _
    // Predicated region
    $region146: #{tigr_forward.1} parent=1 // pred_check
      _
    $region147: #{tigr_forward.1} parent=1 // pred_check_branch
      %198 = sbr.rel (0) target = $region149
    $region148: #{tigr_forward.1} parent=1 // pred_region
      %200 = dma.done [#allocation6], 16
    $region149: #{tigr_forward.1} parent=1 // pred_fallthru
      _
    %201 = sfence
    %v203 = vld [vmem:[%s1] sm:$0xff]
    %v204 = vld [vmem:[%s1 + $0x8] sm:$0xff]
    %v205 = vld [vmem:[%s3] sm:$0xff]
    %v206 = vld [vmem:[%s3 + $0x8] sm:$0xff]
    %v207 = vld [vmem:[%s5] sm:$0xf]
    %v208 = vld [vmem:[%s5 + $0x4] sm:$0xf]
    %v209 = vld [vmem:[%s5 + $0x8] sm:$0xf]
    %v210 = vld [vmem:[%s5 + $0xc] sm:$0xf]
    %v211 = vld [vmem:[%s5 + $0x10] sm:$0xf]
    %v212 = vld [vmem:[%s5 + $0x14] sm:$0xf]
    %v213 = vld [vmem:[%s5 + $0x18] sm:$0xf]
    %v214 = vld [vmem:[%s5 + $0x1c] sm:$0xf]
    %v215 = vld [vmem:[%s5 + $0x20] sm:$0xf]
    %v216 = vld [vmem:[%s5 + $0x24] sm:$0xf]
    %v217 = vld [vmem:[%s5 + $0x28] sm:$0xf]
    %v218 = vld [vmem:[%s5 + $0x2c] sm:$0xf]
    %v219 = vld [vmem:[%s5 + $0x30] sm:$0xf]
    %v220 = vld [vmem:[%s5 + $0x34] sm:$0xf]
    %v221 = vld [vmem:[%s5 + $0x38] sm:$0xf]
    %v222 = vld [vmem:[%s5 + $0x3c] sm:$0xf]
    %v223 = vld [vmem:[%s5 + $0x40] sm:$0xf]
    %v224 = vld [vmem:[%s5 + $0x44] sm:$0xf]
    %v225 = vld [vmem:[%s5 + $0x48] sm:$0xf]
    %v226 = vld [vmem:[%s5 + $0x4c] sm:$0xf]
    %v227 = vld [vmem:[%s5 + $0x50] sm:$0xf]
    %v228 = vld [vmem:[%s5 + $0x54] sm:$0xf]
    %v229 = vld [vmem:[%s5 + $0x58] sm:$0xf]
    %v230 = vld [vmem:[%s5 + $0x5c] sm:$0xf]
    %v231 = vld [vmem:[%s5 + $0x60] sm:$0xf]
    %v232 = vld [vmem:[%s5 + $0x64] sm:$0xf]
    %v233 = vld [vmem:[%s5 + $0x68] sm:$0xf]
    %v234 = vld [vmem:[%s5 + $0x6c] sm:$0xf]
    %v235 = vld [vmem:[%s5 + $0x70] sm:$0xf]
    %v236 = vld [vmem:[%s5 + $0x74] sm:$0xf]
    %v237 = vld [vmem:[%s5 + $0x78] sm:$0xf]
    %v238 = vld [vmem:[%s5 + $0x7c] sm:$0xf]
    %v239 = vld [vmem:[%s7] sm:$0xff]
    %v240 = vld [vmem:[%s7 + $0x8] sm:$0xff]
    %v241 = vld [vmem:[%s7 + $0x10] sm:$0xff]
    %v242 = vld [vmem:[%s7 + $0x18] sm:$0xff]
    %v243 = vld [vmem:[%s9] sm:$0xff]
    %v244 = vld [vmem:[%s9 + $0x8] sm:$0xff]
    %v245 = vld [vmem:[%s9 + $0x10] sm:$0xff]
    %v246 = vld [vmem:[%s9 + $0x18] sm:$0xff]
    %v247 = vld [vmem:[%s11] sm:$0xf]
    %v248 = vld [vmem:[%s11 + $0x4] sm:$0xf]
    %v249 = vld [vmem:[%s11 + $0x8] sm:$0xf]
    %v250 = vld [vmem:[%s11 + $0xc] sm:$0xf]
    %v251 = vld [vmem:[%s13] sm:$0xf]
    %v252 = vld [vmem:[%s15] sm:$0xf]
    %v253 = vperm.slane %v251, 0
    %vm254 = vcmask 261120
    %v256 = vsel %vm254, %v203, 0
    %v259 = vsel %vm254, %v204, 0
    %261 = vmatpush.msra.mxu0 0.0
    %262 = vmatpush.msra.mxu0 0.0
    %263 = vmatpush.msra.mxu0 0.0
    %264 = vmatpush.msra.mxu0 0.0
    %265 = vmatpush.msra.mxu0 0.0
    %266 = vmatpush.msra.mxu0 0.0
    %267 = vmatpush.msra.mxu0 0.0
    %268 = vmatpush.msra.mxu0 0.0
    %269 = vmatpush.msra.mxu0 0.0
    %270 = vmatpush.msra.mxu0 0.0
    %271 = vmatpush.msra.mxu0 0.0
    %272 = vmatpush.msra.mxu0 0.0
    %273 = vmatpush.msra.mxu0 %v242
    %274 = vmatpush.msra.mxu0 %v241
    %275 = vmatpush.msra.mxu0 %v240
    %276 = vmatpush.msra.mxu0 %v239
    %277 = vmatmul.f32.gmra.mxu0 %v256
    %v278 = vpop.f32.mrf.mxu0
    %v279 = vadd.f32 %v253, %v278
    %280 = vmatmul.f32.gmra.mxu0 %v259
    %v281 = vpop.f32.mrf.mxu0
    %v282 = vadd.f32 %v253, %v281
    %283 = vdwg.mxu0
    %v284 = vperm.slane %v251, 1
    %285 = vmatpush.msra.mxu0 0.0
    %286 = vmatpush.msra.mxu0 0.0
    %287 = vmatpush.msra.mxu0 0.0
    %288 = vmatpush.msra.mxu0 0.0
    %289 = vmatpush.msra.mxu0 0.0
    %290 = vmatpush.msra.mxu0 0.0
    %291 = vmatpush.msra.mxu0 0.0
    %292 = vmatpush.msra.mxu0 0.0
    %293 = vmatpush.msra.mxu0 0.0
    %294 = vmatpush.msra.mxu0 0.0
    %295 = vmatpush.msra.mxu0 0.0
    %296 = vmatpush.msra.mxu0 0.0
    %297 = vmatpush.msra.mxu0 %v246
    %298 = vmatpush.msra.mxu0 %v245
    %299 = vmatpush.msra.mxu0 %v244
    %300 = vmatpush.msra.mxu0 %v243
    %301 = vmatmul.f32.gmra.mxu0 %v256
    %v302 = vpop.f32.mrf.mxu0
    %v303 = vadd.f32 %v284, %v302
    %304 = vmatmul.f32.gmra.mxu0 %v259
    %v305 = vpop.f32.mrf.mxu0
    %v306 = vadd.f32 %v284, %v305
    %307 = vdwg.mxu0
    %v340 = vunpack.c.l.b16 %v207
    %v341 = vunpack.c.l.b16 %v208
    %v342 = vunpack.c.l.b16 %v209
    %v343 = vunpack.c.l.b16 %v210
    %v344 = vunpack.c.l.b16 %v211
    %v345 = vunpack.c.l.b16 %v212
    %v346 = vunpack.c.l.b16 %v213
    %v347 = vunpack.c.l.b16 %v214
    %v348 = vunpack.c.l.b16 %v215
    %v349 = vunpack.c.l.b16 %v216
    %v350 = vunpack.c.l.b16 %v217
    %v351 = vunpack.c.l.b16 %v218
    %v352 = vunpack.c.l.b16 %v219
    %v353 = vunpack.c.l.b16 %v220
    %v354 = vunpack.c.l.b16 %v221
    %v355 = vunpack.c.l.b16 %v222
    %v356 = vunpack.c.l.b16 %v223
    %v357 = vunpack.c.l.b16 %v224
    %v358 = vunpack.c.l.b16 %v225
    %v359 = vunpack.c.l.b16 %v226
    %v360 = vunpack.c.l.b16 %v227
    %v361 = vunpack.c.l.b16 %v228
    %v362 = vunpack.c.l.b16 %v229
    %v363 = vunpack.c.l.b16 %v230
    %v364 = vunpack.c.l.b16 %v231
    %v365 = vunpack.c.l.b16 %v232
    %v366 = vunpack.c.l.b16 %v233
    %v367 = vunpack.c.l.b16 %v234
    %v368 = vunpack.c.l.b16 %v235
    %v369 = vunpack.c.l.b16 %v236
    %v370 = vunpack.c.l.b16 %v237
    %v371 = vunpack.c.l.b16 %v238
    %v372 = vpack.c.b16 %v341, %v340
    %v373 = vpack.c.b16 %v343, %v342
    %v374 = vpack.c.b16 %v345, %v344
    %v375 = vpack.c.b16 %v347, %v346
    %v376 = vpack.c.b16 %v349, %v348
    %v377 = vpack.c.b16 %v351, %v350
    %v378 = vpack.c.b16 %v353, %v352
    %v379 = vpack.c.b16 %v355, %v354
    %v380 = vpack.c.b16 %v357, %v356
    %v381 = vpack.c.b16 %v359, %v358
    %v382 = vpack.c.b16 %v361, %v360
    %v383 = vpack.c.b16 %v363, %v362
    %v384 = vpack.c.b16 %v365, %v364
    %v385 = vpack.c.b16 %v367, %v366
    %v386 = vpack.c.b16 %v369, %v368
    %v387 = vpack.c.b16 %v371, %v370
    %v392 = vunpack.c.l.b16 %v247
    %v393 = vunpack.c.l.b16 %v248
    %v394 = vunpack.c.l.b16 %v249
    %v395 = vunpack.c.l.b16 %v250
    %v396 = vpack.c.b16 %v393, %v392
    %v397 = vpack.c.b16 %v395, %v394
    %v401 = vsel %vm254, %v372, 0
    %v404 = vsel %vm254, %v373, 0
    %v407 = vsel %vm254, %v374, 0
    %v410 = vsel %vm254, %v375, 0
    %v413 = vsel %vm254, %v376, 0
    %v416 = vsel %vm254, %v377, 0
    %v419 = vsel %vm254, %v378, 0
    %v422 = vsel %vm254, %v379, 0
    %v425 = vsel %vm254, %v380, 0
    %v428 = vsel %vm254, %v381, 0
    %v431 = vsel %vm254, %v382, 0
    %v434 = vsel %vm254, %v383, 0
    %v437 = vsel %vm254, %v384, 0
    %v440 = vsel %vm254, %v385, 0
    %v443 = vsel %vm254, %v386, 0
    %v446 = vsel %vm254, %v387, 0
    %448 = vmatpush.bf16.msra.mxu0 0
    %449 = vmatpush.bf16.msra.mxu0 0
    %450 = vmatpush.bf16.msra.mxu0 0
    %451 = vmatpush.bf16.msra.mxu0 0
    %452 = vmatpush.bf16.msra.mxu0 0
    %453 = vmatpush.bf16.msra.mxu0 0
    %454 = vmatpush.bf16.msra.mxu0 %v397
    %455 = vmatpush.bf16.msra.mxu0 %v396
    %456 = vmatmul.bf16.gmra.mxu0 %v401
    %v457 = vpop.f32.mrf.mxu0
    %v458 = vadd.f32 0.0, %v457
    %v459 = vpop.f32.mrf.mxu0
    %v460 = vadd.f32 0.0, %v459
    %461 = vmatmul.bf16.gmra.mxu0 %v404
    %v462 = vpop.f32.mrf.mxu0
    %v463 = vadd.f32 0.0, %v462
    %v464 = vpop.f32.mrf.mxu0
    %v465 = vadd.f32 0.0, %v464
    %466 = vmatmul.bf16.gmra.mxu0 %v407
    %v467 = vpop.f32.mrf.mxu0
    %v468 = vadd.f32 0.0, %v467
    %v469 = vpop.f32.mrf.mxu0
    %v470 = vadd.f32 0.0, %v469
    %471 = vmatmul.bf16.gmra.mxu0 %v410
    %v472 = vpop.f32.mrf.mxu0
    %v473 = vadd.f32 0.0, %v472
    %v474 = vpop.f32.mrf.mxu0
    %v475 = vadd.f32 0.0, %v474
    %476 = vmatmul.bf16.gmra.mxu0 %v413
    %v477 = vpop.f32.mrf.mxu0
    %v478 = vadd.f32 0.0, %v477
    %v479 = vpop.f32.mrf.mxu0
    %v480 = vadd.f32 0.0, %v479
    %481 = vmatmul.bf16.gmra.mxu0 %v416
    %v482 = vpop.f32.mrf.mxu0
    %v483 = vadd.f32 0.0, %v482
    %v484 = vpop.f32.mrf.mxu0
    %v485 = vadd.f32 0.0, %v484
    %486 = vmatmul.bf16.gmra.mxu0 %v419
    %v487 = vpop.f32.mrf.mxu0
    %v488 = vadd.f32 0.0, %v487
    %v489 = vpop.f32.mrf.mxu0
    %v490 = vadd.f32 0.0, %v489
    %491 = vmatmul.bf16.gmra.mxu0 %v422
    %v492 = vpop.f32.mrf.mxu0
    %v493 = vadd.f32 0.0, %v492
    %v494 = vpop.f32.mrf.mxu0
    %v495 = vadd.f32 0.0, %v494
    %496 = vmatmul.bf16.gmra.mxu0 %v425
    %v497 = vpop.f32.mrf.mxu0
    %v498 = vadd.f32 0.0, %v497
    %v499 = vpop.f32.mrf.mxu0
    %v500 = vadd.f32 0.0, %v499
    %501 = vmatmul.bf16.gmra.mxu0 %v428
    %v502 = vpop.f32.mrf.mxu0
    %v503 = vadd.f32 0.0, %v502
    %v504 = vpop.f32.mrf.mxu0
    %v505 = vadd.f32 0.0, %v504
    %506 = vmatmul.bf16.gmra.mxu0 %v431
    %v507 = vpop.f32.mrf.mxu0
    %v508 = vadd.f32 0.0, %v507
    %v509 = vpop.f32.mrf.mxu0
    %v510 = vadd.f32 0.0, %v509
    %511 = vmatmul.bf16.gmra.mxu0 %v434
    %v512 = vpop.f32.mrf.mxu0
    %v513 = vadd.f32 0.0, %v512
    %v514 = vpop.f32.mrf.mxu0
    %v515 = vadd.f32 0.0, %v514
    %516 = vmatmul.bf16.gmra.mxu0 %v437
    %v517 = vpop.f32.mrf.mxu0
    %v518 = vadd.f32 0.0, %v517
    %v519 = vpop.f32.mrf.mxu0
    %v520 = vadd.f32 0.0, %v519
    %521 = vmatmul.bf16.gmra.mxu0 %v440
    %v522 = vpop.f32.mrf.mxu0
    %v523 = vadd.f32 0.0, %v522
    %v524 = vpop.f32.mrf.mxu0
    %v525 = vadd.f32 0.0, %v524
    %526 = vmatmul.bf16.gmra.mxu0 %v443
    %v527 = vpop.f32.mrf.mxu0
    %v528 = vadd.f32 0.0, %v527
    %v529 = vpop.f32.mrf.mxu0
    %v530 = vadd.f32 0.0, %v529
    %531 = vmatmul.bf16.gmra.mxu0 %v446
    %v532 = vpop.f32.mrf.mxu0
    %v533 = vadd.f32 0.0, %v532
    %v534 = vpop.f32.mrf.mxu0
    %v535 = vadd.f32 0.0, %v534
    %536 = vdwg.mxu0
    %v539 = vrot.slane %v303, 1
    %v540 = vrot.slane %v303, 2
    %v541 = vrot.slane %v303, 3
    %v542 = vrot.slane %v303, 4
    %v543 = vrot.slane %v303, 5
    %v544 = vrot.slane %v303, 6
    %v545 = vrot.slane %v303, 7
    %v546 = vrot.slane %v306, 1
    %v547 = vrot.slane %v306, 2
    %v548 = vrot.slane %v306, 3
    %v549 = vrot.slane %v306, 4
    %v550 = vrot.slane %v306, 5
    %v551 = vrot.slane %v306, 6
    %v552 = vrot.slane %v306, 7
    %v553 = vperm.slane %v303, 0
    %v554 = vperm.slane %v539, 0
    %v555 = vperm.slane %v540, 0
    %v556 = vperm.slane %v541, 0
    %v557 = vperm.slane %v542, 0
    %v558 = vperm.slane %v543, 0
    %v559 = vperm.slane %v544, 0
    %v560 = vperm.slane %v545, 0
    %v561 = vperm.slane %v306, 0
    %v562 = vperm.slane %v546, 0
    %v563 = vperm.slane %v547, 0
    %v564 = vperm.slane %v548, 0
    %v565 = vperm.slane %v549, 0
    %v566 = vperm.slane %v550, 0
    %v567 = vperm.slane %v551, 0
    %v568 = vperm.slane %v552, 0
    %v585 = vadd.f32 %v553, %v279
    %v586 = vadd.f32 %v553, %v282
    %v587 = vadd.f32 %v554, %v279
    %v588 = vadd.f32 %v554, %v282
    %v589 = vadd.f32 %v555, %v279
    %v590 = vadd.f32 %v555, %v282
    %v591 = vadd.f32 %v556, %v279
    %v592 = vadd.f32 %v556, %v282
    %v593 = vadd.f32 %v557, %v279
    %v594 = vadd.f32 %v557, %v282
    %v595 = vadd.f32 %v558, %v279
    %v596 = vadd.f32 %v558, %v282
    %v597 = vadd.f32 %v559, %v279
    %v598 = vadd.f32 %v559, %v282
    %v599 = vadd.f32 %v560, %v279
    %v600 = vadd.f32 %v560, %v282
    %v601 = vadd.f32 %v561, %v279
    %v602 = vadd.f32 %v561, %v282
    %v603 = vadd.f32 %v562, %v279
    %v604 = vadd.f32 %v562, %v282
    %v605 = vadd.f32 %v563, %v279
    %v606 = vadd.f32 %v563, %v282
    %v607 = vadd.f32 %v564, %v279
    %v608 = vadd.f32 %v564, %v282
    %v609 = vadd.f32 %v565, %v279
    %v610 = vadd.f32 %v565, %v282
    %v611 = vadd.f32 %v566, %v279
    %v612 = vadd.f32 %v566, %v282
    %v613 = vadd.f32 %v567, %v279
    %v614 = vadd.f32 %v567, %v282
    %v615 = vadd.f32 %v568, %v279
    %v616 = vadd.f32 %v568, %v282
    %v617 = vadd.f32 %v585, %v458
    %v618 = vadd.f32 %v586, %v460
    %v619 = vadd.f32 %v587, %v463
    %v620 = vadd.f32 %v588, %v465
    %v621 = vadd.f32 %v589, %v468
    %v622 = vadd.f32 %v590, %v470
    %v623 = vadd.f32 %v591, %v473
    %v624 = vadd.f32 %v592, %v475
    %v625 = vadd.f32 %v593, %v478
    %v626 = vadd.f32 %v594, %v480
    %v627 = vadd.f32 %v595, %v483
    %v628 = vadd.f32 %v596, %v485
    %v629 = vadd.f32 %v597, %v488
    %v630 = vadd.f32 %v598, %v490
    %v631 = vadd.f32 %v599, %v493
    %v632 = vadd.f32 %v600, %v495
    %v633 = vadd.f32 %v601, %v498
    %v634 = vadd.f32 %v602, %v500
    %v635 = vadd.f32 %v603, %v503
    %v636 = vadd.f32 %v604, %v505
    %v637 = vadd.f32 %v605, %v508
    %v638 = vadd.f32 %v606, %v510
    %v639 = vadd.f32 %v607, %v513
    %v640 = vadd.f32 %v608, %v515
    %v641 = vadd.f32 %v609, %v518
    %v642 = vadd.f32 %v610, %v520
    %v643 = vadd.f32 %v611, %v523
    %v644 = vadd.f32 %v612, %v525
    %v645 = vadd.f32 %v613, %v528
    %v646 = vadd.f32 %v614, %v530
    %v647 = vadd.f32 %v615, %v533
    %v648 = vadd.f32 %v616, %v535
    %v649 = vmul.f32 %v617, 0.2
    %v650 = vmul.f32 %v618, 0.2
    %v651 = vmul.f32 %v619, 0.2
    %v652 = vmul.f32 %v620, 0.2
    %v653 = vmul.f32 %v621, 0.2
    %v654 = vmul.f32 %v622, 0.2
    %v655 = vmul.f32 %v623, 0.2
    %v656 = vmul.f32 %v624, 0.2
    %v657 = vmul.f32 %v625, 0.2
    %v658 = vmul.f32 %v626, 0.2
    %v659 = vmul.f32 %v627, 0.2
    %v660 = vmul.f32 %v628, 0.2
    %v661 = vmul.f32 %v629, 0.2
    %v662 = vmul.f32 %v630, 0.2
    %v663 = vmul.f32 %v631, 0.2
    %v664 = vmul.f32 %v632, 0.2
    %v665 = vmul.f32 %v633, 0.2
    %v666 = vmul.f32 %v634, 0.2
    %v667 = vmul.f32 %v635, 0.2
    %v668 = vmul.f32 %v636, 0.2
    %v669 = vmul.f32 %v637, 0.2
    %v670 = vmul.f32 %v638, 0.2
    %v671 = vmul.f32 %v639, 0.2
    %v672 = vmul.f32 %v640, 0.2
    %v673 = vmul.f32 %v641, 0.2
    %v674 = vmul.f32 %v642, 0.2
    %v675 = vmul.f32 %v643, 0.2
    %v676 = vmul.f32 %v644, 0.2
    %v677 = vmul.f32 %v645, 0.2
    %v678 = vmul.f32 %v646, 0.2
    %v679 = vmul.f32 %v647, 0.2
    %v680 = vmul.f32 %v648, 0.2
    %v681 = vmax.f32 %v617, %v649
    %v682 = vmax.f32 %v618, %v650
    %v683 = vmax.f32 %v619, %v651
    %v684 = vmax.f32 %v620, %v652
    %v685 = vmax.f32 %v621, %v653
    %v686 = vmax.f32 %v622, %v654
    %v687 = vmax.f32 %v623, %v655
    %v688 = vmax.f32 %v624, %v656
    %v689 = vmax.f32 %v625, %v657
    %v690 = vmax.f32 %v626, %v658
    %v691 = vmax.f32 %v627, %v659
    %v692 = vmax.f32 %v628, %v660
    %v693 = vmax.f32 %v629, %v661
    %v694 = vmax.f32 %v630, %v662
    %v695 = vmax.f32 %v631, %v663
    %v696 = vmax.f32 %v632, %v664
    %v697 = vmax.f32 %v633, %v665
    %v698 = vmax.f32 %v634, %v666
    %v699 = vmax.f32 %v635, %v667
    %v700 = vmax.f32 %v636, %v668
    %v701 = vmax.f32 %v637, %v669
    %v702 = vmax.f32 %v638, %v670
    %v703 = vmax.f32 %v639, %v671
    %v704 = vmax.f32 %v640, %v672
    %v705 = vmax.f32 %v641, %v673
    %v706 = vmax.f32 %v642, %v674
    %v707 = vmax.f32 %v643, %v675
    %v708 = vmax.f32 %v644, %v676
    %v709 = vmax.f32 %v645, %v677
    %v710 = vmax.f32 %v646, %v678
    %v711 = vmax.f32 %v647, %v679
    %v712 = vmax.f32 %v648, %v680
    %v713 = vperm.slane %v251, 2
    %v714 = vmul.f32 %v681, %v713
    %v715 = vmul.f32 %v682, %v713
    %v716 = vmul.f32 %v683, %v713
    %v717 = vmul.f32 %v684, %v713
    %v718 = vmul.f32 %v685, %v713
    %v719 = vmul.f32 %v686, %v713
    %v720 = vmul.f32 %v687, %v713
    %v721 = vmul.f32 %v688, %v713
    %v722 = vmul.f32 %v689, %v713
    %v723 = vmul.f32 %v690, %v713
    %v724 = vmul.f32 %v691, %v713
    %v725 = vmul.f32 %v692, %v713
    %v726 = vmul.f32 %v693, %v713
    %v727 = vmul.f32 %v694, %v713
    %v728 = vmul.f32 %v695, %v713
    %v729 = vmul.f32 %v696, %v713
    %v730 = vmul.f32 %v697, %v713
    %v731 = vmul.f32 %v698, %v713
    %v732 = vmul.f32 %v699, %v713
    %v733 = vmul.f32 %v700, %v713
    %v734 = vmul.f32 %v701, %v713
    %v735 = vmul.f32 %v702, %v713
    %v736 = vmul.f32 %v703, %v713
    %v737 = vmul.f32 %v704, %v713
    %v738 = vmul.f32 %v705, %v713
    %v739 = vmul.f32 %v706, %v713
    %v740 = vmul.f32 %v707, %v713
    %v741 = vmul.f32 %v708, %v713
    %v742 = vmul.f32 %v709, %v713
    %v743 = vmul.f32 %v710, %v713
    %v744 = vmul.f32 %v711, %v713
    %v745 = vmul.f32 %v712, %v713
    %v746 = vsel %vm254, %v714, 0.0
    %747 = vadd.xlane.f32.xlu0 %v746
    %v748 = vpop.xlane.xlu0 %747
    %v749 = vsel %vm254, %v715, 0.0
    %750 = vadd.xlane.f32.xlu0 %v749
    %v751 = vpop.xlane.xlu0 %750
    %v752 = vsel %vm254, %v716, 0.0
    %753 = vadd.xlane.f32.xlu0 %v752
    %v754 = vpop.xlane.xlu0 %753
    %v755 = vsel %vm254, %v717, 0.0
    %756 = vadd.xlane.f32.xlu0 %v755
    %v757 = vpop.xlane.xlu0 %756
    %v758 = vsel %vm254, %v718, 0.0
    %759 = vadd.xlane.f32.xlu0 %v758
    %v760 = vpop.xlane.xlu0 %759
    %v761 = vsel %vm254, %v719, 0.0
    %762 = vadd.xlane.f32.xlu0 %v761
    %v763 = vpop.xlane.xlu0 %762
    %v764 = vsel %vm254, %v720, 0.0
    %765 = vadd.xlane.f32.xlu0 %v764
    %v766 = vpop.xlane.xlu0 %765
    %v767 = vsel %vm254, %v721, 0.0
    %768 = vadd.xlane.f32.xlu0 %v767
    %v769 = vpop.xlane.xlu0 %768
    %v770 = vsel %vm254, %v722, 0.0
    %771 = vadd.xlane.f32.xlu0 %v770
    %v772 = vpop.xlane.xlu0 %771
    %v773 = vsel %vm254, %v723, 0.0
    %774 = vadd.xlane.f32.xlu0 %v773
    %v775 = vpop.xlane.xlu0 %774
    %v776 = vsel %vm254, %v724, 0.0
    %777 = vadd.xlane.f32.xlu0 %v776
    %v778 = vpop.xlane.xlu0 %777
    %v779 = vsel %vm254, %v725, 0.0
    %780 = vadd.xlane.f32.xlu0 %v779
    %v781 = vpop.xlane.xlu0 %780
    %v782 = vsel %vm254, %v726, 0.0
    %783 = vadd.xlane.f32.xlu0 %v782
    %v784 = vpop.xlane.xlu0 %783
    %v785 = vsel %vm254, %v727, 0.0
    %786 = vadd.xlane.f32.xlu0 %v785
    %v787 = vpop.xlane.xlu0 %786
    %v788 = vsel %vm254, %v728, 0.0
    %789 = vadd.xlane.f32.xlu0 %v788
    %v790 = vpop.xlane.xlu0 %789
    %v791 = vsel %vm254, %v729, 0.0
    %792 = vadd.xlane.f32.xlu0 %v791
    %v793 = vpop.xlane.xlu0 %792
    %v794 = vsel %vm254, %v730, 0.0
    %795 = vadd.xlane.f32.xlu0 %v794
    %v796 = vpop.xlane.xlu0 %795
    %v797 = vsel %vm254, %v731, 0.0
    %798 = vadd.xlane.f32.xlu0 %v797
    %v799 = vpop.xlane.xlu0 %798
    %v800 = vsel %vm254, %v732, 0.0
    %801 = vadd.xlane.f32.xlu0 %v800
    %v802 = vpop.xlane.xlu0 %801
    %v803 = vsel %vm254, %v733, 0.0
    %804 = vadd.xlane.f32.xlu0 %v803
    %v805 = vpop.xlane.xlu0 %804
    %v806 = vsel %vm254, %v734, 0.0
    %807 = vadd.xlane.f32.xlu0 %v806
    %v808 = vpop.xlane.xlu0 %807
    %v809 = vsel %vm254, %v735, 0.0
    %810 = vadd.xlane.f32.xlu0 %v809
    %v811 = vpop.xlane.xlu0 %810
    %v812 = vsel %vm254, %v736, 0.0
    %813 = vadd.xlane.f32.xlu0 %v812
    %v814 = vpop.xlane.xlu0 %813
    %v815 = vsel %vm254, %v737, 0.0
    %816 = vadd.xlane.f32.xlu0 %v815
    %v817 = vpop.xlane.xlu0 %816
    %v818 = vsel %vm254, %v738, 0.0
    %819 = vadd.xlane.f32.xlu0 %v818
    %v820 = vpop.xlane.xlu0 %819
    %v821 = vsel %vm254, %v739, 0.0
    %822 = vadd.xlane.f32.xlu0 %v821
    %v823 = vpop.xlane.xlu0 %822
    %v824 = vsel %vm254, %v740, 0.0
    %825 = vadd.xlane.f32.xlu0 %v824
    %v826 = vpop.xlane.xlu0 %825
    %v827 = vsel %vm254, %v741, 0.0
    %828 = vadd.xlane.f32.xlu0 %v827
    %v829 = vpop.xlane.xlu0 %828
    %v830 = vsel %vm254, %v742, 0.0
    %831 = vadd.xlane.f32.xlu0 %v830
    %v832 = vpop.xlane.xlu0 %831
    %v833 = vsel %vm254, %v743, 0.0
    %834 = vadd.xlane.f32.xlu0 %v833
    %v835 = vpop.xlane.xlu0 %834
    %v836 = vsel %vm254, %v744, 0.0
    %837 = vadd.xlane.f32.xlu0 %v836
    %v838 = vpop.xlane.xlu0 %837
    %v839 = vsel %vm254, %v745, 0.0
    %840 = vadd.xlane.f32.xlu0 %v839
    %v841 = vpop.xlane.xlu0 %840
    %vm842 = vcmp.gt.f32.partialorder %v205, 0.0
    %vm843 = vcmp.gt.f32.partialorder %v206, 0.0
    %v876 = vlaneseq
    %v877 = vand.u32 %v876, 127
    %v878 = vperm.slane %v748, %v877
    %v879 = vadd.s32 %v877, 4294967288
    %v880 = vperm.slane %v751, %v879
    %vm881 = vcmask 130112
    %v882 = vsel %vm881, %v880, %v878
    %v883 = vperm.slane %v754, %v877
    %v884 = vperm.slane %v757, %v879
    %v885 = vsel %vm881, %v884, %v883
    %v886 = vperm.slane %v760, %v877
    %v887 = vperm.slane %v763, %v879
    %v888 = vsel %vm881, %v887, %v886
    %v889 = vperm.slane %v766, %v877
    %v890 = vperm.slane %v769, %v879
    %v891 = vsel %vm881, %v890, %v889
    %v892 = vperm.slane %v772, %v877
    %v893 = vperm.slane %v775, %v879
    %v894 = vsel %vm881, %v893, %v892
    %v895 = vperm.slane %v778, %v877
    %v896 = vperm.slane %v781, %v879
    %v897 = vsel %vm881, %v896, %v895
    %v898 = vperm.slane %v784, %v877
    %v899 = vperm.slane %v787, %v879
    %v900 = vsel %vm881, %v899, %v898
    %v901 = vperm.slane %v790, %v877
    %v902 = vperm.slane %v793, %v879
    %v903 = vsel %vm881, %v902, %v901
    %v904 = vperm.slane %v796, %v877
    %v905 = vperm.slane %v799, %v879
    %v906 = vsel %vm881, %v905, %v904
    %v907 = vperm.slane %v802, %v877
    %v908 = vperm.slane %v805, %v879
    %v909 = vsel %vm881, %v908, %v907
    %v910 = vperm.slane %v808, %v877
    %v911 = vperm.slane %v811, %v879
    %v912 = vsel %vm881, %v911, %v910
    %v913 = vperm.slane %v814, %v877
    %v914 = vperm.slane %v817, %v879
    %v915 = vsel %vm881, %v914, %v913
    %v916 = vperm.slane %v820, %v877
    %v917 = vperm.slane %v823, %v879
    %v918 = vsel %vm881, %v917, %v916
    %v919 = vperm.slane %v826, %v877
    %v920 = vperm.slane %v829, %v879
    %v921 = vsel %vm881, %v920, %v919
    %v922 = vperm.slane %v832, %v877
    %v923 = vperm.slane %v835, %v879
    %v924 = vsel %vm881, %v923, %v922
    %v925 = vperm.slane %v838, %v877
    %v926 = vperm.slane %v841, %v879
    %v927 = vsel %vm881, %v926, %v925
    %vm928 = vcmask 1041409
    %v929 = vsel %vm928, %v885, %v882
    %vm930 = vcmask 1042434
    %v931 = vsel %vm930, %v888, %v929
    %vm932 = vcmask 1043459
    %v933 = vsel %vm932, %v891, %v931
    %vm934 = vcmask 1044484
    %v935 = vsel %vm934, %v894, %v933
    %vm936 = vcmask 1045509
    %v937 = vsel %vm936, %v897, %v935
    %vm938 = vcmask 1046534
    %v939 = vsel %vm938, %v900, %v937
    %vm940 = vcmask 1047559
    %v941 = vsel %vm940, %v903, %v939
    %v942 = vsel %vm928, %v909, %v906
    %v943 = vsel %vm930, %v912, %v942
    %v944 = vsel %vm932, %v915, %v943
    %v945 = vsel %vm934, %v918, %v944
    %v946 = vsel %vm936, %v921, %v945
    %v947 = vsel %vm938, %v924, %v946
    %v948 = vsel %vm940, %v927, %v947
    %v951 = vsel %vm842, %v941, -1e+30
    %v952 = vsel %vm843, %v948, -1e+30
    %vm953 = vcmask 130048
    %v954 = vsel %vm953, %v951, -inf
    %955 = vmax.xlane.f32.xlu0 %v954
    %v956 = vpop.xlane.xlu0 %955
    %v957 = vsel %vm953, %v952, -inf
    %958 = vmax.xlane.f32.xlu0 %v957
    %v959 = vpop.xlane.xlu0 %958
    %v960 = vsub.f32 %v951, %v956
    %v961 = vsub.f32 %v952, %v959
    %v962 = vmul.f32 %v960, 1.442695
    %v963 = vpow.pop %v962
    %v964 = vmul.f32 %v961, 1.442695
    %v965 = vpow.pop %v964
    %v966 = vmul.f32 %v963, %v205
    %v967 = vmul.f32 %v965, %v206
    %v968 = vsel %vm953, %v966, 0.0
    %969 = vadd.xlane.f32.xlu0 %v968
    %v970 = vpop.xlane.xlu0 %969
    %v971 = vsel %vm953, %v967, 0.0
    %972 = vadd.xlane.f32.xlu0 %v971
    %v973 = vpop.xlane.xlu0 %972
    %v974 = vmax.f32 %v970, 1e-20
    %v975 = vmax.f32 %v973, 1e-20
    %v976 = vrcp.pop %v974
    %v977 = vmul.f32 %v974, %v976
    %v978 = vsub.f32 1.0, %v977
    %v979 = vmul.f32 %v976, %v978
    %v980 = vadd.f32 %v976, %v979
    %vm981 = vweird.f32 %v974
    %vm982 = vweird.f32 %v976
    %vm983 = vmor %vm981, %vm982
    %v984 = vsel %vm983, %v976, %v980
    %v985 = vand.u32 2147483647, %v974
    %vm986 = vcmp.eq.f32.partialorder %v985, 8.507059e+37
    %v987 = vand.u32 %v974, 2147483648
    %v988 = vor.u32 1.1754944e-38, %v987
    %v989 = vsel %vm986, %v988, %v984
    %v990 = vmul.f32 %v966, %v989
    %v991 = vrcp.pop %v975
    %v992 = vmul.f32 %v975, %v991
    %v993 = vsub.f32 1.0, %v992
    %v994 = vmul.f32 %v991, %v993
    %v995 = vadd.f32 %v991, %v994
    %vm996 = vweird.f32 %v975
    %vm997 = vweird.f32 %v991
    %vm998 = vmor %vm996, %vm997
    %v999 = vsel %vm998, %v991, %v995
    %v1000 = vand.u32 2147483647, %v975
    %vm1001 = vcmp.eq.f32.partialorder %v1000, 8.507059e+37
    %v1002 = vand.u32 %v975, 2147483648
    %v1003 = vor.u32 1.1754944e-38, %v1002
    %v1004 = vsel %vm1001, %v1003, %v999
    %v1005 = vmul.f32 %v967, %v1004
    %v1006 = vperm.slane %v251, 3
    %v1008 = vsel %vm953, %v990, 0
    %v1011 = vsel %vm953, %v1005, 0
    %1013 = vmatpush.msra.mxu0 0.0
    %1014 = vmatpush.msra.mxu0 0.0
    %1015 = vmatpush.msra.mxu0 0.0
    %1016 = vmatpush.msra.mxu0 0.0
    %1017 = vmatpush.msra.mxu0 0.0
    %1018 = vmatpush.msra.mxu0 0.0
    %1019 = vmatpush.msra.mxu0 0.0
    %1020 = vmatpush.msra.mxu0 0.0
    %1021 = vmatpush.msra.mxu0 0.0
    %1022 = vmatpush.msra.mxu0 0.0
    %1023 = vmatpush.msra.mxu0 0.0
    %1024 = vmatpush.msra.mxu0 0.0
    %1025 = vmatpush.msra.mxu0 0.0
    %1026 = vmatpush.msra.mxu0 0.0
    %1027 = vmatpush.msra.mxu0 %v282
    %1028 = vmatpush.msra.mxu0 %v279
    %1029 = vmatmul.f32.gmra.mxu0 %v1008
    %v1030 = vpop.f32.mrf.mxu0
    %v1031 = vadd.f32 %v1006, %v1030
    %1032 = vmatmul.f32.gmra.mxu0 %v1011
    %v1033 = vpop.f32.mrf.mxu0
    %v1034 = vadd.f32 %v1006, %v1033
    %1035 = vdwg.mxu0
    %v1036 = vperm.slane %v252, 2
    %v1037 = vsub.f32 %v1031, %v1036
    %v1038 = vsub.f32 %v1034, %v1036
    %v1039 = vadd.f32 %v252, 1e-05
    %v1040 = vrsqrt.pop %v1039
    %v1041 = vmul.f32 %v1040, %v1039
    %v1042 = vmul.f32 %v1041, %v1040
    %v1043 = vmul.f32 0.5, %v1042
    %v1044 = vsub.f32 1.5, %v1043
    %v1045 = vmul.f32 %v1040, %v1044
    %vm1046 = vweird.f32 %v1039
    %vm1047 = vweird.f32 %v1040
    %vm1048 = vmor %vm1046, %vm1047
    %v1049 = vsel %vm1048, %v1040, %v1045
    %v1050 = vperm.slane %v1049, 3
    %v1051 = vmul.f32 %v1037, %v1050
    %v1052 = vmul.f32 %v1038, %v1050
    %v1053 = vperm.slane %v252, 0
    %v1054 = vmul.f32 %v1051, %v1053
    %v1055 = vmul.f32 %v1052, %v1053
    %v1056 = vperm.slane %v252, 1
    %v1057 = vadd.f32 %v1054, %v1056
    %v1058 = vadd.f32 %v1055, %v1056
    %v1059 = vtanh.pop %v1057
    %v1060 = vtanh.pop %v1058
    %v1061 = vld [vmem:[%s17] sm:$0xff]
    %v1062 = vld [vmem:[%s17 + $0x8] sm:$0xff]
    %v1063 = vld [vmem:[%s17 + $0x10] sm:$0xff]
    %v1064 = vld [vmem:[%s17 + $0x18] sm:$0xff]
    %v1065 = vld [vmem:[%s19] sm:$0xff]
    %v1066 = vld [vmem:[%s19 + $0x8] sm:$0xff]
    %v1067 = vld [vmem:[%s19 + $0x10] sm:$0xff]
    %v1068 = vld [vmem:[%s19 + $0x18] sm:$0xff]
    %v1069 = vld [vmem:[%s21] sm:$0xf]
    %v1070 = vld [vmem:[%s21 + $0x4] sm:$0xf]
    %v1071 = vld [vmem:[%s21 + $0x8] sm:$0xf]
    %v1072 = vld [vmem:[%s21 + $0xc] sm:$0xf]
    %v1073 = vld [vmem:[%s23] sm:$0xf]
    %v1074 = vld [vmem:[%s25] sm:$0xf]
    %v1075 = vperm.slane %v1073, 0
    %v1077 = vsel %vm254, %v1059, 0
    %v1080 = vsel %vm254, %v1060, 0
    %1082 = vmatpush.msra.mxu0 0.0
    %1083 = vmatpush.msra.mxu0 0.0
    %1084 = vmatpush.msra.mxu0 0.0
    %1085 = vmatpush.msra.mxu0 0.0
    %1086 = vmatpush.msra.mxu0 0.0
    %1087 = vmatpush.msra.mxu0 0.0
    %1088 = vmatpush.msra.mxu0 0.0
    %1089 = vmatpush.msra.mxu0 0.0
    %1090 = vmatpush.msra.mxu0 0.0
    %1091 = vmatpush.msra.mxu0 0.0
    %1092 = vmatpush.msra.mxu0 0.0
    %1093 = vmatpush.msra.mxu0 0.0
    %1094 = vmatpush.msra.mxu0 %v1064
    %1095 = vmatpush.msra.mxu0 %v1063
    %1096 = vmatpush.msra.mxu0 %v1062
    %1097 = vmatpush.msra.mxu0 %v1061
    %1098 = vmatmul.f32.gmra.mxu0 %v1077
    %v1099 = vpop.f32.mrf.mxu0
    %v1100 = vadd.f32 %v1075, %v1099
    %1101 = vmatmul.f32.gmra.mxu0 %v1080
    %v1102 = vpop.f32.mrf.mxu0
    %v1103 = vadd.f32 %v1075, %v1102
    %1104 = vdwg.mxu0
    %v1105 = vperm.slane %v1073, 1
    %1106 = vmatpush.msra.mxu0 0.0
    %1107 = vmatpush.msra.mxu0 0.0
    %1108 = vmatpush.msra.mxu0 0.0
    %1109 = vmatpush.msra.mxu0 0.0
    %1110 = vmatpush.msra.mxu0 0.0
    %1111 = vmatpush.msra.mxu0 0.0
    %1112 = vmatpush.msra.mxu0 0.0
    %1113 = vmatpush.msra.mxu0 0.0
    %1114 = vmatpush.msra.mxu0 0.0
    %1115 = vmatpush.msra.mxu0 0.0
    %1116 = vmatpush.msra.mxu0 0.0
    %1117 = vmatpush.msra.mxu0 0.0
    %1118 = vmatpush.msra.mxu0 %v1068
    %1119 = vmatpush.msra.mxu0 %v1067
    %1120 = vmatpush.msra.mxu0 %v1066
    %1121 = vmatpush.msra.mxu0 %v1065
    %1122 = vmatmul.f32.gmra.mxu0 %v1077
    %v1123 = vpop.f32.mrf.mxu0
    %v1124 = vadd.f32 %v1105, %v1123
    %1125 = vmatmul.f32.gmra.mxu0 %v1080
    %v1126 = vpop.f32.mrf.mxu0
    %v1127 = vadd.f32 %v1105, %v1126
    %1128 = vdwg.mxu0
    %v1133 = vunpack.c.l.b16 %v1069
    %v1134 = vunpack.c.l.b16 %v1070
    %v1135 = vunpack.c.l.b16 %v1071
    %v1136 = vunpack.c.l.b16 %v1072
    %v1137 = vpack.c.b16 %v1134, %v1133
    %v1138 = vpack.c.b16 %v1136, %v1135
    %1141 = vmatpush.bf16.msra.mxu0 0
    %1142 = vmatpush.bf16.msra.mxu0 0
    %1143 = vmatpush.bf16.msra.mxu0 0
    %1144 = vmatpush.bf16.msra.mxu0 0
    %1145 = vmatpush.bf16.msra.mxu0 0
    %1146 = vmatpush.bf16.msra.mxu0 0
    %1147 = vmatpush.bf16.msra.mxu0 %v1138
    %1148 = vmatpush.bf16.msra.mxu0 %v1137
    %1149 = vmatmul.bf16.gmra.mxu0 %v401
    %v1150 = vpop.f32.mrf.mxu0
    %v1151 = vadd.f32 0.0, %v1150
    %v1152 = vpop.f32.mrf.mxu0
    %v1153 = vadd.f32 0.0, %v1152
    %1154 = vmatmul.bf16.gmra.mxu0 %v404
    %v1155 = vpop.f32.mrf.mxu0
    %v1156 = vadd.f32 0.0, %v1155
    %v1157 = vpop.f32.mrf.mxu0
    %v1158 = vadd.f32 0.0, %v1157
    %1159 = vmatmul.bf16.gmra.mxu0 %v407
    %v1160 = vpop.f32.mrf.mxu0
    %v1161 = vadd.f32 0.0, %v1160
    %v1162 = vpop.f32.mrf.mxu0
    %v1163 = vadd.f32 0.0, %v1162
    %1164 = vmatmul.bf16.gmra.mxu0 %v410
    %v1165 = vpop.f32.mrf.mxu0
    %v1166 = vadd.f32 0.0, %v1165
    %v1167 = vpop.f32.mrf.mxu0
    %v1168 = vadd.f32 0.0, %v1167
    %1169 = vmatmul.bf16.gmra.mxu0 %v413
    %v1170 = vpop.f32.mrf.mxu0
    %v1171 = vadd.f32 0.0, %v1170
    %v1172 = vpop.f32.mrf.mxu0
    %v1173 = vadd.f32 0.0, %v1172
    %1174 = vmatmul.bf16.gmra.mxu0 %v416
    %v1175 = vpop.f32.mrf.mxu0
    %v1176 = vadd.f32 0.0, %v1175
    %v1177 = vpop.f32.mrf.mxu0
    %v1178 = vadd.f32 0.0, %v1177
    %1179 = vmatmul.bf16.gmra.mxu0 %v419
    %v1180 = vpop.f32.mrf.mxu0
    %v1181 = vadd.f32 0.0, %v1180
    %v1182 = vpop.f32.mrf.mxu0
    %v1183 = vadd.f32 0.0, %v1182
    %1184 = vmatmul.bf16.gmra.mxu0 %v422
    %v1185 = vpop.f32.mrf.mxu0
    %v1186 = vadd.f32 0.0, %v1185
    %v1187 = vpop.f32.mrf.mxu0
    %v1188 = vadd.f32 0.0, %v1187
    %1189 = vmatmul.bf16.gmra.mxu0 %v425
    %v1190 = vpop.f32.mrf.mxu0
    %v1191 = vadd.f32 0.0, %v1190
    %v1192 = vpop.f32.mrf.mxu0
    %v1193 = vadd.f32 0.0, %v1192
    %1194 = vmatmul.bf16.gmra.mxu0 %v428
    %v1195 = vpop.f32.mrf.mxu0
    %v1196 = vadd.f32 0.0, %v1195
    %v1197 = vpop.f32.mrf.mxu0
    %v1198 = vadd.f32 0.0, %v1197
    %1199 = vmatmul.bf16.gmra.mxu0 %v431
    %v1200 = vpop.f32.mrf.mxu0
    %v1201 = vadd.f32 0.0, %v1200
    %v1202 = vpop.f32.mrf.mxu0
    %v1203 = vadd.f32 0.0, %v1202
    %1204 = vmatmul.bf16.gmra.mxu0 %v434
    %v1205 = vpop.f32.mrf.mxu0
    %v1206 = vadd.f32 0.0, %v1205
    %v1207 = vpop.f32.mrf.mxu0
    %v1208 = vadd.f32 0.0, %v1207
    %1209 = vmatmul.bf16.gmra.mxu0 %v437
    %v1210 = vpop.f32.mrf.mxu0
    %v1211 = vadd.f32 0.0, %v1210
    %v1212 = vpop.f32.mrf.mxu0
    %v1213 = vadd.f32 0.0, %v1212
    %1214 = vmatmul.bf16.gmra.mxu0 %v440
    %v1215 = vpop.f32.mrf.mxu0
    %v1216 = vadd.f32 0.0, %v1215
    %v1217 = vpop.f32.mrf.mxu0
    %v1218 = vadd.f32 0.0, %v1217
    %1219 = vmatmul.bf16.gmra.mxu0 %v443
    %v1220 = vpop.f32.mrf.mxu0
    %v1221 = vadd.f32 0.0, %v1220
    %v1222 = vpop.f32.mrf.mxu0
    %v1223 = vadd.f32 0.0, %v1222
    %1224 = vmatmul.bf16.gmra.mxu0 %v446
    %v1225 = vpop.f32.mrf.mxu0
    %v1226 = vadd.f32 0.0, %v1225
    %v1227 = vpop.f32.mrf.mxu0
    %v1228 = vadd.f32 0.0, %v1227
    %1229 = vdwg.mxu0
    %v1232 = vrot.slane %v1124, 1
    %v1233 = vrot.slane %v1124, 2
    %v1234 = vrot.slane %v1124, 3
    %v1235 = vrot.slane %v1124, 4
    %v1236 = vrot.slane %v1124, 5
    %v1237 = vrot.slane %v1124, 6
    %v1238 = vrot.slane %v1124, 7
    %v1239 = vrot.slane %v1127, 1
    %v1240 = vrot.slane %v1127, 2
    %v1241 = vrot.slane %v1127, 3
    %v1242 = vrot.slane %v1127, 4
    %v1243 = vrot.slane %v1127, 5
    %v1244 = vrot.slane %v1127, 6
    %v1245 = vrot.slane %v1127, 7
    %v1246 = vperm.slane %v1124, 0
    %v1247 = vperm.slane %v1232, 0
    %v1248 = vperm.slane %v1233, 0
    %v1249 = vperm.slane %v1234, 0
    %v1250 = vperm.slane %v1235, 0
    %v1251 = vperm.slane %v1236, 0
    %v1252 = vperm.slane %v1237, 0
    %v1253 = vperm.slane %v1238, 0
    %v1254 = vperm.slane %v1127, 0
    %v1255 = vperm.slane %v1239, 0
    %v1256 = vperm.slane %v1240, 0
    %v1257 = vperm.slane %v1241, 0
    %v1258 = vperm.slane %v1242, 0
    %v1259 = vperm.slane %v1243, 0
    %v1260 = vperm.slane %v1244, 0
    %v1261 = vperm.slane %v1245, 0
    %v1278 = vadd.f32 %v1246, %v1100
    %v1279 = vadd.f32 %v1246, %v1103
    %v1280 = vadd.f32 %v1247, %v1100
    %v1281 = vadd.f32 %v1247, %v1103
    %v1282 = vadd.f32 %v1248, %v1100
    %v1283 = vadd.f32 %v1248, %v1103
    %v1284 = vadd.f32 %v1249, %v1100
    %v1285 = vadd.f32 %v1249, %v1103
    %v1286 = vadd.f32 %v1250, %v1100
    %v1287 = vadd.f32 %v1250, %v1103
    %v1288 = vadd.f32 %v1251, %v1100
    %v1289 = vadd.f32 %v1251, %v1103
    %v1290 = vadd.f32 %v1252, %v1100
    %v1291 = vadd.f32 %v1252, %v1103
    %v1292 = vadd.f32 %v1253, %v1100
    %v1293 = vadd.f32 %v1253, %v1103
    %v1294 = vadd.f32 %v1254, %v1100
    %v1295 = vadd.f32 %v1254, %v1103
    %v1296 = vadd.f32 %v1255, %v1100
    %v1297 = vadd.f32 %v1255, %v1103
    %v1298 = vadd.f32 %v1256, %v1100
    %v1299 = vadd.f32 %v1256, %v1103
    %v1300 = vadd.f32 %v1257, %v1100
    %v1301 = vadd.f32 %v1257, %v1103
    %v1302 = vadd.f32 %v1258, %v1100
    %v1303 = vadd.f32 %v1258, %v1103
    %v1304 = vadd.f32 %v1259, %v1100
    %v1305 = vadd.f32 %v1259, %v1103
    %v1306 = vadd.f32 %v1260, %v1100
    %v1307 = vadd.f32 %v1260, %v1103
    %v1308 = vadd.f32 %v1261, %v1100
    %v1309 = vadd.f32 %v1261, %v1103
    %v1310 = vadd.f32 %v1278, %v1151
    %v1311 = vadd.f32 %v1279, %v1153
    %v1312 = vadd.f32 %v1280, %v1156
    %v1313 = vadd.f32 %v1281, %v1158
    %v1314 = vadd.f32 %v1282, %v1161
    %v1315 = vadd.f32 %v1283, %v1163
    %v1316 = vadd.f32 %v1284, %v1166
    %v1317 = vadd.f32 %v1285, %v1168
    %v1318 = vadd.f32 %v1286, %v1171
    %v1319 = vadd.f32 %v1287, %v1173
    %v1320 = vadd.f32 %v1288, %v1176
    %v1321 = vadd.f32 %v1289, %v1178
    %v1322 = vadd.f32 %v1290, %v1181
    %v1323 = vadd.f32 %v1291, %v1183
    %v1324 = vadd.f32 %v1292, %v1186
    %v1325 = vadd.f32 %v1293, %v1188
    %v1326 = vadd.f32 %v1294, %v1191
    %v1327 = vadd.f32 %v1295, %v1193
    %v1328 = vadd.f32 %v1296, %v1196
    %v1329 = vadd.f32 %v1297, %v1198
    %v1330 = vadd.f32 %v1298, %v1201
    %v1331 = vadd.f32 %v1299, %v1203
    %v1332 = vadd.f32 %v1300, %v1206
    %v1333 = vadd.f32 %v1301, %v1208
    %v1334 = vadd.f32 %v1302, %v1211
    %v1335 = vadd.f32 %v1303, %v1213
    %v1336 = vadd.f32 %v1304, %v1216
    %v1337 = vadd.f32 %v1305, %v1218
    %v1338 = vadd.f32 %v1306, %v1221
    %v1339 = vadd.f32 %v1307, %v1223
    %v1340 = vadd.f32 %v1308, %v1226
    %v1341 = vadd.f32 %v1309, %v1228
    %v1342 = vmul.f32 %v1310, 0.2
    %v1343 = vmul.f32 %v1311, 0.2
    %v1344 = vmul.f32 %v1312, 0.2
    %v1345 = vmul.f32 %v1313, 0.2
    %v1346 = vmul.f32 %v1314, 0.2
    %v1347 = vmul.f32 %v1315, 0.2
    %v1348 = vmul.f32 %v1316, 0.2
    %v1349 = vmul.f32 %v1317, 0.2
    %v1350 = vmul.f32 %v1318, 0.2
    %v1351 = vmul.f32 %v1319, 0.2
    %v1352 = vmul.f32 %v1320, 0.2
    %v1353 = vmul.f32 %v1321, 0.2
    %v1354 = vmul.f32 %v1322, 0.2
    %v1355 = vmul.f32 %v1323, 0.2
    %v1356 = vmul.f32 %v1324, 0.2
    %v1357 = vmul.f32 %v1325, 0.2
    %v1358 = vmul.f32 %v1326, 0.2
    %v1359 = vmul.f32 %v1327, 0.2
    %v1360 = vmul.f32 %v1328, 0.2
    %v1361 = vmul.f32 %v1329, 0.2
    %v1362 = vmul.f32 %v1330, 0.2
    %v1363 = vmul.f32 %v1331, 0.2
    %v1364 = vmul.f32 %v1332, 0.2
    %v1365 = vmul.f32 %v1333, 0.2
    %v1366 = vmul.f32 %v1334, 0.2
    %v1367 = vmul.f32 %v1335, 0.2
    %v1368 = vmul.f32 %v1336, 0.2
    %v1369 = vmul.f32 %v1337, 0.2
    %v1370 = vmul.f32 %v1338, 0.2
    %v1371 = vmul.f32 %v1339, 0.2
    %v1372 = vmul.f32 %v1340, 0.2
    %v1373 = vmul.f32 %v1341, 0.2
    %v1374 = vmax.f32 %v1310, %v1342
    %v1375 = vmax.f32 %v1311, %v1343
    %v1376 = vmax.f32 %v1312, %v1344
    %v1377 = vmax.f32 %v1313, %v1345
    %v1378 = vmax.f32 %v1314, %v1346
    %v1379 = vmax.f32 %v1315, %v1347
    %v1380 = vmax.f32 %v1316, %v1348
    %v1381 = vmax.f32 %v1317, %v1349
    %v1382 = vmax.f32 %v1318, %v1350
    %v1383 = vmax.f32 %v1319, %v1351
    %v1384 = vmax.f32 %v1320, %v1352
    %v1385 = vmax.f32 %v1321, %v1353
    %v1386 = vmax.f32 %v1322, %v1354
    %v1387 = vmax.f32 %v1323, %v1355
    %v1388 = vmax.f32 %v1324, %v1356
    %v1389 = vmax.f32 %v1325, %v1357
    %v1390 = vmax.f32 %v1326, %v1358
    %v1391 = vmax.f32 %v1327, %v1359
    %v1392 = vmax.f32 %v1328, %v1360
    %v1393 = vmax.f32 %v1329, %v1361
    %v1394 = vmax.f32 %v1330, %v1362
    %v1395 = vmax.f32 %v1331, %v1363
    %v1396 = vmax.f32 %v1332, %v1364
    %v1397 = vmax.f32 %v1333, %v1365
    %v1398 = vmax.f32 %v1334, %v1366
    %v1399 = vmax.f32 %v1335, %v1367
    %v1400 = vmax.f32 %v1336, %v1368
    %v1401 = vmax.f32 %v1337, %v1369
    %v1402 = vmax.f32 %v1338, %v1370
    %v1403 = vmax.f32 %v1339, %v1371
    %v1404 = vmax.f32 %v1340, %v1372
    %v1405 = vmax.f32 %v1341, %v1373
    %v1406 = vperm.slane %v1073, 2
    %v1407 = vmul.f32 %v1374, %v1406
    %v1408 = vmul.f32 %v1375, %v1406
    %v1409 = vmul.f32 %v1376, %v1406
    %v1410 = vmul.f32 %v1377, %v1406
    %v1411 = vmul.f32 %v1378, %v1406
    %v1412 = vmul.f32 %v1379, %v1406
    %v1413 = vmul.f32 %v1380, %v1406
    %v1414 = vmul.f32 %v1381, %v1406
    %v1415 = vmul.f32 %v1382, %v1406
    %v1416 = vmul.f32 %v1383, %v1406
    %v1417 = vmul.f32 %v1384, %v1406
    %v1418 = vmul.f32 %v1385, %v1406
    %v1419 = vmul.f32 %v1386, %v1406
    %v1420 = vmul.f32 %v1387, %v1406
    %v1421 = vmul.f32 %v1388, %v1406
    %v1422 = vmul.f32 %v1389, %v1406
    %v1423 = vmul.f32 %v1390, %v1406
    %v1424 = vmul.f32 %v1391, %v1406
    %v1425 = vmul.f32 %v1392, %v1406
    %v1426 = vmul.f32 %v1393, %v1406
    %v1427 = vmul.f32 %v1394, %v1406
    %v1428 = vmul.f32 %v1395, %v1406
    %v1429 = vmul.f32 %v1396, %v1406
    %v1430 = vmul.f32 %v1397, %v1406
    %v1431 = vmul.f32 %v1398, %v1406
    %v1432 = vmul.f32 %v1399, %v1406
    %v1433 = vmul.f32 %v1400, %v1406
    %v1434 = vmul.f32 %v1401, %v1406
    %v1435 = vmul.f32 %v1402, %v1406
    %v1436 = vmul.f32 %v1403, %v1406
    %v1437 = vmul.f32 %v1404, %v1406
    %v1438 = vmul.f32 %v1405, %v1406
    %v1439 = vsel %vm254, %v1407, 0.0
    %1440 = vadd.xlane.f32.xlu0 %v1439
    %v1441 = vpop.xlane.xlu0 %1440
    %v1442 = vsel %vm254, %v1408, 0.0
    %1443 = vadd.xlane.f32.xlu0 %v1442
    %v1444 = vpop.xlane.xlu0 %1443
    %v1445 = vsel %vm254, %v1409, 0.0
    %1446 = vadd.xlane.f32.xlu0 %v1445
    %v1447 = vpop.xlane.xlu0 %1446
    %v1448 = vsel %vm254, %v1410, 0.0
    %1449 = vadd.xlane.f32.xlu0 %v1448
    %v1450 = vpop.xlane.xlu0 %1449
    %v1451 = vsel %vm254, %v1411, 0.0
    %1452 = vadd.xlane.f32.xlu0 %v1451
    %v1453 = vpop.xlane.xlu0 %1452
    %v1454 = vsel %vm254, %v1412, 0.0
    %1455 = vadd.xlane.f32.xlu0 %v1454
    %v1456 = vpop.xlane.xlu0 %1455
    %v1457 = vsel %vm254, %v1413, 0.0
    %1458 = vadd.xlane.f32.xlu0 %v1457
    %v1459 = vpop.xlane.xlu0 %1458
    %v1460 = vsel %vm254, %v1414, 0.0
    %1461 = vadd.xlane.f32.xlu0 %v1460
    %v1462 = vpop.xlane.xlu0 %1461
    %v1463 = vsel %vm254, %v1415, 0.0
    %1464 = vadd.xlane.f32.xlu0 %v1463
    %v1465 = vpop.xlane.xlu0 %1464
    %v1466 = vsel %vm254, %v1416, 0.0
    %1467 = vadd.xlane.f32.xlu0 %v1466
    %v1468 = vpop.xlane.xlu0 %1467
    %v1469 = vsel %vm254, %v1417, 0.0
    %1470 = vadd.xlane.f32.xlu0 %v1469
    %v1471 = vpop.xlane.xlu0 %1470
    %v1472 = vsel %vm254, %v1418, 0.0
    %1473 = vadd.xlane.f32.xlu0 %v1472
    %v1474 = vpop.xlane.xlu0 %1473
    %v1475 = vsel %vm254, %v1419, 0.0
    %1476 = vadd.xlane.f32.xlu0 %v1475
    %v1477 = vpop.xlane.xlu0 %1476
    %v1478 = vsel %vm254, %v1420, 0.0
    %1479 = vadd.xlane.f32.xlu0 %v1478
    %v1480 = vpop.xlane.xlu0 %1479
    %v1481 = vsel %vm254, %v1421, 0.0
    %1482 = vadd.xlane.f32.xlu0 %v1481
    %v1483 = vpop.xlane.xlu0 %1482
    %v1484 = vsel %vm254, %v1422, 0.0
    %1485 = vadd.xlane.f32.xlu0 %v1484
    %v1486 = vpop.xlane.xlu0 %1485
    %v1487 = vsel %vm254, %v1423, 0.0
    %1488 = vadd.xlane.f32.xlu0 %v1487
    %v1489 = vpop.xlane.xlu0 %1488
    %v1490 = vsel %vm254, %v1424, 0.0
    %1491 = vadd.xlane.f32.xlu0 %v1490
    %v1492 = vpop.xlane.xlu0 %1491
    %v1493 = vsel %vm254, %v1425, 0.0
    %1494 = vadd.xlane.f32.xlu0 %v1493
    %v1495 = vpop.xlane.xlu0 %1494
    %v1496 = vsel %vm254, %v1426, 0.0
    %1497 = vadd.xlane.f32.xlu0 %v1496
    %v1498 = vpop.xlane.xlu0 %1497
    %v1499 = vsel %vm254, %v1427, 0.0
    %1500 = vadd.xlane.f32.xlu0 %v1499
    %v1501 = vpop.xlane.xlu0 %1500
    %v1502 = vsel %vm254, %v1428, 0.0
    %1503 = vadd.xlane.f32.xlu0 %v1502
    %v1504 = vpop.xlane.xlu0 %1503
    %v1505 = vsel %vm254, %v1429, 0.0
    %1506 = vadd.xlane.f32.xlu0 %v1505
    %v1507 = vpop.xlane.xlu0 %1506
    %v1508 = vsel %vm254, %v1430, 0.0
    %1509 = vadd.xlane.f32.xlu0 %v1508
    %v1510 = vpop.xlane.xlu0 %1509
    %v1511 = vsel %vm254, %v1431, 0.0
    %1512 = vadd.xlane.f32.xlu0 %v1511
    %v1513 = vpop.xlane.xlu0 %1512
    %v1514 = vsel %vm254, %v1432, 0.0
    %1515 = vadd.xlane.f32.xlu0 %v1514
    %v1516 = vpop.xlane.xlu0 %1515
    %v1517 = vsel %vm254, %v1433, 0.0
    %1518 = vadd.xlane.f32.xlu0 %v1517
    %v1519 = vpop.xlane.xlu0 %1518
    %v1520 = vsel %vm254, %v1434, 0.0
    %1521 = vadd.xlane.f32.xlu0 %v1520
    %v1522 = vpop.xlane.xlu0 %1521
    %v1523 = vsel %vm254, %v1435, 0.0
    %1524 = vadd.xlane.f32.xlu0 %v1523
    %v1525 = vpop.xlane.xlu0 %1524
    %v1526 = vsel %vm254, %v1436, 0.0
    %1527 = vadd.xlane.f32.xlu0 %v1526
    %v1528 = vpop.xlane.xlu0 %1527
    %v1529 = vsel %vm254, %v1437, 0.0
    %1530 = vadd.xlane.f32.xlu0 %v1529
    %v1531 = vpop.xlane.xlu0 %1530
    %v1532 = vsel %vm254, %v1438, 0.0
    %1533 = vadd.xlane.f32.xlu0 %v1532
    %v1534 = vpop.xlane.xlu0 %1533
    %v1567 = vperm.slane %v1441, %v877
    %v1568 = vperm.slane %v1444, %v879
    %v1569 = vsel %vm881, %v1568, %v1567
    %v1570 = vperm.slane %v1447, %v877
    %v1571 = vperm.slane %v1450, %v879
    %v1572 = vsel %vm881, %v1571, %v1570
    %v1573 = vperm.slane %v1453, %v877
    %v1574 = vperm.slane %v1456, %v879
    %v1575 = vsel %vm881, %v1574, %v1573
    %v1576 = vperm.slane %v1459, %v877
    %v1577 = vperm.slane %v1462, %v879
    %v1578 = vsel %vm881, %v1577, %v1576
    %v1579 = vperm.slane %v1465, %v877
    %v1580 = vperm.slane %v1468, %v879
    %v1581 = vsel %vm881, %v1580, %v1579
    %v1582 = vperm.slane %v1471, %v877
    %v1583 = vperm.slane %v1474, %v879
    %v1584 = vsel %vm881, %v1583, %v1582
    %v1585 = vperm.slane %v1477, %v877
    %v1586 = vperm.slane %v1480, %v879
    %v1587 = vsel %vm881, %v1586, %v1585
    %v1588 = vperm.slane %v1483, %v877
    %v1589 = vperm.slane %v1486, %v879
    %v1590 = vsel %vm881, %v1589, %v1588
    %v1591 = vperm.slane %v1489, %v877
    %v1592 = vperm.slane %v1492, %v879
    %v1593 = vsel %vm881, %v1592, %v1591
    %v1594 = vperm.slane %v1495, %v877
    %v1595 = vperm.slane %v1498, %v879
    %v1596 = vsel %vm881, %v1595, %v1594
    %v1597 = vperm.slane %v1501, %v877
    %v1598 = vperm.slane %v1504, %v879
    %v1599 = vsel %vm881, %v1598, %v1597
    %v1600 = vperm.slane %v1507, %v877
    %v1601 = vperm.slane %v1510, %v879
    %v1602 = vsel %vm881, %v1601, %v1600
    %v1603 = vperm.slane %v1513, %v877
    %v1604 = vperm.slane %v1516, %v879
    %v1605 = vsel %vm881, %v1604, %v1603
    %v1606 = vperm.slane %v1519, %v877
    %v1607 = vperm.slane %v1522, %v879
    %v1608 = vsel %vm881, %v1607, %v1606
    %v1609 = vperm.slane %v1525, %v877
    %v1610 = vperm.slane %v1528, %v879
    %v1611 = vsel %vm881, %v1610, %v1609
    %v1612 = vperm.slane %v1531, %v877
    %v1613 = vperm.slane %v1534, %v879
    %v1614 = vsel %vm881, %v1613, %v1612
    %v1615 = vsel %vm928, %v1572, %v1569
    %v1616 = vsel %vm930, %v1575, %v1615
    %v1617 = vsel %vm932, %v1578, %v1616
    %v1618 = vsel %vm934, %v1581, %v1617
    %v1619 = vsel %vm936, %v1584, %v1618
    %v1620 = vsel %vm938, %v1587, %v1619
    %v1621 = vsel %vm940, %v1590, %v1620
    %v1622 = vsel %vm928, %v1596, %v1593
    %v1623 = vsel %vm930, %v1599, %v1622
    %v1624 = vsel %vm932, %v1602, %v1623
    %v1625 = vsel %vm934, %v1605, %v1624
    %v1626 = vsel %vm936, %v1608, %v1625
    %v1627 = vsel %vm938, %v1611, %v1626
    %v1628 = vsel %vm940, %v1614, %v1627
    %v1631 = vsel %vm842, %v1621, -1e+30
    %v1632 = vsel %vm843, %v1628, -1e+30
    %v1633 = vsel %vm953, %v1631, -inf
    %1634 = vmax.xlane.f32.xlu0 %v1633
    %v1635 = vpop.xlane.xlu0 %1634
    %v1636 = vsel %vm953, %v1632, -inf
    %1637 = vmax.xlane.f32.xlu0 %v1636
    %v1638 = vpop.xlane.xlu0 %1637
    %v1639 = vsub.f32 %v1631, %v1635
    %v1640 = vsub.f32 %v1632, %v1638
    %v1641 = vmul.f32 %v1639, 1.442695
    %v1642 = vpow.pop %v1641
    %v1643 = vmul.f32 %v1640, 1.442695
    %v1644 = vpow.pop %v1643
    %v1645 = vmul.f32 %v1642, %v205
    %v1646 = vmul.f32 %v1644, %v206
    %v1647 = vsel %vm953, %v1645, 0.0
    %1648 = vadd.xlane.f32.xlu0 %v1647
    %v1649 = vpop.xlane.xlu0 %1648
    %v1650 = vsel %vm953, %v1646, 0.0
    %1651 = vadd.xlane.f32.xlu0 %v1650
    %v1652 = vpop.xlane.xlu0 %1651
    %v1653 = vmax.f32 %v1649, 1e-20
    %v1654 = vmax.f32 %v1652, 1e-20
    %v1655 = vrcp.pop %v1653
    %v1656 = vmul.f32 %v1653, %v1655
    %v1657 = vsub.f32 1.0, %v1656
    %v1658 = vmul.f32 %v1655, %v1657
    %v1659 = vadd.f32 %v1655, %v1658
    %vm1660 = vweird.f32 %v1653
    %vm1661 = vweird.f32 %v1655
    %vm1662 = vmor %vm1660, %vm1661
    %v1663 = vsel %vm1662, %v1655, %v1659
    %v1664 = vand.u32 2147483647, %v1653
    %vm1665 = vcmp.eq.f32.partialorder %v1664, 8.507059e+37
    %v1666 = vand.u32 %v1653, 2147483648
    %v1667 = vor.u32 1.1754944e-38, %v1666
    %v1668 = vsel %vm1665, %v1667, %v1663
    %v1669 = vmul.f32 %v1645, %v1668
    %v1670 = vrcp.pop %v1654
    %v1671 = vmul.f32 %v1654, %v1670
    %v1672 = vsub.f32 1.0, %v1671
    %v1673 = vmul.f32 %v1670, %v1672
    %v1674 = vadd.f32 %v1670, %v1673
    %vm1675 = vweird.f32 %v1654
    %vm1676 = vweird.f32 %v1670
    %vm1677 = vmor %vm1675, %vm1676
    %v1678 = vsel %vm1677, %v1670, %v1674
    %v1679 = vand.u32 2147483647, %v1654
    %vm1680 = vcmp.eq.f32.partialorder %v1679, 8.507059e+37
    %v1681 = vand.u32 %v1654, 2147483648
    %v1682 = vor.u32 1.1754944e-38, %v1681
    %v1683 = vsel %vm1680, %v1682, %v1678
    %v1684 = vmul.f32 %v1646, %v1683
    %v1685 = vperm.slane %v1073, 3
    %v1687 = vsel %vm953, %v1669, 0
    %v1690 = vsel %vm953, %v1684, 0
    %1692 = vmatpush.msra.mxu0 0.0
    %1693 = vmatpush.msra.mxu0 0.0
    %1694 = vmatpush.msra.mxu0 0.0
    %1695 = vmatpush.msra.mxu0 0.0
    %1696 = vmatpush.msra.mxu0 0.0
    %1697 = vmatpush.msra.mxu0 0.0
    %1698 = vmatpush.msra.mxu0 0.0
    %1699 = vmatpush.msra.mxu0 0.0
    %1700 = vmatpush.msra.mxu0 0.0
    %1701 = vmatpush.msra.mxu0 0.0
    %1702 = vmatpush.msra.mxu0 0.0
    %1703 = vmatpush.msra.mxu0 0.0
    %1704 = vmatpush.msra.mxu0 0.0
    %1705 = vmatpush.msra.mxu0 0.0
    %1706 = vmatpush.msra.mxu0 %v1103
    %1707 = vmatpush.msra.mxu0 %v1100
    %1708 = vmatmul.f32.gmra.mxu0 %v1687
    %v1709 = vpop.f32.mrf.mxu0
    %v1710 = vadd.f32 %v1685, %v1709
    %1711 = vmatmul.f32.gmra.mxu0 %v1690
    %v1712 = vpop.f32.mrf.mxu0
    %v1713 = vadd.f32 %v1685, %v1712
    %1714 = vdwg.mxu0
    %v1715 = vperm.slane %v1074, 2
    %v1716 = vsub.f32 %v1710, %v1715
    %v1717 = vsub.f32 %v1713, %v1715
    %v1718 = vadd.f32 %v1074, 1e-05
    %v1719 = vrsqrt.pop %v1718
    %v1720 = vmul.f32 %v1719, %v1718
    %v1721 = vmul.f32 %v1720, %v1719
    %v1722 = vmul.f32 0.5, %v1721
    %v1723 = vsub.f32 1.5, %v1722
    %v1724 = vmul.f32 %v1719, %v1723
    %vm1725 = vweird.f32 %v1718
    %vm1726 = vweird.f32 %v1719
    %vm1727 = vmor %vm1725, %vm1726
    %v1728 = vsel %vm1727, %v1719, %v1724
    %v1729 = vperm.slane %v1728, 3
    %v1730 = vmul.f32 %v1716, %v1729
    %v1731 = vmul.f32 %v1717, %v1729
    %v1732 = vperm.slane %v1074, 0
    %v1733 = vmul.f32 %v1730, %v1732
    %v1734 = vmul.f32 %v1731, %v1732
    %v1735 = vperm.slane %v1074, 1
    %v1736 = vadd.f32 %v1733, %v1735
    %v1737 = vadd.f32 %v1734, %v1735
    %v1738 = vtanh.pop %v1736
    %v1739 = vtanh.pop %v1737
    %v1740 = vld [vmem:[%s27] sm:$0xff]
    %v1741 = vld [vmem:[%s27 + $0x8] sm:$0xff]
    %v1742 = vld [vmem:[%s27 + $0x10] sm:$0xff]
    %v1743 = vld [vmem:[%s27 + $0x18] sm:$0xff]
    %v1744 = vld [vmem:[%s29] sm:$0xf]
    %v1745 = vld [vmem:[%s31] sm:$0xf]
    %v1746 = vld [vmem:[%s33] sm:$0xff]
    %v1747 = vld [vmem:[%s33 + $0x8] sm:$0xff]
    %v1748 = vld [vmem:[%s33 + $0x10] sm:$0xff]
    %v1749 = vld [vmem:[%s33 + $0x18] sm:$0xff]
    %v1750 = vld [vmem:[%s35] sm:$0x1]
    %v1751 = vld [vmem:[%s37] sm:$0xff]
    %v1752 = vld [vmem:[%s37 + $0x8] sm:$0xff]
    %v1753 = vld [vmem:[%s37 + $0x10] sm:$0xff]
    %v1754 = vld [vmem:[%s37 + $0x18] sm:$0xff]
    %v1755 = vld [vmem:[%s39] sm:$0x1]
    %v1756 = vld [vmem:[%s41] sm:$0xff]
    %v1757 = vld [vmem:[%s41 + $0x8] sm:$0xff]
    %v1758 = vld [vmem:[%s41 + $0x10] sm:$0xff]
    %v1759 = vld [vmem:[%s41 + $0x18] sm:$0xff]
    %v1760 = vld [vmem:[%s43] sm:$0x1]
    %v1761 = vld [vmem:[%s45] sm:$0xff]
    %v1762 = vld [vmem:[%s45 + $0x8] sm:$0xff]
    %v1763 = vld [vmem:[%s45 + $0x10] sm:$0xff]
    %v1764 = vld [vmem:[%s45 + $0x18] sm:$0xff]
    %v1765 = vld [vmem:[%s47] sm:$0x1]
    %v1766 = vld [vmem:[%s49] sm:$0xff]
    %v1767 = vld [vmem:[%s49 + $0x8] sm:$0xff]
    %v1768 = vld [vmem:[%s49 + $0x10] sm:$0xff]
    %v1769 = vld [vmem:[%s49 + $0x18] sm:$0xff]
    %v1770 = vld [vmem:[#allocation2] sm:$0x1]
    %v1771 = vld [vmem:[%s53] sm:$0xff]
    %v1772 = vld [vmem:[%s53 + $0x8] sm:$0xff]
    %v1773 = vld [vmem:[%s53 + $0x10] sm:$0xff]
    %v1774 = vld [vmem:[%s53 + $0x18] sm:$0xff]
    %v1775 = vld [vmem:[#allocation7] sm:$0x1]
    %v1776 = vld [vmem:[%s57] sm:$0xf]
    %v1777 = vld [vmem:[%s59] sm:$0xff]
    %v1778 = vld [vmem:[%s59 + $0x8] sm:$0xff]
    %v1779 = vld [vmem:[%s59 + $0x10] sm:$0xff]
    %v1780 = vld [vmem:[%s59 + $0x18] sm:$0xff]
    %v1781 = vld [vmem:[#allocation9] sm:$0x1]
    %v1782 = vld [vmem:[%s63] sm:$0xf]
    %s1783 = sld [smem:[#allocation10]]
    %s1784 = sld [smem:[#allocation10 + $0x1]]
    %s1785 = sld [smem:[#allocation10 + $0x2]]
    %v1786 = vmul.f32 %v1740, %v1740
    %v1787 = vmul.f32 %v1741, %v1741
    %v1788 = vmul.f32 %v1742, %v1742
    %v1789 = vmul.f32 %v1743, %v1743
    %v1790 = vsel %vm254, %v1786, 0.0
    %1791 = vadd.xlane.f32.xlu0 %v1790
    %v1792 = vpop.xlane.xlu0 %1791
    %v1793 = vsel %vm254, %v1787, 0.0
    %1794 = vadd.xlane.f32.xlu0 %v1793
    %v1795 = vpop.xlane.xlu0 %1794
    %v1796 = vsel %vm254, %v1788, 0.0
    %1797 = vadd.xlane.f32.xlu0 %v1796
    %v1798 = vpop.xlane.xlu0 %1797
    %v1799 = vsel %vm254, %v1789, 0.0
    %1800 = vadd.xlane.f32.xlu0 %v1799
    %v1801 = vpop.xlane.xlu0 %1800
    %v1802 = vadd.f32 %v1792, 1e-12
    %v1803 = vadd.f32 %v1795, 1e-12
    %v1804 = vadd.f32 %v1798, 1e-12
    %v1805 = vadd.f32 %v1801, 1e-12
    %v1806 = vrsqrt.pop %v1802
    %v1807 = vmul.f32 %v1806, %v1802
    %v1808 = vmul.f32 %v1807, %v1806
    %v1809 = vmul.f32 0.5, %v1808
    %v1810 = vsub.f32 1.5, %v1809
    %v1811 = vmul.f32 %v1806, %v1810
    %vm1812 = vweird.f32 %v1802
    %vm1813 = vweird.f32 %v1806
    %vm1814 = vmor %vm1812, %vm1813
    %v1815 = vsel %vm1814, %v1806, %v1811
    %v1816 = vrsqrt.pop %v1803
    %v1817 = vmul.f32 %v1816, %v1803
    %v1818 = vmul.f32 %v1817, %v1816
    %v1819 = vmul.f32 0.5, %v1818
    %v1820 = vsub.f32 1.5, %v1819
    %v1821 = vmul.f32 %v1816, %v1820
    %vm1822 = vweird.f32 %v1803
    %vm1823 = vweird.f32 %v1816
    %vm1824 = vmor %vm1822, %vm1823
    %v1825 = vsel %vm1824, %v1816, %v1821
    %v1826 = vrsqrt.pop %v1804
    %v1827 = vmul.f32 %v1826, %v1804
    %v1828 = vmul.f32 %v1827, %v1826
    %v1829 = vmul.f32 0.5, %v1828
    %v1830 = vsub.f32 1.5, %v1829
    %v1831 = vmul.f32 %v1826, %v1830
    %vm1832 = vweird.f32 %v1804
    %vm1833 = vweird.f32 %v1826
    %vm1834 = vmor %vm1832, %vm1833
    %v1835 = vsel %vm1834, %v1826, %v1831
    %v1836 = vrsqrt.pop %v1805
    %v1837 = vmul.f32 %v1836, %v1805
    %v1838 = vmul.f32 %v1837, %v1836
    %v1839 = vmul.f32 0.5, %v1838
    %v1840 = vsub.f32 1.5, %v1839
    %v1841 = vmul.f32 %v1836, %v1840
    %vm1842 = vweird.f32 %v1805
    %vm1843 = vweird.f32 %v1836
    %vm1844 = vmor %vm1842, %vm1843
    %v1845 = vsel %vm1844, %v1836, %v1841
    %v1846 = vmul.f32 %v1740, %v1815
    %v1847 = vmul.f32 %v1741, %v1825
    %v1848 = vmul.f32 %v1742, %v1835
    %v1849 = vmul.f32 %v1743, %v1845
    %v1851 = vperm.slane %v1765, 0
    %v1854 = vsel %vm254, %v1846, 0
    %v1857 = vsel %vm254, %v1847, 0
    %v1860 = vsel %vm254, %v1848, 0
    %v1863 = vsel %vm254, %v1849, 0
    %1865 = vmatpush.msra.mxu0 0.0
    %1866 = vmatpush.msra.mxu0 0.0
    %1867 = vmatpush.msra.mxu0 0.0
    %1868 = vmatpush.msra.mxu0 0.0
    %1869 = vmatpush.msra.mxu0 0.0
    %1870 = vmatpush.msra.mxu0 0.0
    %1871 = vmatpush.msra.mxu0 0.0
    %1872 = vmatpush.msra.mxu0 0.0
    %1873 = vmatpush.msra.mxu0 0.0
    %1874 = vmatpush.msra.mxu0 0.0
    %1875 = vmatpush.msra.mxu0 0.0
    %1876 = vmatpush.msra.mxu0 0.0
    %1877 = vmatpush.msra.mxu0 %v1764
    %1878 = vmatpush.msra.mxu0 %v1763
    %1879 = vmatpush.msra.mxu0 %v1762
    %1880 = vmatpush.msra.mxu0 %v1761
    %1881 = vmatmul.f32.gmra.mxu0 %v1854
    %v1882 = vpop.f32.mrf.mxu0
    %v1883 = vadd.f32 %v1851, %v1882
    %1884 = vmatmul.f32.gmra.mxu0 %v1857
    %v1885 = vpop.f32.mrf.mxu0
    %v1886 = vadd.f32 %v1851, %v1885
    %1887 = vmatmul.f32.gmra.mxu0 %v1860
    %v1888 = vpop.f32.mrf.mxu0
    %v1889 = vadd.f32 %v1851, %v1888
    %1890 = vmatmul.f32.gmra.mxu0 %v1863
    %v1891 = vpop.f32.mrf.mxu0
    %v1892 = vadd.f32 %v1851, %v1891
    %1893 = vdwg.mxu0
    %v1894 = vmax.f32 %v1883, 0.0
    %v1895 = vmax.f32 %v1886, 0.0
    %v1896 = vmax.f32 %v1889, 0.0
    %v1897 = vmax.f32 %v1892, 0.0
    %v1899 = vperm.slane %v1770, 0
    %v1902 = vsel %vm254, %v1894, 0
    %v1905 = vsel %vm254, %v1895, 0
    %v1908 = vsel %vm254, %v1896, 0
    %v1911 = vsel %vm254, %v1897, 0
    %1913 = vmatpush.msra.mxu0 0.0
    %1914 = vmatpush.msra.mxu0 0.0
    %1915 = vmatpush.msra.mxu0 0.0
    %1916 = vmatpush.msra.mxu0 0.0
    %1917 = vmatpush.msra.mxu0 0.0
    %1918 = vmatpush.msra.mxu0 0.0
    %1919 = vmatpush.msra.mxu0 0.0
    %1920 = vmatpush.msra.mxu0 0.0
    %1921 = vmatpush.msra.mxu0 0.0
    %1922 = vmatpush.msra.mxu0 0.0
    %1923 = vmatpush.msra.mxu0 0.0
    %1924 = vmatpush.msra.mxu0 0.0
    %1925 = vmatpush.msra.mxu0 %v1769
    %1926 = vmatpush.msra.mxu0 %v1768
    %1927 = vmatpush.msra.mxu0 %v1767
    %1928 = vmatpush.msra.mxu0 %v1766
    %1929 = vmatmul.f32.gmra.mxu0 %v1902
    %v1930 = vpop.f32.mrf.mxu0
    %v1931 = vadd.f32 %v1899, %v1930
    %1932 = vmatmul.f32.gmra.mxu0 %v1905
    %v1933 = vpop.f32.mrf.mxu0
    %v1934 = vadd.f32 %v1899, %v1933
    %1935 = vmatmul.f32.gmra.mxu0 %v1908
    %v1936 = vpop.f32.mrf.mxu0
    %v1937 = vadd.f32 %v1899, %v1936
    %1938 = vmatmul.f32.gmra.mxu0 %v1911
    %v1939 = vpop.f32.mrf.mxu0
    %v1940 = vadd.f32 %v1899, %v1939
    %1941 = vdwg.mxu0
    %v1942 = vsel %vm254, %v1931, -inf
    %v1943 = vrot.slane %v1942, 4
    %v1944 = vmax.f32 %v1942, %v1943
    %v1945 = vrot.slane %v1944, 2
    %v1946 = vmax.f32 %v1944, %v1945
    %v1947 = vrot.slane %v1946, 1
    %v1948 = vmax.f32 %v1946, %v1947
    %v1949 = vsel %vm254, %v1934, -inf
    %v1950 = vrot.slane %v1949, 4
    %v1951 = vmax.f32 %v1949, %v1950
    %v1952 = vrot.slane %v1951, 2
    %v1953 = vmax.f32 %v1951, %v1952
    %v1954 = vrot.slane %v1953, 1
    %v1955 = vmax.f32 %v1953, %v1954
    %v1956 = vsel %vm254, %v1937, -inf
    %v1957 = vrot.slane %v1956, 4
    %v1958 = vmax.f32 %v1956, %v1957
    %v1959 = vrot.slane %v1958, 2
    %v1960 = vmax.f32 %v1958, %v1959
    %v1961 = vrot.slane %v1960, 1
    %v1962 = vmax.f32 %v1960, %v1961
    %v1963 = vsel %vm254, %v1940, -inf
    %v1964 = vrot.slane %v1963, 4
    %v1965 = vmax.f32 %v1963, %v1964
    %v1966 = vrot.slane %v1965, 2
    %v1967 = vmax.f32 %v1965, %v1966
    %v1968 = vrot.slane %v1967, 1
    %v1969 = vmax.f32 %v1967, %v1968
    %v1970 = vsub.f32 %v1931, %v1948
    %v1971 = vsub.f32 %v1934, %v1955
    %v1972 = vsub.f32 %v1937, %v1962
    %v1973 = vsub.f32 %v1940, %v1969
    %v1974 = vmul.f32 %v1970, 1.442695
    %v1975 = vpow.pop %v1974
    %v1976 = vmul.f32 %v1971, 1.442695
    %v1977 = vpow.pop %v1976
    %v1978 = vmul.f32 %v1972, 1.442695
    %v1979 = vpow.pop %v1978
    %v1980 = vmul.f32 %v1973, 1.442695
    %v1981 = vpow.pop %v1980
    %v1982 = vsel %vm254, %v1975, 0.0
    %v1983 = vrot.slane %v1982, 4
    %v1984 = vadd.f32 %v1982, %v1983
    %v1985 = vrot.slane %v1984, 2
    %v1986 = vadd.f32 %v1984, %v1985
    %v1987 = vrot.slane %v1986, 1
    %v1988 = vadd.f32 %v1986, %v1987
    %v1989 = vsel %vm254, %v1977, 0.0
    %v1990 = vrot.slane %v1989, 4
    %v1991 = vadd.f32 %v1989, %v1990
    %v1992 = vrot.slane %v1991, 2
    %v1993 = vadd.f32 %v1991, %v1992
    %v1994 = vrot.slane %v1993, 1
    %v1995 = vadd.f32 %v1993, %v1994
    %v1996 = vsel %vm254, %v1979, 0.0
    %v1997 = vrot.slane %v1996, 4
    %v1998 = vadd.f32 %v1996, %v1997
    %v1999 = vrot.slane %v1998, 2
    %v2000 = vadd.f32 %v1998, %v1999
    %v2001 = vrot.slane %v2000, 1
    %v2002 = vadd.f32 %v2000, %v2001
    %v2003 = vsel %vm254, %v1981, 0.0
    %v2004 = vrot.slane %v2003, 4
    %v2005 = vadd.f32 %v2003, %v2004
    %v2006 = vrot.slane %v2005, 2
    %v2007 = vadd.f32 %v2005, %v2006
    %v2008 = vrot.slane %v2007, 1
    %v2009 = vadd.f32 %v2007, %v2008
    %v2010 = vrcp.pop %v1988
    %v2011 = vmul.f32 %v1988, %v2010
    %v2012 = vsub.f32 1.0, %v2011
    %v2013 = vmul.f32 %v2010, %v2012
    %v2014 = vadd.f32 %v2010, %v2013
    %vm2015 = vweird.f32 %v1988
    %vm2016 = vweird.f32 %v2010
    %vm2017 = vmor %vm2015, %vm2016
    %v2018 = vsel %vm2017, %v2010, %v2014
    %v2019 = vand.u32 2147483647, %v1988
    %vm2020 = vcmp.eq.f32.partialorder %v2019, 8.507059e+37
    %v2021 = vand.u32 %v1988, 2147483648
    %v2022 = vor.u32 1.1754944e-38, %v2021
    %v2023 = vsel %vm2020, %v2022, %v2018
    %v2024 = vmul.f32 %v1975, %v2023
    %v2025 = vrcp.pop %v1995
    %v2026 = vmul.f32 %v1995, %v2025
    %v2027 = vsub.f32 1.0, %v2026
    %v2028 = vmul.f32 %v2025, %v2027
    %v2029 = vadd.f32 %v2025, %v2028
    %vm2030 = vweird.f32 %v1995
    %vm2031 = vweird.f32 %v2025
    %vm2032 = vmor %vm2030, %vm2031
    %v2033 = vsel %vm2032, %v2025, %v2029
    %v2034 = vand.u32 2147483647, %v1995
    %vm2035 = vcmp.eq.f32.partialorder %v2034, 8.507059e+37
    %v2036 = vand.u32 %v1995, 2147483648
    %v2037 = vor.u32 1.1754944e-38, %v2036
    %v2038 = vsel %vm2035, %v2037, %v2033
    %v2039 = vmul.f32 %v1977, %v2038
    %v2040 = vrcp.pop %v2002
    %v2041 = vmul.f32 %v2002, %v2040
    %v2042 = vsub.f32 1.0, %v2041
    %v2043 = vmul.f32 %v2040, %v2042
    %v2044 = vadd.f32 %v2040, %v2043
    %vm2045 = vweird.f32 %v2002
    %vm2046 = vweird.f32 %v2040
    %vm2047 = vmor %vm2045, %vm2046
    %v2048 = vsel %vm2047, %v2040, %v2044
    %v2049 = vand.u32 2147483647, %v2002
    %vm2050 = vcmp.eq.f32.partialorder %v2049, 8.507059e+37
    %v2051 = vand.u32 %v2002, 2147483648
    %v2052 = vor.u32 1.1754944e-38, %v2051
    %v2053 = vsel %vm2050, %v2052, %v2048
    %v2054 = vmul.f32 %v1979, %v2053
    %v2055 = vrcp.pop %v2009
    %v2056 = vmul.f32 %v2009, %v2055
    %v2057 = vsub.f32 1.0, %v2056
    %v2058 = vmul.f32 %v2055, %v2057
    %v2059 = vadd.f32 %v2055, %v2058
    %vm2060 = vweird.f32 %v2009
    %vm2061 = vweird.f32 %v2055
    %vm2062 = vmor %vm2060, %vm2061
    %v2063 = vsel %vm2062, %v2055, %v2059
    %v2064 = vand.u32 2147483647, %v2009
    %vm2065 = vcmp.eq.f32.partialorder %v2064, 8.507059e+37
    %v2066 = vand.u32 %v2009, 2147483648
    %v2067 = vor.u32 1.1754944e-38, %v2066
    %v2068 = vsel %vm2065, %v2067, %v2063
    %v2069 = vmul.f32 %v1981, %v2068
    %v2070 = vmul.f32 %v2024, %v1846
    %v2071 = vmul.f32 %v2039, %v1847
    %v2072 = vmul.f32 %v2054, %v1848
    %v2073 = vmul.f32 %v2069, %v1849
    %v2074 = vsel %vm254, %v2070, 0.0
    %v2075 = vrot.slane %v2074, 4
    %v2076 = vadd.f32 %v2074, %v2075
    %v2077 = vrot.slane %v2076, 2
    %v2078 = vadd.f32 %v2076, %v2077
    %v2079 = vrot.slane %v2078, 1
    %v2080 = vadd.f32 %v2078, %v2079
    %v2081 = vsel %vm254, %v2071, 0.0
    %v2082 = vrot.slane %v2081, 4
    %v2083 = vadd.f32 %v2081, %v2082
    %v2084 = vrot.slane %v2083, 2
    %v2085 = vadd.f32 %v2083, %v2084
    %v2086 = vrot.slane %v2085, 1
    %v2087 = vadd.f32 %v2085, %v2086
    %v2088 = vsel %vm254, %v2072, 0.0
    %v2089 = vrot.slane %v2088, 4
    %v2090 = vadd.f32 %v2088, %v2089
    %v2091 = vrot.slane %v2090, 2
    %v2092 = vadd.f32 %v2090, %v2091
    %v2093 = vrot.slane %v2092, 1
    %v2094 = vadd.f32 %v2092, %v2093
    %v2095 = vsel %vm254, %v2073, 0.0
    %v2096 = vrot.slane %v2095, 4
    %v2097 = vadd.f32 %v2095, %v2096
    %v2098 = vrot.slane %v2097, 2
    %v2099 = vadd.f32 %v2097, %v2098
    %v2100 = vrot.slane %v2099, 1
    %v2101 = vadd.f32 %v2099, %v2100
    %v2103 = vperm.slane %v1775, 0
    %v2109 = vsel %vm928, %v2087, %v2080
    %v2110 = vsel %vm930, %v2094, %v2109
    %v2111 = vsel %vm932, %v2101, %v2110
    %v2112 = vsel %vm254, %v2111, 0
    %2114 = vmatpush.msra.mxu0 0.0
    %2115 = vmatpush.msra.mxu0 0.0
    %2116 = vmatpush.msra.mxu0 0.0
    %2117 = vmatpush.msra.mxu0 0.0
    %2118 = vmatpush.msra.mxu0 0.0
    %2119 = vmatpush.msra.mxu0 0.0
    %2120 = vmatpush.msra.mxu0 0.0
    %2121 = vmatpush.msra.mxu0 0.0
    %2122 = vmatpush.msra.mxu0 0.0
    %2123 = vmatpush.msra.mxu0 0.0
    %2124 = vmatpush.msra.mxu0 0.0
    %2125 = vmatpush.msra.mxu0 0.0
    %2126 = vmatpush.msra.mxu0 %v1774
    %2127 = vmatpush.msra.mxu0 %v1773
    %2128 = vmatpush.msra.mxu0 %v1772
    %2129 = vmatpush.msra.mxu0 %v1771
    %2130 = vmatmul.f32.gmra.mxu0 %v2112
    %v2131 = vpop.f32.mrf.mxu0
    %v2132 = vadd.f32 %v2103, %v2131
    %2133 = vdwg.mxu0
    %v2134 = vperm.slane %v1776, 2
    %v2135 = vsub.f32 %v2132, %v2134
    %v2136 = vadd.f32 %v1776, 1e-05
    %v2137 = vrsqrt.pop %v2136
    %v2138 = vmul.f32 %v2137, %v2136
    %v2139 = vmul.f32 %v2138, %v2137
    %v2140 = vmul.f32 0.5, %v2139
    %v2141 = vsub.f32 1.5, %v2140
    %v2142 = vmul.f32 %v2137, %v2141
    %vm2143 = vweird.f32 %v2136
    %vm2144 = vweird.f32 %v2137
    %vm2145 = vmor %vm2143, %vm2144
    %v2146 = vsel %vm2145, %v2137, %v2142
    %v2147 = vperm.slane %v2146, 3
    %v2148 = vmul.f32 %v2135, %v2147
    %v2149 = vperm.slane %v1776, 0
    %v2150 = vmul.f32 %v2148, %v2149
    %v2151 = vperm.slane %v1776, 1
    %v2152 = vadd.f32 %v2150, %v2151
    %v2153 = vtanh.pop %v2152
    %v2154 = vmul.f32 %v2153, %v2153
    %vm2155 = vcmask 257024
    %v2156 = vsel %vm2155, %v2154, 0.0
    %2157 = vadd.xlane.f32.xlu0 %v2156
    %v2158 = vpop.xlane.xlu0 %2157
    %v2159 = vadd.f32 %v2158, 1e-12
    %v2160 = vrsqrt.pop %v2159
    %v2161 = vmul.f32 %v2160, %v2159
    %v2162 = vmul.f32 %v2161, %v2160
    %v2163 = vmul.f32 0.5, %v2162
    %v2164 = vsub.f32 1.5, %v2163
    %v2165 = vmul.f32 %v2160, %v2164
    %vm2166 = vweird.f32 %v2159
    %vm2167 = vweird.f32 %v2160
    %vm2168 = vmor %vm2166, %vm2167
    %v2169 = vsel %vm2168, %v2160, %v2165
    %v2170 = vmul.f32 %v2153, %v2169
    %v2171 = vmul.f32 %v1744, %v1744
    %v2172 = vsel %vm2155, %v2171, 0.0
    %2173 = vadd.xlane.f32.xlu0 %v2172
    %v2174 = vpop.xlane.xlu0 %2173
    %v2175 = vadd.f32 %v2174, 1e-12
    %v2176 = vrsqrt.pop %v2175
    %v2177 = vmul.f32 %v2176, %v2175
    %v2178 = vmul.f32 %v2177, %v2176
    %v2179 = vmul.f32 0.5, %v2178
    %v2180 = vsub.f32 1.5, %v2179
    %v2181 = vmul.f32 %v2176, %v2180
    %vm2182 = vweird.f32 %v2175
    %vm2183 = vweird.f32 %v2176
    %vm2184 = vmor %vm2182, %vm2183
    %v2185 = vsel %vm2184, %v2176, %v2181
    %v2186 = vmul.f32 %v1744, %v2185
    %v2188 = vperm.slane %v1781, 0
    %v2191 = vsel %vm254, %v2186, 0
    %2193 = vmatpush.msra.mxu0 0.0
    %2194 = vmatpush.msra.mxu0 0.0
    %2195 = vmatpush.msra.mxu0 0.0
    %2196 = vmatpush.msra.mxu0 0.0
    %2197 = vmatpush.msra.mxu0 0.0
    %2198 = vmatpush.msra.mxu0 0.0
    %2199 = vmatpush.msra.mxu0 0.0
    %2200 = vmatpush.msra.mxu0 0.0
    %2201 = vmatpush.msra.mxu0 0.0
    %2202 = vmatpush.msra.mxu0 0.0
    %2203 = vmatpush.msra.mxu0 0.0
    %2204 = vmatpush.msra.mxu0 0.0
    %2205 = vmatpush.msra.mxu0 %v1780
    %2206 = vmatpush.msra.mxu0 %v1779
    %2207 = vmatpush.msra.mxu0 %v1778
    %2208 = vmatpush.msra.mxu0 %v1777
    %2209 = vmatmul.f32.gmra.mxu0 %v2191
    %v2210 = vpop.f32.mrf.mxu0
    %v2211 = vadd.f32 %v2188, %v2210
    %2212 = vdwg.mxu0
    %v2213 = vperm.slane %v1782, 2
    %v2214 = vsub.f32 %v2211, %v2213
    %v2215 = vadd.f32 %v1782, 1e-05
    %v2216 = vrsqrt.pop %v2215
    %v2217 = vmul.f32 %v2216, %v2215
    %v2218 = vmul.f32 %v2217, %v2216
    %v2219 = vmul.f32 0.5, %v2218
    %v2220 = vsub.f32 1.5, %v2219
    %v2221 = vmul.f32 %v2216, %v2220
    %vm2222 = vweird.f32 %v2215
    %vm2223 = vweird.f32 %v2216
    %vm2224 = vmor %vm2222, %vm2223
    %v2225 = vsel %vm2224, %v2216, %v2221
    %v2226 = vperm.slane %v2225, 3
    %v2227 = vmul.f32 %v2214, %v2226
    %v2228 = vperm.slane %v1782, 0
    %v2229 = vmul.f32 %v2227, %v2228
    %v2230 = vperm.slane %v1782, 1
    %v2231 = vadd.f32 %v2229, %v2230
    %v2232 = vtanh.pop %v2231
    %v2233 = vmul.f32 %v2232, %v2232
    %v2234 = vsel %vm2155, %v2233, 0.0
    %2235 = vadd.xlane.f32.xlu0 %v2234
    %v2236 = vpop.xlane.xlu0 %2235
    %v2237 = vadd.f32 %v2236, 1e-12
    %v2238 = vrsqrt.pop %v2237
    %v2239 = vmul.f32 %v2238, %v2237
    %v2240 = vmul.f32 %v2239, %v2238
    %v2241 = vmul.f32 0.5, %v2240
    %v2242 = vsub.f32 1.5, %v2241
    %v2243 = vmul.f32 %v2238, %v2242
    %vm2244 = vweird.f32 %v2237
    %vm2245 = vweird.f32 %v2238
    %vm2246 = vmor %vm2244, %vm2245
    %v2247 = vsel %vm2246, %v2238, %v2243
    %v2248 = vmul.f32 %v2232, %v2247
    %v2250 = vperm.slane %v1750, 0
    %v2253 = vsel %vm254, %v1738, 0
    %v2256 = vsel %vm254, %v1739, 0
    %2258 = vmatpush.msra.mxu0 0.0
    %2259 = vmatpush.msra.mxu0 0.0
    %2260 = vmatpush.msra.mxu0 0.0
    %2261 = vmatpush.msra.mxu0 0.0
    %2262 = vmatpush.msra.mxu0 0.0
    %2263 = vmatpush.msra.mxu0 0.0
    %2264 = vmatpush.msra.mxu0 0.0
    %2265 = vmatpush.msra.mxu0 0.0
    %2266 = vmatpush.msra.mxu0 0.0
    %2267 = vmatpush.msra.mxu0 0.0
    %2268 = vmatpush.msra.mxu0 0.0
    %2269 = vmatpush.msra.mxu0 0.0
    %2270 = vmatpush.msra.mxu0 %v1749
    %2271 = vmatpush.msra.mxu0 %v1748
    %2272 = vmatpush.msra.mxu0 %v1747
    %2273 = vmatpush.msra.mxu0 %v1746
    %2274 = vmatmul.f32.gmra.mxu0 %v2253
    %v2275 = vpop.f32.mrf.mxu0
    %v2276 = vadd.f32 %v2250, %v2275
    %2277 = vmatmul.f32.gmra.mxu0 %v2256
    %v2278 = vpop.f32.mrf.mxu0
    %v2279 = vadd.f32 %v2250, %v2278
    %2280 = vdwg.mxu0
    %v2281 = vtanh.pop %v2276
    %v2282 = vtanh.pop %v2279
    %v2284 = vperm.slane %v1755, 0
    %v2287 = vsel %vm254, %v2281, 0
    %v2290 = vsel %vm254, %v2282, 0
    %2292 = vmatpush.msra.mxu0 0.0
    %2293 = vmatpush.msra.mxu0 0.0
    %2294 = vmatpush.msra.mxu0 0.0
    %2295 = vmatpush.msra.mxu0 0.0
    %2296 = vmatpush.msra.mxu0 0.0
    %2297 = vmatpush.msra.mxu0 0.0
    %2298 = vmatpush.msra.mxu0 0.0
    %2299 = vmatpush.msra.mxu0 0.0
    %2300 = vmatpush.msra.mxu0 0.0
    %2301 = vmatpush.msra.mxu0 0.0
    %2302 = vmatpush.msra.mxu0 0.0
    %2303 = vmatpush.msra.mxu0 0.0
    %2304 = vmatpush.msra.mxu0 %v1754
    %2305 = vmatpush.msra.mxu0 %v1753
    %2306 = vmatpush.msra.mxu0 %v1752
    %2307 = vmatpush.msra.mxu0 %v1751
    %2308 = vmatmul.f32.gmra.mxu0 %v2287
    %v2309 = vpop.f32.mrf.mxu0
    %v2310 = vadd.f32 %v2284, %v2309
    %2311 = vmatmul.f32.gmra.mxu0 %v2290
    %v2312 = vpop.f32.mrf.mxu0
    %v2313 = vadd.f32 %v2284, %v2312
    %2314 = vdwg.mxu0
    %v2315 = vperm.slane %v1745, 0
    %v2316 = vlaneseq
    %v2317 = vshrl.u32 %v2316, 7
    %2319 = vset.pattern.permute.xlu0 %v2317
    %2320 = vperm.xlu0 %2319, %v2315
    %v2321 = vpop.permute.xlu0 %2320
    %v2322 = vlaneseq
    %v2323 = vshrl.u32 %v2322, 7
    %v2324 = vadd.s32 %v2323, 8
    %2325 = vset.pattern.permute.xlu0 %v2324
    %2326 = vperm.xlu0 %2325, %v2315
    %v2327 = vpop.permute.xlu0 %2326
    %v2328 = vperm.slane %v1745, 1
    %v2329 = vlaneseq
    %v2330 = vshrl.u32 %v2329, 7
    %2332 = vset.pattern.permute.xlu0 %v2330
    %2333 = vperm.xlu0 %2332, %v2328
    %v2334 = vpop.permute.xlu0 %2333
    %v2335 = vlaneseq
    %v2336 = vshrl.u32 %v2335, 7
    %v2337 = vadd.s32 %v2336, 8
    %2338 = vset.pattern.permute.xlu0 %v2337
    %2339 = vperm.xlu0 %2338, %v2328
    %v2340 = vpop.permute.xlu0 %2339
    %v2341 = vperm.slane %v1745, 2
    %v2342 = vlaneseq
    %v2343 = vshrl.u32 %v2342, 7
    %2345 = vset.pattern.permute.xlu0 %v2343
    %2346 = vperm.xlu0 %2345, %v2341
    %v2347 = vpop.permute.xlu0 %2346
    %v2348 = vlaneseq
    %v2349 = vshrl.u32 %v2348, 7
    %v2350 = vadd.s32 %v2349, 8
    %2351 = vset.pattern.permute.xlu0 %v2350
    %2352 = vperm.xlu0 %2351, %v2341
    %v2353 = vpop.permute.xlu0 %2352
    %v2354 = vperm.slane %v1745, 3
    %v2355 = vlaneseq
    %v2356 = vshrl.u32 %v2355, 7
    %2358 = vset.pattern.permute.xlu0 %v2356
    %2359 = vperm.xlu0 %2358, %v2354
    %v2360 = vpop.permute.xlu0 %2359
    %v2361 = vlaneseq
    %v2362 = vshrl.u32 %v2361, 7
    %v2363 = vadd.s32 %v2362, 8
    %2364 = vset.pattern.permute.xlu0 %v2363
    %2365 = vperm.xlu0 %2364, %v2354
    %v2366 = vpop.permute.xlu0 %2365
    %vm2367 = vcmp.gt.f32.partialorder %v2321, 0.0
    %vm2368 = vcmp.gt.f32.partialorder %v2327, 0.0
    %vm2369 = vcmp.gt.f32.partialorder %v2334, 0.0
    %vm2370 = vcmp.gt.f32.partialorder %v2340, 0.0
    %vm2371 = vcmp.gt.f32.partialorder %v2347, 0.0
    %vm2372 = vcmp.gt.f32.partialorder %v2353, 0.0
    %vm2373 = vcmp.gt.f32.partialorder %v2360, 0.0
    %vm2374 = vcmp.gt.f32.partialorder %v2366, 0.0
    %v2375 = vsel %vm2367, 1, 0
    %v2376 = vsel %vm2368, 1, 0
    %v2377 = vsel %vm2369, 1, 0
    %v2378 = vsel %vm2370, 1, 0
    %v2379 = vsel %vm2371, 1, 0
    %v2380 = vsel %vm2372, 1, 0
    %v2381 = vsel %vm2373, 1, 0
    %v2382 = vsel %vm2374, 1, 0
    %vm2383 = vcmp.eq.s32.totalorder %v2375, 1
    %vm2384 = vcmp.eq.s32.totalorder %v2376, 1
    %vm2385 = vcmp.eq.s32.totalorder %v2377, 1
    %vm2386 = vcmp.eq.s32.totalorder %v2378, 1
    %vm2387 = vcmp.eq.s32.totalorder %v2379, 1
    %vm2388 = vcmp.eq.s32.totalorder %v2380, 1
    %vm2389 = vcmp.eq.s32.totalorder %v2381, 1
    %vm2390 = vcmp.eq.s32.totalorder %v2382, 1
    %v2391 = vsel %vm2383, %v2310, -1e+30
    %v2392 = vsel %vm2384, %v2313, -1e+30
    %v2393 = vsel %vm2385, %v2310, -1e+30
    %v2394 = vsel %vm2386, %v2313, -1e+30
    %v2395 = vsel %vm2387, %v2310, -1e+30
    %v2396 = vsel %vm2388, %v2313, -1e+30
    %v2397 = vsel %vm2389, %v2310, -1e+30
    %v2398 = vsel %vm2390, %v2313, -1e+30
    %v2399 = vsel %vm254, %v2391, -inf
    %v2400 = vsel %vm254, %v2392, -inf
    %v2401 = vmax.f32 %v2399, %v2400
    %v2402 = vrot.slane %v2401, 4
    %v2403 = vmax.f32 %v2401, %v2402
    %v2404 = vrot.slane %v2403, 2
    %v2405 = vmax.f32 %v2403, %v2404
    %v2406 = vrot.slane %v2405, 1
    %v2407 = vmax.f32 %v2405, %v2406
    %v2408 = vsel %vm254, %v2393, -inf
    %v2409 = vsel %vm254, %v2394, -inf
    %v2410 = vmax.f32 %v2408, %v2409
    %v2411 = vrot.slane %v2410, 4
    %v2412 = vmax.f32 %v2410, %v2411
    %v2413 = vrot.slane %v2412, 2
    %v2414 = vmax.f32 %v2412, %v2413
    %v2415 = vrot.slane %v2414, 1
    %v2416 = vmax.f32 %v2414, %v2415
    %v2417 = vsel %vm254, %v2395, -inf
    %v2418 = vsel %vm254, %v2396, -inf
    %v2419 = vmax.f32 %v2417, %v2418
    %v2420 = vrot.slane %v2419, 4
    %v2421 = vmax.f32 %v2419, %v2420
    %v2422 = vrot.slane %v2421, 2
    %v2423 = vmax.f32 %v2421, %v2422
    %v2424 = vrot.slane %v2423, 1
    %v2425 = vmax.f32 %v2423, %v2424
    %v2426 = vsel %vm254, %v2397, -inf
    %v2427 = vsel %vm254, %v2398, -inf
    %v2428 = vmax.f32 %v2426, %v2427
    %v2429 = vrot.slane %v2428, 4
    %v2430 = vmax.f32 %v2428, %v2429
    %v2431 = vrot.slane %v2430, 2
    %v2432 = vmax.f32 %v2430, %v2431
    %v2433 = vrot.slane %v2432, 1
    %v2434 = vmax.f32 %v2432, %v2433
    %v2435 = vsub.f32 %v2391, %v2407
    %v2436 = vsub.f32 %v2392, %v2407
    %v2437 = vsub.f32 %v2393, %v2416
    %v2438 = vsub.f32 %v2394, %v2416
    %v2439 = vsub.f32 %v2395, %v2425
    %v2440 = vsub.f32 %v2396, %v2425
    %v2441 = vsub.f32 %v2397, %v2434
    %v2442 = vsub.f32 %v2398, %v2434
    %v2443 = vmul.f32 %v2435, 1.442695
    %v2444 = vpow.pop %v2443
    %v2445 = vmul.f32 %v2436, 1.442695
    %v2446 = vpow.pop %v2445
    %v2447 = vmul.f32 %v2437, 1.442695
    %v2448 = vpow.pop %v2447
    %v2449 = vmul.f32 %v2438, 1.442695
    %v2450 = vpow.pop %v2449
    %v2451 = vmul.f32 %v2439, 1.442695
    %v2452 = vpow.pop %v2451
    %v2453 = vmul.f32 %v2440, 1.442695
    %v2454 = vpow.pop %v2453
    %v2455 = vmul.f32 %v2441, 1.442695
    %v2456 = vpow.pop %v2455
    %v2457 = vmul.f32 %v2442, 1.442695
    %v2458 = vpow.pop %v2457
    %v2459 = vmul.f32 %v2444, %v2321
    %v2460 = vmul.f32 %v2446, %v2327
    %v2461 = vmul.f32 %v2448, %v2334
    %v2462 = vmul.f32 %v2450, %v2340
    %v2463 = vmul.f32 %v2452, %v2347
    %v2464 = vmul.f32 %v2454, %v2353
    %v2465 = vmul.f32 %v2456, %v2360
    %v2466 = vmul.f32 %v2458, %v2366
    %v2467 = vsel %vm254, %v2459, 0.0
    %v2468 = vsel %vm254, %v2460, 0.0
    %v2469 = vadd.f32 %v2467, %v2468
    %v2470 = vrot.slane %v2469, 4
    %v2471 = vadd.f32 %v2469, %v2470
    %v2472 = vrot.slane %v2471, 2
    %v2473 = vadd.f32 %v2471, %v2472
    %v2474 = vrot.slane %v2473, 1
    %v2475 = vadd.f32 %v2473, %v2474
    %v2476 = vsel %vm254, %v2461, 0.0
    %v2477 = vsel %vm254, %v2462, 0.0
    %v2478 = vadd.f32 %v2476, %v2477
    %v2479 = vrot.slane %v2478, 4
    %v2480 = vadd.f32 %v2478, %v2479
    %v2481 = vrot.slane %v2480, 2
    %v2482 = vadd.f32 %v2480, %v2481
    %v2483 = vrot.slane %v2482, 1
    %v2484 = vadd.f32 %v2482, %v2483
    %v2485 = vsel %vm254, %v2463, 0.0
    %v2486 = vsel %vm254, %v2464, 0.0
    %v2487 = vadd.f32 %v2485, %v2486
    %v2488 = vrot.slane %v2487, 4
    %v2489 = vadd.f32 %v2487, %v2488
    %v2490 = vrot.slane %v2489, 2
    %v2491 = vadd.f32 %v2489, %v2490
    %v2492 = vrot.slane %v2491, 1
    %v2493 = vadd.f32 %v2491, %v2492
    %v2494 = vsel %vm254, %v2465, 0.0
    %v2495 = vsel %vm254, %v2466, 0.0
    %v2496 = vadd.f32 %v2494, %v2495
    %v2497 = vrot.slane %v2496, 4
    %v2498 = vadd.f32 %v2496, %v2497
    %v2499 = vrot.slane %v2498, 2
    %v2500 = vadd.f32 %v2498, %v2499
    %v2501 = vrot.slane %v2500, 1
    %v2502 = vadd.f32 %v2500, %v2501
    %v2503 = vmax.f32 %v2475, 1e-20
    %v2504 = vmax.f32 %v2484, 1e-20
    %v2505 = vmax.f32 %v2493, 1e-20
    %v2506 = vmax.f32 %v2502, 1e-20
    %v2507 = vrcp.pop %v2503
    %v2508 = vmul.f32 %v2503, %v2507
    %v2509 = vsub.f32 1.0, %v2508
    %v2510 = vmul.f32 %v2507, %v2509
    %v2511 = vadd.f32 %v2507, %v2510
    %vm2512 = vweird.f32 %v2503
    %vm2513 = vweird.f32 %v2507
    %vm2514 = vmor %vm2512, %vm2513
    %v2515 = vsel %vm2514, %v2507, %v2511
    %v2516 = vand.u32 2147483647, %v2503
    %vm2517 = vcmp.eq.f32.partialorder %v2516, 8.507059e+37
    %v2518 = vand.u32 %v2503, 2147483648
    %v2519 = vor.u32 1.1754944e-38, %v2518
    %v2520 = vsel %vm2517, %v2519, %v2515
    %v2521 = vmul.f32 %v2459, %v2520
    %v2522 = vmul.f32 %v2460, %v2520
    %v2523 = vrcp.pop %v2504
    %v2524 = vmul.f32 %v2504, %v2523
    %v2525 = vsub.f32 1.0, %v2524
    %v2526 = vmul.f32 %v2523, %v2525
    %v2527 = vadd.f32 %v2523, %v2526
    %vm2528 = vweird.f32 %v2504
    %vm2529 = vweird.f32 %v2523
    %vm2530 = vmor %vm2528, %vm2529
    %v2531 = vsel %vm2530, %v2523, %v2527
    %v2532 = vand.u32 2147483647, %v2504
    %vm2533 = vcmp.eq.f32.partialorder %v2532, 8.507059e+37
    %v2534 = vand.u32 %v2504, 2147483648
    %v2535 = vor.u32 1.1754944e-38, %v2534
    %v2536 = vsel %vm2533, %v2535, %v2531
    %v2537 = vmul.f32 %v2461, %v2536
    %v2538 = vmul.f32 %v2462, %v2536
    %v2539 = vrcp.pop %v2505
    %v2540 = vmul.f32 %v2505, %v2539
    %v2541 = vsub.f32 1.0, %v2540
    %v2542 = vmul.f32 %v2539, %v2541
    %v2543 = vadd.f32 %v2539, %v2542
    %vm2544 = vweird.f32 %v2505
    %vm2545 = vweird.f32 %v2539
    %vm2546 = vmor %vm2544, %vm2545
    %v2547 = vsel %vm2546, %v2539, %v2543
    %v2548 = vand.u32 2147483647, %v2505
    %vm2549 = vcmp.eq.f32.partialorder %v2548, 8.507059e+37
    %v2550 = vand.u32 %v2505, 2147483648
    %v2551 = vor.u32 1.1754944e-38, %v2550
    %v2552 = vsel %vm2549, %v2551, %v2547
    %v2553 = vmul.f32 %v2463, %v2552
    %v2554 = vmul.f32 %v2464, %v2552
    %v2555 = vrcp.pop %v2506
    %v2556 = vmul.f32 %v2506, %v2555
    %v2557 = vsub.f32 1.0, %v2556
    %v2558 = vmul.f32 %v2555, %v2557
    %v2559 = vadd.f32 %v2555, %v2558
    %vm2560 = vweird.f32 %v2506
    %vm2561 = vweird.f32 %v2555
    %vm2562 = vmor %vm2560, %vm2561
    %v2563 = vsel %vm2562, %v2555, %v2559
    %v2564 = vand.u32 2147483647, %v2506
    %vm2565 = vcmp.eq.f32.partialorder %v2564, 8.507059e+37
    %v2566 = vand.u32 %v2506, 2147483648
    %v2567 = vor.u32 1.1754944e-38, %v2566
    %v2568 = vsel %vm2565, %v2567, %v2563
    %v2569 = vmul.f32 %v2465, %v2568
    %v2570 = vmul.f32 %v2466, %v2568
    %v2571 = vmul.f32 %v2521, %v1738
    %v2572 = vmul.f32 %v2522, %v1739
    %v2573 = vmul.f32 %v2537, %v1738
    %v2574 = vmul.f32 %v2538, %v1739
    %v2575 = vmul.f32 %v2553, %v1738
    %v2576 = vmul.f32 %v2554, %v1739
    %v2577 = vmul.f32 %v2569, %v1738
    %v2578 = vmul.f32 %v2570, %v1739
    %v2579 = vsel %vm254, %v2571, 0.0
    %v2580 = vsel %vm254, %v2572, 0.0
    %v2581 = vadd.f32 %v2579, %v2580
    %v2582 = vrot.slane %v2581, 4
    %v2583 = vadd.f32 %v2581, %v2582
    %v2584 = vrot.slane %v2583, 2
    %v2585 = vadd.f32 %v2583, %v2584
    %v2586 = vrot.slane %v2585, 1
    %v2587 = vadd.f32 %v2585, %v2586
    %v2588 = vsel %vm254, %v2573, 0.0
    %v2589 = vsel %vm254, %v2574, 0.0
    %v2590 = vadd.f32 %v2588, %v2589
    %v2591 = vrot.slane %v2590, 4
    %v2592 = vadd.f32 %v2590, %v2591
    %v2593 = vrot.slane %v2592, 2
    %v2594 = vadd.f32 %v2592, %v2593
    %v2595 = vrot.slane %v2594, 1
    %v2596 = vadd.f32 %v2594, %v2595
    %v2597 = vsel %vm254, %v2575, 0.0
    %v2598 = vsel %vm254, %v2576, 0.0
    %v2599 = vadd.f32 %v2597, %v2598
    %v2600 = vrot.slane %v2599, 4
    %v2601 = vadd.f32 %v2599, %v2600
    %v2602 = vrot.slane %v2601, 2
    %v2603 = vadd.f32 %v2601, %v2602
    %v2604 = vrot.slane %v2603, 1
    %v2605 = vadd.f32 %v2603, %v2604
    %v2606 = vsel %vm254, %v2577, 0.0
    %v2607 = vsel %vm254, %v2578, 0.0
    %v2608 = vadd.f32 %v2606, %v2607
    %v2609 = vrot.slane %v2608, 4
    %v2610 = vadd.f32 %v2608, %v2609
    %v2611 = vrot.slane %v2610, 2
    %v2612 = vadd.f32 %v2610, %v2611
    %v2613 = vrot.slane %v2612, 1
    %v2614 = vadd.f32 %v2612, %v2613
    %v2616 = vperm.slane %v1760, 0
    %v2622 = vsel %vm928, %v2596, %v2587
    %v2623 = vsel %vm930, %v2605, %v2622
    %v2624 = vsel %vm932, %v2614, %v2623
    %v2625 = vsel %vm254, %v2624, 0
    %2627 = vmatpush.msra.mxu0 0.0
    %2628 = vmatpush.msra.mxu0 0.0
    %2629 = vmatpush.msra.mxu0 0.0
    %2630 = vmatpush.msra.mxu0 0.0
    %2631 = vmatpush.msra.mxu0 0.0
    %2632 = vmatpush.msra.mxu0 0.0
    %2633 = vmatpush.msra.mxu0 0.0
    %2634 = vmatpush.msra.mxu0 0.0
    %2635 = vmatpush.msra.mxu0 0.0
    %2636 = vmatpush.msra.mxu0 0.0
    %2637 = vmatpush.msra.mxu0 0.0
    %2638 = vmatpush.msra.mxu0 0.0
    %2639 = vmatpush.msra.mxu0 %v1759
    %2640 = vmatpush.msra.mxu0 %v1758
    %2641 = vmatpush.msra.mxu0 %v1757
    %2642 = vmatpush.msra.mxu0 %v1756
    %2643 = vmatmul.f32.gmra.mxu0 %v2625
    %v2644 = vpop.f32.mrf.mxu0
    %v2645 = vadd.f32 %v2616, %v2644
    %2646 = vdwg.mxu0
    %v2647 = vmul.f32 %v2645, %v2645
    %v2648 = vsel %vm2155, %v2647, 0.0
    %2649 = vadd.xlane.f32.xlu0 %v2648
    %v2650 = vpop.xlane.xlu0 %2649
    %v2651 = vadd.f32 %v2650, 1e-12
    %v2652 = vrsqrt.pop %v2651
    %v2653 = vmul.f32 %v2652, %v2651
    %v2654 = vmul.f32 %v2653, %v2652
    %v2655 = vmul.f32 0.5, %v2654
    %v2656 = vsub.f32 1.5, %v2655
    %v2657 = vmul.f32 %v2652, %v2656
    %vm2658 = vweird.f32 %v2651
    %vm2659 = vweird.f32 %v2652
    %vm2660 = vmor %vm2658, %vm2659
    %v2661 = vsel %vm2660, %v2652, %v2657
    %v2662 = vmul.f32 %v2645, %v2661
    %v2664 = vsel %vm254, %v2170, 0
    %v2667 = vsel %vm254, %v2248, 0
    %2669 = vmatpush.xpose.msra.mxu0 0.0
    %2670 = vmatpush.xpose.msra.mxu0 0.0
    %2671 = vmatpush.xpose.msra.mxu0 0.0
    %2672 = vmatpush.xpose.msra.mxu0 0.0
    %2673 = vmatpush.xpose.msra.mxu0 0.0
    %2674 = vmatpush.xpose.msra.mxu0 0.0
    %2675 = vmatpush.xpose.msra.mxu0 0.0
    %2676 = vmatpush.xpose.msra.mxu0 0.0
    %2677 = vmatpush.xpose.msra.mxu0 0.0
    %2678 = vmatpush.xpose.msra.mxu0 0.0
    %2679 = vmatpush.xpose.msra.mxu0 0.0
    %2680 = vmatpush.xpose.msra.mxu0 0.0
    %2681 = vmatpush.xpose.msra.mxu0 0.0
    %2682 = vmatpush.xpose.msra.mxu0 0.0
    %2683 = vmatpush.xpose.msra.mxu0 0.0
    %2684 = vmatpush.xpose.msra.mxu0 %v2667
    %2685 = vmatmul.f32.gmra.mxu0 %v2664
    %v2686 = vpop.f32.mrf.mxu0
    %v2687 = vadd.f32 0.0, %v2686
    %2688 = vdwg.mxu0
    %v2689 = vstv %s1783
    %v2690 = vmul.f32 %v2687, %v2689
    %v2692 = vsel %vm254, %v2662, 0
    %2694 = vmatpush.xpose.msra.mxu0 0.0
    %2695 = vmatpush.xpose.msra.mxu0 0.0
    %2696 = vmatpush.xpose.msra.mxu0 0.0
    %2697 = vmatpush.xpose.msra.mxu0 0.0
    %2698 = vmatpush.xpose.msra.mxu0 0.0
    %2699 = vmatpush.xpose.msra.mxu0 0.0
    %2700 = vmatpush.xpose.msra.mxu0 0.0
    %2701 = vmatpush.xpose.msra.mxu0 0.0
    %2702 = vmatpush.xpose.msra.mxu0 0.0
    %2703 = vmatpush.xpose.msra.mxu0 0.0
    %2704 = vmatpush.xpose.msra.mxu0 0.0
    %2705 = vmatpush.xpose.msra.mxu0 0.0
    %2706 = vmatpush.xpose.msra.mxu0 0.0
    %2707 = vmatpush.xpose.msra.mxu0 0.0
    %2708 = vmatpush.xpose.msra.mxu0 0.0
    %2709 = vmatpush.xpose.msra.mxu0 %v2664
    %2710 = vmatmul.f32.gmra.mxu0 %v2692
    %v2711 = vpop.f32.mrf.mxu0
    %v2712 = vadd.f32 0.0, %v2711
    %2713 = vdwg.mxu0
    %v2714 = vstv %s1784
    %v2715 = vmul.f32 %v2712, %v2714
    %2716 = vmatpush.xpose.msra.mxu0 0.0
    %2717 = vmatpush.xpose.msra.mxu0 0.0
    %2718 = vmatpush.xpose.msra.mxu0 0.0
    %2719 = vmatpush.xpose.msra.mxu0 0.0
    %2720 = vmatpush.xpose.msra.mxu0 0.0
    %2721 = vmatpush.xpose.msra.mxu0 0.0
    %2722 = vmatpush.xpose.msra.mxu0 0.0
    %2723 = vmatpush.xpose.msra.mxu0 0.0
    %2724 = vmatpush.xpose.msra.mxu0 0.0
    %2725 = vmatpush.xpose.msra.mxu0 0.0
    %2726 = vmatpush.xpose.msra.mxu0 0.0
    %2727 = vmatpush.xpose.msra.mxu0 0.0
    %2728 = vmatpush.xpose.msra.mxu0 0.0
    %2729 = vmatpush.xpose.msra.mxu0 0.0
    %2730 = vmatpush.xpose.msra.mxu0 0.0
    %2731 = vmatpush.xpose.msra.mxu0 %v2667
    %2732 = vmatmul.f32.gmra.mxu0 %v2692
    %v2733 = vpop.f32.mrf.mxu0
    %v2734 = vadd.f32 0.0, %v2733
    %2735 = vdwg.mxu0
    %v2736 = vstv %s1785
    %v2737 = vmul.f32 %v2734, %v2736
    %v2738 = vlaneseq
    %v2739 = vshrl.u32 %v2738, 7
    %vm2740 = vcmp.eq.s32.totalorder %v2739, %v877
    %v2741 = vsel %vm2740, 1, 0
    %v2742 = vcvt.s32.f32 %v2741
    %v2743 = vmul.f32 %v2690, %v2742
    %vm2744 = vcmask 27648
    %v2745 = vsel %vm2744, %v2743, 0.0
    %2746 = vadd.xlane.f32.xlu0 %v2745
    %v2747 = vpop.xlane.xlu0 %2746
    %v2748 = vsel %vm2744, %v2690, -inf
    %2749 = vmax.xlane.f32.xlu0 %v2748
    %v2750 = vpop.xlane.xlu0 %2749
    %v2751 = vsub.f32 %v2690, %v2750
    %v2752 = vmul.f32 %v2751, 1.442695
    %v2753 = vpow.pop %v2752
    %v2754 = vsel %vm2744, %v2753, 0.0
    %2755 = vadd.xlane.f32.xlu0 %v2754
    %v2756 = vpop.xlane.xlu0 %2755
    %v2757 = vlog2.pop %v2756
    %v2758 = vmul.f32 %v2757, 0.6931472
    %v2759 = vadd.f32 %v2750, %v2758
    %v2760 = vsub.f32 %v2759, %v2747
    %vm2761 = vcmask 3072
    %v2762 = vsel %vm2761, %v2760, 0.0
    %2763 = vadd.xlane.f32.xlu0 %v2762
    %v2764 = vpop.xlane.xlu0 %2763
    %v2765 = vrot.slane %v2764, 4
    %v2766 = vadd.f32 %v2764, %v2765
    %v2767 = vrot.slane %v2766, 2
    %v2768 = vadd.f32 %v2766, %v2767
    %v2769 = vrot.slane %v2768, 1
    %v2770 = vadd.f32 %v2768, %v2769
    %s2771 = vtos %v2770
    %v2772 = vrcp.pop 4.0
    %v2773 = vmul.f32 4.0, %v2772
    %v2774 = vsub.f32 1.0, %v2773
    %v2775 = vmul.f32 %v2772, %v2774
    %v2776 = vadd.f32 %v2772, %v2775
    %vm2777 = vweird.f32 %v2772
    %v2778 = vsel %vm2777, %v2772, %v2776
    %s2779 = vtos %v2778
    %s2780 = smul.f32 %s2771, %s2779
    %v2781 = vrot.slane %v2745, 4
    %v2782 = vadd.f32 %v2745, %v2781
    %v2783 = vrot.slane %v2782, 2
    %v2784 = vadd.f32 %v2782, %v2783
    %v2785 = vrot.slane %v2784, 1
    %v2786 = vadd.f32 %v2784, %v2785
    %v2787 = vrot.slane %v2748, 4
    %v2788 = vmax.f32 %v2748, %v2787
    %v2789 = vrot.slane %v2788, 2
    %v2790 = vmax.f32 %v2788, %v2789
    %v2791 = vrot.slane %v2790, 1
    %v2792 = vmax.f32 %v2790, %v2791
    %v2793 = vsub.f32 %v2690, %v2792
    %v2794 = vmul.f32 %v2793, 1.442695
    %v2795 = vpow.pop %v2794
    %v2796 = vsel %vm2744, %v2795, 0.0
    %v2797 = vrot.slane %v2796, 4
    %v2798 = vadd.f32 %v2796, %v2797
    %v2799 = vrot.slane %v2798, 2
    %v2800 = vadd.f32 %v2798, %v2799
    %v2801 = vrot.slane %v2800, 1
    %v2802 = vadd.f32 %v2800, %v2801
    %v2803 = vlog2.pop %v2802
    %v2804 = vmul.f32 %v2803, 0.6931472
    %v2805 = vadd.f32 %v2792, %v2804
    %v2806 = vsub.f32 %v2805, %v2786
    %vm2807 = vcmask 24576
    %v2808 = vsel %vm2807, %v2806, 0.0
    %2809 = vadd.xlane.f32.xlu0 %v2808
    %v2810 = vpop.xlane.xlu0 %2809
    %v2811 = vrot.slane %v2810, 4
    %v2812 = vadd.f32 %v2810, %v2811
    %v2813 = vrot.slane %v2812, 2
    %v2814 = vadd.f32 %v2812, %v2813
    %v2815 = vrot.slane %v2814, 1
    %v2816 = vadd.f32 %v2814, %v2815
    %s2817 = vtos %v2816
    %v2818 = vrcp.pop 4.0
    %v2819 = vmul.f32 4.0, %v2818
    %v2820 = vsub.f32 1.0, %v2819
    %v2821 = vmul.f32 %v2818, %v2820
    %v2822 = vadd.f32 %v2818, %v2821
    %vm2823 = vweird.f32 %v2818
    %v2824 = vsel %vm2823, %v2818, %v2822
    %s2825 = vtos %v2824
    %s2826 = smul.f32 %s2817, %s2825
    %s2827 = sadd.f32 %s2780, %s2826
    %s2828 = smul.f32 %s2827, 0.5
    %v2829 = vmul.f32 %v2715, %v2742
    %v2830 = vsel %vm2744, %v2829, 0.0
    %2831 = vadd.xlane.f32.xlu0 %v2830
    %v2832 = vpop.xlane.xlu0 %2831
    %v2833 = vsel %vm2744, %v2715, -inf
    %2834 = vmax.xlane.f32.xlu0 %v2833
    %v2835 = vpop.xlane.xlu0 %2834
    %v2836 = vsub.f32 %v2715, %v2835
    %v2837 = vmul.f32 %v2836, 1.442695
    %v2838 = vpow.pop %v2837
    %v2839 = vsel %vm2744, %v2838, 0.0
    %2840 = vadd.xlane.f32.xlu0 %v2839
    %v2841 = vpop.xlane.xlu0 %2840
    %v2842 = vlog2.pop %v2841
    %v2843 = vmul.f32 %v2842, 0.6931472
    %v2844 = vadd.f32 %v2835, %v2843
    %v2845 = vsub.f32 %v2844, %v2832
    %v2846 = vsel %vm2761, %v2845, 0.0
    %2847 = vadd.xlane.f32.xlu0 %v2846
    %v2848 = vpop.xlane.xlu0 %2847
    %v2849 = vrot.slane %v2848, 4
    %v2850 = vadd.f32 %v2848, %v2849
    %v2851 = vrot.slane %v2850, 2
    %v2852 = vadd.f32 %v2850, %v2851
    %v2853 = vrot.slane %v2852, 1
    %v2854 = vadd.f32 %v2852, %v2853
    %s2855 = vtos %v2854
    %v2856 = vrcp.pop 4.0
    %v2857 = vmul.f32 4.0, %v2856
    %v2858 = vsub.f32 1.0, %v2857
    %v2859 = vmul.f32 %v2856, %v2858
    %v2860 = vadd.f32 %v2856, %v2859
    %vm2861 = vweird.f32 %v2856
    %v2862 = vsel %vm2861, %v2856, %v2860
    %s2863 = vtos %v2862
    %s2864 = smul.f32 %s2855, %s2863
    %v2865 = vrot.slane %v2830, 4
    %v2866 = vadd.f32 %v2830, %v2865
    %v2867 = vrot.slane %v2866, 2
    %v2868 = vadd.f32 %v2866, %v2867
    %v2869 = vrot.slane %v2868, 1
    %v2870 = vadd.f32 %v2868, %v2869
    %v2871 = vrot.slane %v2833, 4
    %v2872 = vmax.f32 %v2833, %v2871
    %v2873 = vrot.slane %v2872, 2
    %v2874 = vmax.f32 %v2872, %v2873
    %v2875 = vrot.slane %v2874, 1
    %v2876 = vmax.f32 %v2874, %v2875
    %v2877 = vsub.f32 %v2715, %v2876
    %v2878 = vmul.f32 %v2877, 1.442695
    %v2879 = vpow.pop %v2878
    %v2880 = vsel %vm2744, %v2879, 0.0
    %v2881 = vrot.slane %v2880, 4
    %v2882 = vadd.f32 %v2880, %v2881
    %v2883 = vrot.slane %v2882, 2
    %v2884 = vadd.f32 %v2882, %v2883
    %v2885 = vrot.slane %v2884, 1
    %v2886 = vadd.f32 %v2884, %v2885
    %v2887 = vlog2.pop %v2886
    %v2888 = vmul.f32 %v2887, 0.6931472
    %v2889 = vadd.f32 %v2876, %v2888
    %v2890 = vsub.f32 %v2889, %v2870
    %v2891 = vsel %vm2807, %v2890, 0.0
    %2892 = vadd.xlane.f32.xlu0 %v2891
    %v2893 = vpop.xlane.xlu0 %2892
    %v2894 = vrot.slane %v2893, 4
    %v2895 = vadd.f32 %v2893, %v2894
    %v2896 = vrot.slane %v2895, 2
    %v2897 = vadd.f32 %v2895, %v2896
    %v2898 = vrot.slane %v2897, 1
    %v2899 = vadd.f32 %v2897, %v2898
    %s2900 = vtos %v2899
    %v2901 = vrcp.pop 4.0
    %v2902 = vmul.f32 4.0, %v2901
    %v2903 = vsub.f32 1.0, %v2902
    %v2904 = vmul.f32 %v2901, %v2903
    %v2905 = vadd.f32 %v2901, %v2904
    %vm2906 = vweird.f32 %v2901
    %v2907 = vsel %vm2906, %v2901, %v2905
    %s2908 = vtos %v2907
    %s2909 = smul.f32 %s2900, %s2908
    %s2910 = sadd.f32 %s2864, %s2909
    %s2911 = smul.f32 %s2910, 0.5
    %s2912 = sadd.f32 %s2828, %s2911
    %v2913 = vmul.f32 %v2737, %v2742
    %v2914 = vsel %vm2744, %v2913, 0.0
    %2915 = vadd.xlane.f32.xlu0 %v2914
    %v2916 = vpop.xlane.xlu0 %2915
    %v2917 = vsel %vm2744, %v2737, -inf
    %2918 = vmax.xlane.f32.xlu0 %v2917
    %v2919 = vpop.xlane.xlu0 %2918
    %v2920 = vsub.f32 %v2737, %v2919
    %v2921 = vmul.f32 %v2920, 1.442695
    %v2922 = vpow.pop %v2921
    %v2923 = vsel %vm2744, %v2922, 0.0
    %2924 = vadd.xlane.f32.xlu0 %v2923
    %v2925 = vpop.xlane.xlu0 %2924
    %v2926 = vlog2.pop %v2925
    %v2927 = vmul.f32 %v2926, 0.6931472
    %v2928 = vadd.f32 %v2919, %v2927
    %v2929 = vsub.f32 %v2928, %v2916
    %v2930 = vsel %vm2761, %v2929, 0.0
    %2931 = vadd.xlane.f32.xlu0 %v2930
    %v2932 = vpop.xlane.xlu0 %2931
    %v2933 = vrot.slane %v2932, 4
    %v2934 = vadd.f32 %v2932, %v2933
    %v2935 = vrot.slane %v2934, 2
    %v2936 = vadd.f32 %v2934, %v2935
    %v2937 = vrot.slane %v2936, 1
    %v2938 = vadd.f32 %v2936, %v2937
    %s2939 = vtos %v2938
    %v2940 = vrcp.pop 4.0
    %v2941 = vmul.f32 4.0, %v2940
    %v2942 = vsub.f32 1.0, %v2941
    %v2943 = vmul.f32 %v2940, %v2942
    %v2944 = vadd.f32 %v2940, %v2943
    %vm2945 = vweird.f32 %v2940
    %v2946 = vsel %vm2945, %v2940, %v2944
    %s2947 = vtos %v2946
    %s2948 = smul.f32 %s2939, %s2947
    %v2949 = vrot.slane %v2914, 4
    %v2950 = vadd.f32 %v2914, %v2949
    %v2951 = vrot.slane %v2950, 2
    %v2952 = vadd.f32 %v2950, %v2951
    %v2953 = vrot.slane %v2952, 1
    %v2954 = vadd.f32 %v2952, %v2953
    %v2955 = vrot.slane %v2917, 4
    %v2956 = vmax.f32 %v2917, %v2955
    %v2957 = vrot.slane %v2956, 2
    %v2958 = vmax.f32 %v2956, %v2957
    %v2959 = vrot.slane %v2958, 1
    %v2960 = vmax.f32 %v2958, %v2959
    %v2961 = vsub.f32 %v2737, %v2960
    %v2962 = vmul.f32 %v2961, 1.442695
    %v2963 = vpow.pop %v2962
    %v2964 = vsel %vm2744, %v2963, 0.0
    %v2965 = vrot.slane %v2964, 4
    %v2966 = vadd.f32 %v2964, %v2965
    %v2967 = vrot.slane %v2966, 2
    %v2968 = vadd.f32 %v2966, %v2967
    %v2969 = vrot.slane %v2968, 1
    %v2970 = vadd.f32 %v2968, %v2969
    %v2971 = vlog2.pop %v2970
    %v2972 = vmul.f32 %v2971, 0.6931472
    %v2973 = vadd.f32 %v2960, %v2972
    %v2974 = vsub.f32 %v2973, %v2954
    %v2975 = vsel %vm2807, %v2974, 0.0
    %2976 = vadd.xlane.f32.xlu0 %v2975
    %v2977 = vpop.xlane.xlu0 %2976
    %v2978 = vrot.slane %v2977, 4
    %v2979 = vadd.f32 %v2977, %v2978
    %v2980 = vrot.slane %v2979, 2
    %v2981 = vadd.f32 %v2979, %v2980
    %v2982 = vrot.slane %v2981, 1
    %v2983 = vadd.f32 %v2981, %v2982
    %s2984 = vtos %v2983
    %v2985 = vrcp.pop 4.0
    %v2986 = vmul.f32 4.0, %v2985
    %v2987 = vsub.f32 1.0, %v2986
    %v2988 = vmul.f32 %v2985, %v2987
    %v2989 = vadd.f32 %v2985, %v2988
    %vm2990 = vweird.f32 %v2985
    %v2991 = vsel %vm2990, %v2985, %v2989
    %s2992 = vtos %v2991
    %s2993 = smul.f32 %s2984, %s2992
    %s2994 = sadd.f32 %s2948, %s2993
    %s2995 = smul.f32 %s2994, 0.5
    %s2996 = sadd.f32 %s2912, %s2995
    %v2997 = vrcp.pop 3.0
    %v2998 = vmul.f32 3.0, %v2997
    %v2999 = vsub.f32 1.0, %v2998
    %v3000 = vmul.f32 %v2997, %v2999
    %v3001 = vadd.f32 %v2997, %v3000
    %vm3002 = vweird.f32 %v2997
    %v3003 = vsel %vm3002, %v2997, %v3001
    %s3004 = vtos %v3003
    %s3005 = smul.f32 %s2996, %s3004
    %3006 = vst.msk [vmem:[#allocation11] sm:$0xf] %vm2155, %v2170
    %3007 = vst.msk [vmem:[#allocation12] sm:$0xf] %vm2155, %v2248
    %3008 = vst.msk [vmem:[#allocation14] sm:$0xf] %vm2155, %v2662
    %s3009 = scalar_lea.smem [#allocation15], 0
    %3010 = sst [smem:[%s3009]] %s3005
    // Predicated region
    $region150: #{tigr_forward.1} parent=1 // pred_check
      _
    $region151: #{tigr_forward.1} parent=1 // pred_check_branch
      %3012 = sbr.rel (0) target = $region153
    $region152: #{tigr_forward.1} parent=1 // pred_region
      %3014 = vsyncadd [#allocation4], 0
      %s3016 = sshll.u32 [#allocation11], 4
      %s3017 = int_to_ptr.vmem [resolvable:$true] %s3016
      %s3018 = sshll.u32 %s67, 4
      %s3019 = int_to_ptr.hbm [resolvable:$true] %s3018
      %3021 = dma.vmem_to_hbm [thread:$0]  %s3017, 64, %s3019, [#allocation4]
    $region153: #{tigr_forward.1} parent=1 // pred_fallthru
      _
    // Predicated region
    $region154: #{tigr_forward.1} parent=1 // pred_check
      _
    $region155: #{tigr_forward.1} parent=1 // pred_check_branch
      %3023 = sbr.rel (0) target = $region157
    $region156: #{tigr_forward.1} parent=1 // pred_region
      %3025 = vsyncadd [#allocation13], 0
      %s3027 = sshll.u32 [#allocation12], 4
      %s3028 = int_to_ptr.vmem [resolvable:$true] %s3027
      %s3029 = sshll.u32 %s69, 4
      %s3030 = int_to_ptr.hbm [resolvable:$true] %s3029
      %3032 = dma.vmem_to_hbm [thread:$0]  %s3028, 64, %s3030, [#allocation13]
    $region157: #{tigr_forward.1} parent=1 // pred_fallthru
      _
    // Predicated region
    $region158: #{tigr_forward.1} parent=1 // pred_check
      _
    $region159: #{tigr_forward.1} parent=1 // pred_check_branch
      %3034 = sbr.rel (0) target = $region161
    $region160: #{tigr_forward.1} parent=1 // pred_region
      %3036 = vsyncadd [#allocation13], 0
      %s3038 = sshll.u32 [#allocation14], 4
      %s3039 = int_to_ptr.vmem [resolvable:$true] %s3038
      %s3040 = sshll.u32 %s71, 4
      %s3041 = int_to_ptr.hbm [resolvable:$true] %s3040
      %3043 = dma.vmem_to_hbm [thread:$0]  %s3039, 64, %s3041, [#allocation13]
    $region161: #{tigr_forward.1} parent=1 // pred_fallthru
      _
    // Predicated region
    $region162: #{tigr_forward.1} parent=1 // pred_check
      _
    $region163: #{tigr_forward.1} parent=1 // pred_check_branch
      %3045 = sbr.rel (0) target = $region165
    $region164: #{tigr_forward.1} parent=1 // pred_region
      %3047 = vsyncadd [#allocation5], 0
      %s3049 = sshll.u32 %s73, 4
      %s3050 = int_to_ptr.hbm [resolvable:$true] %s3049
      %3052 = dma.smem_to_hbm [#allocation15], 16, %s3050, [#allocation5]
    $region165: #{tigr_forward.1} parent=1 // pred_fallthru
      _
    // Predicated region
    $region166: #{tigr_forward.1} parent=1 // pred_check
      _
    $region167: #{tigr_forward.1} parent=1 // pred_check_branch
      %3054 = sbr.rel (0) target = $region169
    $region168: #{tigr_forward.1} parent=1 // pred_region
      %3056 = dma.done [#allocation4], 64
    $region169: #{tigr_forward.1} parent=1 // pred_fallthru
      _
    // Predicated region
    $region170: #{tigr_forward.1} parent=1 // pred_check
      _
    $region171: #{tigr_forward.1} parent=1 // pred_check_branch
      %3058 = sbr.rel (0) target = $region173
    $region172: #{tigr_forward.1} parent=1 // pred_region
      %3060 = dma.done [#allocation13], 64
    $region173: #{tigr_forward.1} parent=1 // pred_fallthru
      _
    // Predicated region
    $region174: #{tigr_forward.1} parent=1 // pred_check
      _
    $region175: #{tigr_forward.1} parent=1 // pred_check_branch
      %3062 = sbr.rel (0) target = $region177
    $region176: #{tigr_forward.1} parent=1 // pred_region
      %3064 = dma.done [#allocation13], 64
    $region177: #{tigr_forward.1} parent=1 // pred_fallthru
      _
    // Predicated region
    $region178: #{tigr_forward.1} parent=1 // pred_check
      _
    $region179: #{tigr_forward.1} parent=1 // pred_check_branch
      %3066 = sbr.rel (0) target = $region181
    $region180: #{tigr_forward.1} parent=1 // pred_region
      %3068 = dma.done [#allocation5], 16
    $region181: #{tigr_forward.1} parent=1 // pred_fallthru
      _
    %3069 = sfence
    %3070 = vsyncpa [#allocation3], 1
    %3071 = vsyncpa [#allocation8], 1
    %3072 = vsyncpa [#allocation4], 1
    %3073 = vsyncpa [#allocation13], 1
    %3074 = vsyncpa [#allocation5], 1
    %3075 = vsyncpa [#allocation6], 1

</llo_original>
